<compile_context>
chip_gen: v7x
topology: tpu7x:2x2x1
jax: 0.10.0
libtpu: 0.0.40
codegen_flags: <defaults>
</compile_context>

<pallas_src>
import functools
import math

import jax
import jax.numpy as jnp
from jax import lax
from jax.experimental import pallas as pl
from jax.experimental.pallas import tpu as pltpu


# ----------------------------------------------------------------------------
# Fused kernel: both branches of CrossAttention in one grid step.
# ----------------------------------------------------------------------------
def _cross_attn_kernel(x1_ref, x2_ref, w1_ref, w2_ref, wp1_ref, wp2_ref,
                       bp_ref, mask_ref, o_ref, *, H, hd):
    x1 = x1_ref[...]                        # (BN, dim0) f32
    x2 = x2_ref[...]                        # (BN, dim1) f32
    mask = mask_ref[...]                    # (BN, BN) additive: 0 same-batch, -1e30 else
    BN = x1.shape[0]

    def bmm(a, b):                          # (H, M, K) @ (H, K, N) -> (H, M, N)
        return lax.dot_general(a, b, (((2,), (1,)), ((0,), (0,))),
                               preferred_element_type=jnp.float32)

    # Head-batched fused projections: ONE batched matmul per input tensor.
    # w1 packs [q1 | k2 | v2] per head, w2 packs [q2 | k1 | v1] per head
    # (scale already folded into the q columns at prep time).
    x1b = jnp.broadcast_to(x1[None, :, :], (H, BN, x1.shape[1]))
    x2b = jnp.broadcast_to(x2[None, :, :], (H, BN, x2.shape[1]))
    p1 = bmm(x1b, w1_ref[...])              # (H, BN, 3*hd)
    p2 = bmm(x2b, w2_ref[...])              # (H, BN, 3*hd)

    def attend(q, k, v, wp3, bias):
        # q, k, v: (H, BN, hd).  Scores over the full (BN, BN) row/col space; the
        # additive mask zeroes out (post-softmax) all cross-batch entries, which makes
        # the single batched softmax exactly equal to B independent per-batch softmaxes.
        s = lax.dot_general(q, k, (((2,), (2,)), ((0,), (0,))),
                            preferred_element_type=jnp.float32)      # (H, BN, BN)
        s = s + mask
        s = s - jnp.max(s, axis=-1, keepdims=True)                   # stable softmax
        e = jnp.exp(s)
        p = e / jnp.sum(e, axis=-1, keepdims=True)                   # exact division
        y = bmm(p, v)                                                # (H, BN, hd)
        out_h = bmm(y, wp3)                                          # (H, BN, C)
        return jnp.sum(out_h, axis=0) + bias                         # (BN, C)

    out1 = attend(p1[:, :, :hd], p2[:, :, hd:2 * hd], p2[:, :, 2 * hd:],
                  wp1_ref[...], bp_ref[0])
    out2 = attend(p2[:, :, :hd], p1[:, :, hd:2 * hd], p1[:, :, 2 * hd:],
                  wp2_ref[...], bp_ref[1])

    # Lane-offset-0 stores for both branches.
    o_ref[0] = out1.astype(o_ref.dtype)
    o_ref[1] = out2.astype(o_ref.dtype)


# ----------------------------------------------------------------------------
# One-time weight prep (NOT in the per-call jitted path).
# ----------------------------------------------------------------------------
def prepare_params(params, num_heads):
    C = params["q1_w"].shape[0]             # dim0
    H = num_heads
    hd = C // H
    scale = hd ** (-0.5)

    def to_heads(w_t):                       # (in, H*hd) -> (H, in, hd)
        in_f = w_t.shape[0]
        return jnp.transpose(w_t.reshape(in_f, H, hd), (1, 0, 2))

    # PyTorch (out, in) -> (in, out); scale folded into q weights exactly once here.
    wq1_t = params["q1_w"].T * scale         # (dim0, C)
    wq2_t = params["q2_w"].T * scale         # (dim1, C)
    wkv1_t = params["kv1_w"].T               # (dim1, 2C): [:, :C]=k1, [:, C:]=v1
    wkv2_t = params["kv2_w"].T               # (dim0, 2C): [:, :C]=k2, [:, C:]=v2

    # x1 feeds branch-1 q and branch-2 k/v; x2 feeds branch-2 q and branch-1 k/v.
    w1 = jnp.concatenate([to_heads(wq1_t),
                          to_heads(wkv2_t[:, :C]),
                          to_heads(wkv2_t[:, C:])], axis=-1)   # (H, dim0, 3*hd)
    w2 = jnp.concatenate([to_heads(wq2_t),
                          to_heads(wkv1_t[:, :C]),
                          to_heads(wkv1_t[:, C:])], axis=-1)   # (H, dim1, 3*hd)

    wp1 = params["proj1_w"].T.reshape(H, hd, C)                # (H, hd, C)
    wp2 = params["proj2_w"].T.reshape(H, hd, C)
    bp = jnp.stack([params["proj1_b"], params["proj2_b"]])[:, None, :]   # (2, 1, C)

    return {"w1": w1, "w2": w2, "wp1": wp1, "wp2": wp2, "bp": bp}


# ----------------------------------------------------------------------------
# Wrapper: one pallas_call for the whole forward pass.
# ----------------------------------------------------------------------------
@functools.partial(jax.jit, static_argnames=("num_heads",))
def cross_attention_forward(x1, x2, prep, num_heads):
    B, N, C = x1.shape                       # C == dim0
    D1 = x2.shape[-1]                        # dim1
    H = num_heads
    hd = C // H
    BN = B * N

    x1f = x1.reshape(BN, C)
    x2f = x2.reshape(BN, D1)

    # Static additive mask (constant-folded by XLA): 0 within a batch, -1e30 across.
    bid = jnp.arange(BN, dtype=jnp.int32) // N
    mask = jnp.where(bid[:, None] == bid[None, :],
                     jnp.float32(0.0), jnp.float32(-1e30))

    args = (x1f, x2f, prep["w1"], prep["w2"], prep["wp1"], prep["wp2"],
            prep["bp"], mask)

    def _full_spec(a):
        nd = a.ndim
        return pl.BlockSpec(a.shape, lambda i, nd=nd: (0,) * nd)

    out = pl.pallas_call(
        functools.partial(_cross_attn_kernel, H=H, hd=hd),
        out_shape=jax.ShapeDtypeStruct((2, BN, C), x1.dtype),
        grid=(1,),
        in_specs=[_full_spec(a) for a in args],
        out_specs=pl.BlockSpec((2, BN, C), lambda i: (0, 0, 0)),
        compiler_params=pltpu.CompilerParams(
            dimension_semantics=("arbitrary",)),
    )(*args)

    y1 = out[0].reshape(B, N, C)
    y2 = out[1].reshape(B, N, C)
    return jnp.concatenate([y1, y2], axis=-1)


# ----------------------------------------------------------------------------
# Pure-JAX reference for the correctness check.
# ----------------------------------------------------------------------------
def cross_attention_reference(x1, x2, params, num_heads):
    B, N, C = x1.shape
    hd = C // num_heads
    scale = hd ** (-0.5)

    def branch(xq, xkv, wq, wkv, wp, bp):
        q = (xq @ wq.T).reshape(B, N, num_heads, hd).transpose(0, 2, 1, 3)
        kv = (xkv @ wkv.T).reshape(B, N, 2, num_heads, hd)
        k = kv[:, :, 0].transpose(0, 2, 1, 3)
        v = kv[:, :, 1].transpose(0, 2, 1, 3)
        s = (q * scale) @ jnp.swapaxes(k, -2, -1)
        p = jax.nn.softmax(s, axis=-1)
        y = (p @ v).transpose(0, 2, 1, 3).reshape(B, N, C)
        return y @ wp.T + bp

    y1 = branch(x1, x2, params["q1_w"], params["kv1_w"],
                params["proj1_w"], params["proj1_b"])
    y2 = branch(x2, x1, params["q2_w"], params["kv2_w"],
                params["proj2_w"], params["proj2_b"])
    return jnp.concatenate([y1, y2], axis=-1)


# ----------------------------------------------------------------------------
# Deterministic parameter init (shapes from CrossAttention.__init__, qkv_bias=False)
# ----------------------------------------------------------------------------
def init_params(key, dim0, dim1):
    ks = jax.random.split(key, 8)

    def lin_w(k, out_f, in_f):
        bound = 1.0 / math.sqrt(in_f)
        return jax.random.uniform(k, (out_f, in_f), jnp.float32, -bound, bound)

    def lin_b(k, out_f, in_f):
        bound = 1.0 / math.sqrt(in_f)
        return jax.random.uniform(k, (out_f,), jnp.float32, -bound, bound)

    return {
        "q1_w": lin_w(ks[0], dim0, dim0),
        "q2_w": lin_w(ks[1], dim0, dim1),
        "kv1_w": lin_w(ks[2], 2 * dim0, dim1),
        "kv2_w": lin_w(ks[3], 2 * dim0, dim0),
        "proj1_w": lin_w(ks[4], dim0, dim0), "proj1_b": lin_b(ks[5], dim0, dim0),
        "proj2_w": lin_w(ks[6], dim0, dim0), "proj2_b": lin_b(ks[7], dim0, dim0),
    }


if __name__ == "__main__":
    # Small shapes consistent with the module: dim=[40, 24], num_heads=5 (head_dim=8).
    B, N = 2, 8
    dim0, dim1 = 40, 24
    num_heads = 5

    key = jax.random.PRNGKey(0)
    k1, k2, kp = jax.random.split(key, 3)
    x1 = jax.random.normal(k1, (B, N, dim0), jnp.float32)
    x2 = jax.random.normal(k2, (B, N, dim1), jnp.float32)
    params = init_params(kp, dim0, dim1)

    # One-time weight prep (outside the per-call forward).
    prep = prepare_params(params, num_heads)
    prep = jax.tree_util.tree_map(jax.block_until_ready, prep)

    y = cross_attention_forward(x1, x2, prep, num_heads)
    y = jax.block_until_ready(y)

    assert y.shape == (B, N, 2 * dim0), y.shape
    y_ref = cross_attention_reference(x1, x2, params, num_heads)
    max_diff = float(jnp.max(jnp.abs(y - y_ref)))
    assert jnp.allclose(y, y_ref, atol=1e-4, rtol=1e-4), max_diff

    print("KERNEL_OK")
</pallas_src>

<mosaic_0001>
module attributes {stable_mosaic.version = 11 : i64} {
  func.func @_cross_attn_kernel(%arg0: i32, %arg1: memref<16x40xf32, #tpu.memory_space<vmem>>, %arg2: memref<16x24xf32, #tpu.memory_space<vmem>>, %arg3: memref<5x40x24xf32, #tpu.memory_space<vmem>>, %arg4: memref<5x24x24xf32, #tpu.memory_space<vmem>>, %arg5: memref<5x8x40xf32, #tpu.memory_space<vmem>>, %arg6: memref<5x8x40xf32, #tpu.memory_space<vmem>>, %arg7: memref<2x1x40xf32, #tpu.memory_space<vmem>>, %arg8: memref<16x16xf32, #tpu.memory_space<vmem>>, %arg9: memref<2x16x40xf32, #tpu.memory_space<vmem>>) attributes {dimension_semantics = [#tpu.dimension_semantics<arbitrary>], iteration_bounds = array<i64: 1>, scalar_prefetch = 0 : i64, scratch_operands = 0 : i64, tpu.core_type = #tpu.core_type<tc>, window_params = [{pipeline_mode = #tpu.pipeline_mode<synchronous>, transform_indices = @transform_0, window_bounds = array<i64: 16, 40>}, {pipeline_mode = #tpu.pipeline_mode<synchronous>, transform_indices = @transform_1, window_bounds = array<i64: 16, 24>}, {pipeline_mode = #tpu.pipeline_mode<synchronous>, transform_indices = @transform_2, window_bounds = array<i64: 5, 40, 24>}, {pipeline_mode = #tpu.pipeline_mode<synchronous>, transform_indices = @transform_3, window_bounds = array<i64: 5, 24, 24>}, {pipeline_mode = #tpu.pipeline_mode<synchronous>, transform_indices = @transform_4, window_bounds = array<i64: 5, 8, 40>}, {pipeline_mode = #tpu.pipeline_mode<synchronous>, transform_indices = @transform_5, window_bounds = array<i64: 5, 8, 40>}, {pipeline_mode = #tpu.pipeline_mode<synchronous>, transform_indices = @transform_6, window_bounds = array<i64: 2, 1, 40>}, {pipeline_mode = #tpu.pipeline_mode<synchronous>, transform_indices = @transform_7, window_bounds = array<i64: 16, 16>}, {pipeline_mode = #tpu.pipeline_mode<synchronous>, transform_indices = @transform_8, window_bounds = array<i64: 2, 16, 40>}]} {
    %c0 = arith.constant 0 : index
    %c0_0 = arith.constant 0 : index
    %0 = vector.load %arg1[%c0, %c0_0] : memref<16x40xf32, #tpu.memory_space<vmem>>, vector<16x40xf32>
    %c0_1 = arith.constant 0 : index
    %c0_2 = arith.constant 0 : index
    %1 = vector.load %arg2[%c0_1, %c0_2] : memref<16x24xf32, #tpu.memory_space<vmem>>, vector<16x24xf32>
    %c0_3 = arith.constant 0 : index
    %c0_4 = arith.constant 0 : index
    %2 = vector.load %arg8[%c0_3, %c0_4] : memref<16x16xf32, #tpu.memory_space<vmem>>, vector<16x16xf32>
    %3 = vector.shape_cast %0 : vector<16x40xf32> to vector<1x16x40xf32>
    %4 = vector.shape_cast %3 : vector<1x16x40xf32> to vector<1x16x40xf32>
    %5 = vector.broadcast %4 : vector<1x16x40xf32> to vector<5x16x40xf32>
    %6 = vector.shape_cast %1 : vector<16x24xf32> to vector<1x16x24xf32>
    %7 = vector.shape_cast %6 : vector<1x16x24xf32> to vector<1x16x24xf32>
    %8 = vector.broadcast %7 : vector<1x16x24xf32> to vector<5x16x24xf32>
    %c0_5 = arith.constant 0 : index
    %c0_6 = arith.constant 0 : index
    %c0_7 = arith.constant 0 : index
    %9 = vector.load %arg3[%c0_5, %c0_6, %c0_7] : memref<5x40x24xf32, #tpu.memory_space<vmem>>, vector<5x40x24xf32>
    %cst = arith.constant dense<0.000000e+00> : vector<5x16x24xf32>
    %10 = tpu.matmul %5, %9, %cst {dimension_numbers = #tpu.dot_dimension_numbers<[2], [1], [1], [2], [0, 0, 0, 1, 1, 2], [0], [0]>} : vector<5x16x40xf32>, vector<5x40x24xf32>, vector<5x16x24xf32> -> vector<5x16x24xf32>
    %c0_8 = arith.constant 0 : index
    %c0_9 = arith.constant 0 : index
    %c0_10 = arith.constant 0 : index
    %11 = vector.load %arg4[%c0_8, %c0_9, %c0_10] : memref<5x24x24xf32, #tpu.memory_space<vmem>>, vector<5x24x24xf32>
    %cst_11 = arith.constant dense<0.000000e+00> : vector<5x16x24xf32>
    %12 = tpu.matmul %8, %11, %cst_11 {dimension_numbers = #tpu.dot_dimension_numbers<[2], [1], [1], [2], [0, 0, 0, 1, 1, 2], [0], [0]>} : vector<5x16x24xf32>, vector<5x24x24xf32>, vector<5x16x24xf32> -> vector<5x16x24xf32>
    %13 = vector.extract_strided_slice %10 {offsets = [0, 0, 0], sizes = [5, 16, 8], strides = [1, 1, 1]} : vector<5x16x24xf32> to vector<5x16x8xf32>
    %14 = vector.extract_strided_slice %12 {offsets = [0, 0, 8], sizes = [5, 16, 8], strides = [1, 1, 1]} : vector<5x16x24xf32> to vector<5x16x8xf32>
    %15 = vector.extract_strided_slice %12 {offsets = [0, 0, 16], sizes = [5, 16, 8], strides = [1, 1, 1]} : vector<5x16x24xf32> to vector<5x16x8xf32>
    %c0_12 = arith.constant 0 : index
    %c0_13 = arith.constant 0 : index
    %c0_14 = arith.constant 0 : index
    %16 = vector.load %arg5[%c0_12, %c0_13, %c0_14] : memref<5x8x40xf32, #tpu.memory_space<vmem>>, vector<5x8x40xf32>
    %c0_15 = arith.constant 0 : index
    %c0_16 = arith.constant 0 : index
    %c0_17 = arith.constant 0 : index
    %17 = vector.load %arg7[%c0_15, %c0_16, %c0_17] : memref<2x1x40xf32, #tpu.memory_space<vmem>>, vector<1x1x40xf32>
    %18 = vector.shape_cast %17 : vector<1x1x40xf32> to vector<1x40xf32>
    %cst_18 = arith.constant dense<0.000000e+00> : vector<5x16x16xf32>
    %19 = tpu.matmul %13, %14, %cst_18 {dimension_numbers = #tpu.dot_dimension_numbers<[2], [2], [1], [1], [0, 0, 0, 1, 1, 1], [0], [0]>} : vector<5x16x8xf32>, vector<5x16x8xf32>, vector<5x16x16xf32> -> vector<5x16x16xf32>
    %20 = vector.shape_cast %2 : vector<16x16xf32> to vector<1x16x16xf32>
    %21 = vector.broadcast %20 : vector<1x16x16xf32> to vector<5x16x16xf32>
    %22 = arith.addf %19, %21 : vector<5x16x16xf32>
    %cst_19 = arith.constant dense<0xFF800000> : vector<5x16xf32>
    %23 = vector.multi_reduction <maximumf>, %22, %cst_19 [2] : vector<5x16x16xf32> to vector<5x16xf32>
    %24 = vector.shape_cast %23 : vector<5x16xf32> to vector<5x16x1xf32>
    %25 = vector.broadcast %24 : vector<5x16x1xf32> to vector<5x16x16xf32>
    %26 = arith.subf %22, %25 : vector<5x16x16xf32>
    %27 = math.exp %26 : vector<5x16x16xf32>
    %cst_20 = arith.constant dense<0.000000e+00> : vector<5x16xf32>
    %28 = vector.multi_reduction <add>, %27, %cst_20 [2] : vector<5x16x16xf32> to vector<5x16xf32>
    %29 = vector.shape_cast %28 : vector<5x16xf32> to vector<5x16x1xf32>
    %30 = vector.broadcast %29 : vector<5x16x1xf32> to vector<5x16x16xf32>
    %31 = arith.divf %27, %30 : vector<5x16x16xf32>
    %cst_21 = arith.constant dense<0.000000e+00> : vector<5x16x8xf32>
    %32 = tpu.matmul %31, %15, %cst_21 {dimension_numbers = #tpu.dot_dimension_numbers<[2], [1], [1], [2], [0, 0, 0, 1, 1, 2], [0], [0]>} : vector<5x16x16xf32>, vector<5x16x8xf32>, vector<5x16x8xf32> -> vector<5x16x8xf32>
    %cst_22 = arith.constant dense<0.000000e+00> : vector<5x16x40xf32>
    %33 = tpu.matmul %32, %16, %cst_22 {dimension_numbers = #tpu.dot_dimension_numbers<[2], [1], [1], [2], [0, 0, 0, 1, 1, 2], [0], [0]>} : vector<5x16x8xf32>, vector<5x8x40xf32>, vector<5x16x40xf32> -> vector<5x16x40xf32>
    %cst_23 = arith.constant dense<0.000000e+00> : vector<16x40xf32>
    %34 = vector.multi_reduction <add>, %33, %cst_23 [0] : vector<5x16x40xf32> to vector<16x40xf32>
    %35 = vector.broadcast %18 : vector<1x40xf32> to vector<16x40xf32>
    %36 = arith.addf %34, %35 : vector<16x40xf32>
    %37 = vector.extract_strided_slice %12 {offsets = [0, 0, 0], sizes = [5, 16, 8], strides = [1, 1, 1]} : vector<5x16x24xf32> to vector<5x16x8xf32>
    %38 = vector.extract_strided_slice %10 {offsets = [0, 0, 8], sizes = [5, 16, 8], strides = [1, 1, 1]} : vector<5x16x24xf32> to vector<5x16x8xf32>
    %39 = vector.extract_strided_slice %10 {offsets = [0, 0, 16], sizes = [5, 16, 8], strides = [1, 1, 1]} : vector<5x16x24xf32> to vector<5x16x8xf32>
    %c0_24 = arith.constant 0 : index
    %c0_25 = arith.constant 0 : index
    %c0_26 = arith.constant 0 : index
    %40 = vector.load %arg6[%c0_24, %c0_25, %c0_26] : memref<5x8x40xf32, #tpu.memory_space<vmem>>, vector<5x8x40xf32>
    %c1 = arith.constant 1 : index
    %c0_27 = arith.constant 0 : index
    %c0_28 = arith.constant 0 : index
    %41 = vector.load %arg7[%c1, %c0_27, %c0_28] : memref<2x1x40xf32, #tpu.memory_space<vmem>>, vector<1x1x40xf32>
    %42 = vector.shape_cast %41 : vector<1x1x40xf32> to vector<1x40xf32>
    %cst_29 = arith.constant dense<0.000000e+00> : vector<5x16x16xf32>
    %43 = tpu.matmul %37, %38, %cst_29 {dimension_numbers = #tpu.dot_dimension_numbers<[2], [2], [1], [1], [0, 0, 0, 1, 1, 1], [0], [0]>} : vector<5x16x8xf32>, vector<5x16x8xf32>, vector<5x16x16xf32> -> vector<5x16x16xf32>
    %44 = vector.shape_cast %2 : vector<16x16xf32> to vector<1x16x16xf32>
    %45 = vector.broadcast %44 : vector<1x16x16xf32> to vector<5x16x16xf32>
    %46 = arith.addf %43, %45 : vector<5x16x16xf32>
    %cst_30 = arith.constant dense<0xFF800000> : vector<5x16xf32>
    %47 = vector.multi_reduction <maximumf>, %46, %cst_30 [2] : vector<5x16x16xf32> to vector<5x16xf32>
    %48 = vector.shape_cast %47 : vector<5x16xf32> to vector<5x16x1xf32>
    %49 = vector.broadcast %48 : vector<5x16x1xf32> to vector<5x16x16xf32>
    %50 = arith.subf %46, %49 : vector<5x16x16xf32>
    %51 = math.exp %50 : vector<5x16x16xf32>
    %cst_31 = arith.constant dense<0.000000e+00> : vector<5x16xf32>
    %52 = vector.multi_reduction <add>, %51, %cst_31 [2] : vector<5x16x16xf32> to vector<5x16xf32>
    %53 = vector.shape_cast %52 : vector<5x16xf32> to vector<5x16x1xf32>
    %54 = vector.broadcast %53 : vector<5x16x1xf32> to vector<5x16x16xf32>
    %55 = arith.divf %51, %54 : vector<5x16x16xf32>
    %cst_32 = arith.constant dense<0.000000e+00> : vector<5x16x8xf32>
    %56 = tpu.matmul %55, %39, %cst_32 {dimension_numbers = #tpu.dot_dimension_numbers<[2], [1], [1], [2], [0, 0, 0, 1, 1, 2], [0], [0]>} : vector<5x16x16xf32>, vector<5x16x8xf32>, vector<5x16x8xf32> -> vector<5x16x8xf32>
    %cst_33 = arith.constant dense<0.000000e+00> : vector<5x16x40xf32>
    %57 = tpu.matmul %56, %40, %cst_33 {dimension_numbers = #tpu.dot_dimension_numbers<[2], [1], [1], [2], [0, 0, 0, 1, 1, 2], [0], [0]>} : vector<5x16x8xf32>, vector<5x8x40xf32>, vector<5x16x40xf32> -> vector<5x16x40xf32>
    %cst_34 = arith.constant dense<0.000000e+00> : vector<16x40xf32>
    %58 = vector.multi_reduction <add>, %57, %cst_34 [0] : vector<5x16x40xf32> to vector<16x40xf32>
    %59 = vector.broadcast %42 : vector<1x40xf32> to vector<16x40xf32>
    %60 = arith.addf %58, %59 : vector<16x40xf32>
    %c0_35 = arith.constant 0 : index
    %c0_36 = arith.constant 0 : index
    %c0_37 = arith.constant 0 : index
    %61 = vector.load %arg9[%c0_35, %c0_36, %c0_37] : memref<2x16x40xf32, #tpu.memory_space<vmem>>, vector<1x16x40xf32>
    %62 = vector.shape_cast %61 : vector<1x16x40xf32> to vector<16x40xf32>
    %63 = vector.shape_cast %36 : vector<16x40xf32> to vector<1x16x40xf32>
    tpu.vector_store %arg9[%c0_35, %c0_36, %c0_37], %63 {strides = array<i32>} : memref<2x16x40xf32, #tpu.memory_space<vmem>>, vector<1x16x40xf32>,
    %c1_38 = arith.constant 1 : index
    %c0_39 = arith.constant 0 : index
    %c0_40 = arith.constant 0 : index
    %64 = vector.load %arg9[%c1_38, %c0_39, %c0_40] : memref<2x16x40xf32, #tpu.memory_space<vmem>>, vector<1x16x40xf32>
    %65 = vector.shape_cast %64 : vector<1x16x40xf32> to vector<16x40xf32>
    %66 = vector.shape_cast %60 : vector<16x40xf32> to vector<1x16x40xf32>
    tpu.vector_store %arg9[%c1_38, %c0_39, %c0_40], %66 {strides = array<i32>} : memref<2x16x40xf32, #tpu.memory_space<vmem>>, vector<1x16x40xf32>,
    return
  }
  func.func @transform_0(%arg0: i32) -> (i32, i32) {
    %c0_i32 = arith.constant 0 : i32
    %c0_i32_0 = arith.constant 0 : i32
    %c0_i32_1 = arith.constant 0 : i32
    return %c0_i32, %c0_i32_0 : i32, i32
  }
  func.func @transform_1(%arg0: i32) -> (i32, i32) {
    %c0_i32 = arith.constant 0 : i32
    %c0_i32_0 = arith.constant 0 : i32
    %c0_i32_1 = arith.constant 0 : i32
    return %c0_i32, %c0_i32_0 : i32, i32
  }
  func.func @transform_2(%arg0: i32) -> (i32, i32, i32) {
    %c0_i32 = arith.constant 0 : i32
    %c0_i32_0 = arith.constant 0 : i32
    %c0_i32_1 = arith.constant 0 : i32
    %c0_i32_2 = arith.constant 0 : i32
    return %c0_i32, %c0_i32_0, %c0_i32_1 : i32, i32, i32
  }
  func.func @transform_3(%arg0: i32) -> (i32, i32, i32) {
    %c0_i32 = arith.constant 0 : i32
    %c0_i32_0 = arith.constant 0 : i32
    %c0_i32_1 = arith.constant 0 : i32
    %c0_i32_2 = arith.constant 0 : i32
    return %c0_i32, %c0_i32_0, %c0_i32_1 : i32, i32, i32
  }
  func.func @transform_4(%arg0: i32) -> (i32, i32, i32) {
    %c0_i32 = arith.constant 0 : i32
    %c0_i32_0 = arith.constant 0 : i32
    %c0_i32_1 = arith.constant 0 : i32
    %c0_i32_2 = arith.constant 0 : i32
    return %c0_i32, %c0_i32_0, %c0_i32_1 : i32, i32, i32
  }
  func.func @transform_5(%arg0: i32) -> (i32, i32, i32) {
    %c0_i32 = arith.constant 0 : i32
    %c0_i32_0 = arith.constant 0 : i32
    %c0_i32_1 = arith.constant 0 : i32
    %c0_i32_2 = arith.constant 0 : i32
    return %c0_i32, %c0_i32_0, %c0_i32_1 : i32, i32, i32
  }
  func.func @transform_6(%arg0: i32) -> (i32, i32, i32) {
    %c0_i32 = arith.constant 0 : i32
    %c0_i32_0 = arith.constant 0 : i32
    %c0_i32_1 = arith.constant 0 : i32
    %c0_i32_2 = arith.constant 0 : i32
    return %c0_i32, %c0_i32_0, %c0_i32_1 : i32, i32, i32
  }
  func.func @transform_7(%arg0: i32) -> (i32, i32) {
    %c0_i32 = arith.constant 0 : i32
    %c0_i32_0 = arith.constant 0 : i32
    %c0_i32_1 = arith.constant 0 : i32
    return %c0_i32, %c0_i32_0 : i32, i32
  }
  func.func @transform_8(%arg0: i32) -> (i32, i32, i32) {
    %c0_i32 = arith.constant 0 : i32
    %c0_i32_0 = arith.constant 0 : i32
    %c0_i32_1 = arith.constant 0 : i32
    %c0_i32_2 = arith.constant 0 : i32
    return %c0_i32, %c0_i32_0, %c0_i32_1 : i32, i32, i32
  }
}

</mosaic_0001>

<llo_original>
// kernel: cross_attention_forward.1
$region0: #{cross_attention_forward.1}
  #allocation0 [shape = 'u32[]', space=smem, size = 0x4, offset = 0x4, fixed_abs, tag = 'smem constant byte address 0x4 - core index']
  #allocation1 [shape = 'u32[144,128]{1,0:T(1,128)}', space=vmem, size = 0x12000, scoped, tag = 'internal scratch']
  %s0 = inlined_call_operand.vmem [shape: f32[16,40], index: 0, kind: input, shape index: {}]
  %s1 = inlined_call_operand.vmem [shape: f32[16,24], index: 1, kind: input, shape index: {}]
  %s2 = inlined_call_operand.vmem [shape: f32[5,40,24], index: 2, kind: input, shape index: {}]
  %s3 = inlined_call_operand.vmem [shape: f32[5,24,24], index: 3, kind: input, shape index: {}]
  %s4 = inlined_call_operand.vmem [shape: f32[5,8,40], index: 4, kind: input, shape index: {}]
  %s5 = inlined_call_operand.vmem [shape: f32[5,8,40], index: 5, kind: input, shape index: {}]
  %s6 = inlined_call_operand.vmem [shape: f32[2,1,40], index: 6, kind: input, shape index: {}]
  %s7 = inlined_call_operand.vmem [shape: f32[16,16], index: 7, kind: input, shape index: {}]
  %s8 = inlined_call_operand.vmem [shape: f32[2,16,40], index: 8, kind: output, shape index: {}]
  %s9 = sld [smem:[#allocation0]]
  $region42: #{cross_attention_forward.1} parent=0
    _
  %s11 = ssub.s32 1, %s9
  %s12 = scalar_select 0, %s11, %s9
  // Predicated region
  $region2: #{cross_attention_forward.1} parent=0 // pred_check
    _
  $region3: #{cross_attention_forward.1} parent=0 // pred_check_branch
    %14 = sbr.rel (0) target = $region5
  $region4: #{cross_attention_forward.1} parent=0 // pred_region
    _
  $region5: #{cross_attention_forward.1} parent=0 // pred_fallthru
    _
  // Predicated region
  $region6: #{cross_attention_forward.1} parent=0 // pred_check
    _
  $region7: #{cross_attention_forward.1} parent=0 // pred_check_branch
    %16 = sbr.rel (0) target = $region9
  $region8: #{cross_attention_forward.1} parent=0 // pred_region
    _
  $region9: #{cross_attention_forward.1} parent=0 // pred_fallthru
    _
  // Predicated region
  $region10: #{cross_attention_forward.1} parent=0 // pred_check
    _
  $region11: #{cross_attention_forward.1} parent=0 // pred_check_branch
    %18 = sbr.rel (0) target = $region13
  $region12: #{cross_attention_forward.1} parent=0 // pred_region
    _
  $region13: #{cross_attention_forward.1} parent=0 // pred_fallthru
    _
  // Predicated region
  $region14: #{cross_attention_forward.1} parent=0 // pred_check
    _
  $region15: #{cross_attention_forward.1} parent=0 // pred_check_branch
    %20 = sbr.rel (0) target = $region17
  $region16: #{cross_attention_forward.1} parent=0 // pred_region
    _
  $region17: #{cross_attention_forward.1} parent=0 // pred_fallthru
    _
  // Predicated region
  $region18: #{cross_attention_forward.1} parent=0 // pred_check
    _
  $region19: #{cross_attention_forward.1} parent=0 // pred_check_branch
    %22 = sbr.rel (0) target = $region21
  $region20: #{cross_attention_forward.1} parent=0 // pred_region
    _
  $region21: #{cross_attention_forward.1} parent=0 // pred_fallthru
    _
  // Predicated region
  $region22: #{cross_attention_forward.1} parent=0 // pred_check
    _
  $region23: #{cross_attention_forward.1} parent=0 // pred_check_branch
    %24 = sbr.rel (0) target = $region25
  $region24: #{cross_attention_forward.1} parent=0 // pred_region
    _
  $region25: #{cross_attention_forward.1} parent=0 // pred_fallthru
    _
  // Predicated region
  $region26: #{cross_attention_forward.1} parent=0 // pred_check
    _
  $region27: #{cross_attention_forward.1} parent=0 // pred_check_branch
    %26 = sbr.rel (0) target = $region29
  $region28: #{cross_attention_forward.1} parent=0 // pred_region
    _
  $region29: #{cross_attention_forward.1} parent=0 // pred_fallthru
    _
  // Predicated region
  $region30: #{cross_attention_forward.1} parent=0 // pred_check
    _
  $region31: #{cross_attention_forward.1} parent=0 // pred_check_branch
    %28 = sbr.rel (0) target = $region33
  $region32: #{cross_attention_forward.1} parent=0 // pred_region
    _
  $region33: #{cross_attention_forward.1} parent=0 // pred_fallthru
    _
  %v29 = vld [vmem:[%s0] sm:$0xff]
  %v30 = vld [vmem:[%s0 + $0x8] sm:$0xff]
  %v31 = vld [vmem:[%s1] sm:$0xff]
  %v32 = vld [vmem:[%s1 + $0x8] sm:$0xff]
  %v33 = vld [vmem:[%s7] sm:$0xff]
  %v34 = vld [vmem:[%s7 + $0x8] sm:$0xff]
  %v35 = vld [vmem:[%s2] sm:$0xff]
  %v36 = vld [vmem:[%s2 + $0x8] sm:$0xff]
  %v37 = vld [vmem:[%s2 + $0x10] sm:$0xff]
  %v38 = vld [vmem:[%s2 + $0x18] sm:$0xff]
  %v39 = vld [vmem:[%s2 + $0x20] sm:$0xff]
  %v40 = vld [vmem:[%s2 + $0x28] sm:$0xff]
  %v41 = vld [vmem:[%s2 + $0x30] sm:$0xff]
  %v42 = vld [vmem:[%s2 + $0x38] sm:$0xff]
  %v43 = vld [vmem:[%s2 + $0x40] sm:$0xff]
  %v44 = vld [vmem:[%s2 + $0x48] sm:$0xff]
  %v45 = vld [vmem:[%s2 + $0x50] sm:$0xff]
  %v46 = vld [vmem:[%s2 + $0x58] sm:$0xff]
  %v47 = vld [vmem:[%s2 + $0x60] sm:$0xff]
  %v48 = vld [vmem:[%s2 + $0x68] sm:$0xff]
  %v49 = vld [vmem:[%s2 + $0x70] sm:$0xff]
  %v50 = vld [vmem:[%s2 + $0x78] sm:$0xff]
  %v51 = vld [vmem:[%s2 + $0x80] sm:$0xff]
  %v52 = vld [vmem:[%s2 + $0x88] sm:$0xff]
  %v53 = vld [vmem:[%s2 + $0x90] sm:$0xff]
  %v54 = vld [vmem:[%s2 + $0x98] sm:$0xff]
  %v55 = vld [vmem:[%s2 + $0xa0] sm:$0xff]
  %v56 = vld [vmem:[%s2 + $0xa8] sm:$0xff]
  %v57 = vld [vmem:[%s2 + $0xb0] sm:$0xff]
  %v58 = vld [vmem:[%s2 + $0xb8] sm:$0xff]
  %v59 = vld [vmem:[%s2 + $0xc0] sm:$0xff]
  %vm60 = vcmask 326656
  %v62 = vsel %vm60, %v29, 0
  %v65 = vsel %vm60, %v30, 0
  %67 = vmatprep.subr.mxu0 0.0
  %68 = vmatpush1.msra.mxu0 %v35
  %69 = vmatprep.subr.mxu0 0.0
  %70 = vmatpush1.msra.mxu0 %v36
  %71 = vmatprep.subr.mxu0 0.0
  %72 = vmatpush1.msra.mxu0 %v37
  %73 = vmatprep.subr.mxu0 0.0
  %74 = vmatpush1.msra.mxu0 %v38
  %75 = vmatprep.subr.mxu0 0.0
  %76 = vmatpush1.msra.mxu0 %v39
  %77 = vmatprep.subr.mxu0 0.0
  %78 = vmatpush1.msra.mxu0 0.0
  %79 = vmatprep.subr.mxu0 0.0
  %80 = vmatpush1.msra.mxu0 0.0
  %81 = vmatprep.subr.mxu0 0.0
  %82 = vmatpush1.msra.mxu0 0.0
  %83 = vmatprep.subr.mxu0 0.0
  %84 = vmatpush1.msra.mxu0 0.0
  %85 = vmatprep.subr.mxu0 0.0
  %86 = vmatpush1.msra.mxu0 0.0
  %87 = vmatprep.subr.mxu0 0.0
  %88 = vmatpush1.msra.mxu0 0.0
  %89 = vmatprep.subr.mxu0 0.0
  %90 = vmatpush1.msra.mxu0 0.0
  %91 = vmatprep.subr.mxu0 0.0
  %92 = vmatpush1.msra.mxu0 0.0
  %93 = vmatprep.subr.mxu0 0.0
  %94 = vmatpush1.msra.mxu0 0.0
  %95 = vmatprep.subr.mxu0 0.0
  %96 = vmatpush1.msra.mxu0 0.0
  %97 = vmatprep.subr.mxu0 0.0
  %98 = vmatpush1.msra.mxu0 0.0
  %99 = vmatprep.subr.mxu0 0.0
  %100 = vmatpush1.msra.mxu0 0.0
  %101 = vmatprep.subr.mxu0 0.0
  %102 = vmatpush1.msra.mxu0 0.0
  %103 = vmatprep.subr.mxu0 0.0
  %104 = vmatpush1.msra.mxu0 0.0
  %105 = vmatprep.subr.mxu0 0.0
  %106 = vmatpush1.msra.mxu0 0.0
  %107 = vmatprep.subr.mxu0 0.0
  %108 = vmatpush1.msra.mxu0 0.0
  %109 = vmatprep.subr.mxu0 0.0
  %110 = vmatpush1.msra.mxu0 0.0
  %111 = vmatprep.subr.mxu0 0.0
  %112 = vmatpush1.msra.mxu0 0.0
  %113 = vmatprep.subr.mxu0 0.0
  %114 = vmatpush1.msra.mxu0 0.0
  %115 = vmatprep.subr.mxu0 0.0
  %116 = vmatpush1.msra.mxu0 0.0
  %117 = vmatprep.subr.mxu0 0.0
  %118 = vmatpush1.msra.mxu0 0.0
  %119 = vmatprep.subr.mxu0 0.0
  %120 = vmatpush1.msra.mxu0 0.0
  %121 = vmatprep.subr.mxu0 0.0
  %122 = vmatpush1.msra.mxu0 0.0
  %123 = vmatprep.subr.mxu0 0.0
  %124 = vmatpush1.msra.mxu0 0.0
  %125 = vmatprep.subr.mxu0 0.0
  %126 = vmatpush1.msra.mxu0 0.0
  %127 = vmatprep.subr.mxu0 0.0
  %128 = vmatpush1.msra.mxu0 0.0
  %129 = vmatprep.subr.mxu0 0.0
  %130 = vmatpush1.msra.mxu0 0.0
  %131 = vmatprep.mubr.f32.mxu0 0.0
  %132 = vmatmul.mubr.f32.gmra.mrb[0].mxu0 %v62
  %v133 = vpop.f32.mrb[0].mxu0
  %v134 = vadd.f32 0.0, %v133
  %v135 = vpop.f32.mrb[0].mxu0
  %136 = vmatprep.mubr.f32.mxu0 0.0
  %137 = vmatmul.mubr.f32.gmra.mrb[0].mxu0 %v65
  %v138 = vpop.f32.mrb[0].mxu0
  %v139 = vadd.f32 0.0, %v138
  %v140 = vpop.f32.mrb[0].mxu0
  %141 = vdwg.mxu0
  %142 = vmatprep.subr.mxu0 0.0
  %143 = vmatpush1.msra.mxu0 %v40
  %144 = vmatprep.subr.mxu0 0.0
  %145 = vmatpush1.msra.mxu0 %v41
  %146 = vmatprep.subr.mxu0 0.0
  %147 = vmatpush1.msra.mxu0 %v42
  %148 = vmatprep.subr.mxu0 0.0
  %149 = vmatpush1.msra.mxu0 %v43
  %150 = vmatprep.subr.mxu0 0.0
  %151 = vmatpush1.msra.mxu0 %v44
  %152 = vmatprep.subr.mxu0 0.0
  %153 = vmatpush1.msra.mxu0 0.0
  %154 = vmatprep.subr.mxu0 0.0
  %155 = vmatpush1.msra.mxu0 0.0
  %156 = vmatprep.subr.mxu0 0.0
  %157 = vmatpush1.msra.mxu0 0.0
  %158 = vmatprep.subr.mxu0 0.0
  %159 = vmatpush1.msra.mxu0 0.0
  %160 = vmatprep.subr.mxu0 0.0
  %161 = vmatpush1.msra.mxu0 0.0
  %162 = vmatprep.subr.mxu0 0.0
  %163 = vmatpush1.msra.mxu0 0.0
  %164 = vmatprep.subr.mxu0 0.0
  %165 = vmatpush1.msra.mxu0 0.0
  %166 = vmatprep.subr.mxu0 0.0
  %167 = vmatpush1.msra.mxu0 0.0
  %168 = vmatprep.subr.mxu0 0.0
  %169 = vmatpush1.msra.mxu0 0.0
  %170 = vmatprep.subr.mxu0 0.0
  %171 = vmatpush1.msra.mxu0 0.0
  %172 = vmatprep.subr.mxu0 0.0
  %173 = vmatpush1.msra.mxu0 0.0
  %174 = vmatprep.subr.mxu0 0.0
  %175 = vmatpush1.msra.mxu0 0.0
  %176 = vmatprep.subr.mxu0 0.0
  %177 = vmatpush1.msra.mxu0 0.0
  %178 = vmatprep.subr.mxu0 0.0
  %179 = vmatpush1.msra.mxu0 0.0
  %180 = vmatprep.subr.mxu0 0.0
  %181 = vmatpush1.msra.mxu0 0.0
  %182 = vmatprep.subr.mxu0 0.0
  %183 = vmatpush1.msra.mxu0 0.0
  %184 = vmatprep.subr.mxu0 0.0
  %185 = vmatpush1.msra.mxu0 0.0
  %186 = vmatprep.subr.mxu0 0.0
  %187 = vmatpush1.msra.mxu0 0.0
  %188 = vmatprep.subr.mxu0 0.0
  %189 = vmatpush1.msra.mxu0 0.0
  %190 = vmatprep.subr.mxu0 0.0
  %191 = vmatpush1.msra.mxu0 0.0
  %192 = vmatprep.subr.mxu0 0.0
  %193 = vmatpush1.msra.mxu0 0.0
  %194 = vmatprep.subr.mxu0 0.0
  %195 = vmatpush1.msra.mxu0 0.0
  %196 = vmatprep.subr.mxu0 0.0
  %197 = vmatpush1.msra.mxu0 0.0
  %198 = vmatprep.subr.mxu0 0.0
  %199 = vmatpush1.msra.mxu0 0.0
  %200 = vmatprep.subr.mxu0 0.0
  %201 = vmatpush1.msra.mxu0 0.0
  %202 = vmatprep.subr.mxu0 0.0
  %203 = vmatpush1.msra.mxu0 0.0
  %204 = vmatprep.subr.mxu0 0.0
  %205 = vmatpush1.msra.mxu0 0.0
  %206 = vmatprep.mubr.f32.mxu0 0.0
  %207 = vmatmul.mubr.f32.gmra.mrb[0].mxu0 %v62
  %v208 = vpop.f32.mrb[0].mxu0
  %v209 = vadd.f32 0.0, %v208
  %v210 = vpop.f32.mrb[0].mxu0
  %211 = vmatprep.mubr.f32.mxu0 0.0
  %212 = vmatmul.mubr.f32.gmra.mrb[0].mxu0 %v65
  %v213 = vpop.f32.mrb[0].mxu0
  %v214 = vadd.f32 0.0, %v213
  %v215 = vpop.f32.mrb[0].mxu0
  %216 = vdwg.mxu0
  %217 = vmatprep.subr.mxu0 0.0
  %218 = vmatpush1.msra.mxu0 %v45
  %219 = vmatprep.subr.mxu0 0.0
  %220 = vmatpush1.msra.mxu0 %v46
  %221 = vmatprep.subr.mxu0 0.0
  %222 = vmatpush1.msra.mxu0 %v47
  %223 = vmatprep.subr.mxu0 0.0
  %224 = vmatpush1.msra.mxu0 %v48
  %225 = vmatprep.subr.mxu0 0.0
  %226 = vmatpush1.msra.mxu0 %v49
  %227 = vmatprep.subr.mxu0 0.0
  %228 = vmatpush1.msra.mxu0 0.0
  %229 = vmatprep.subr.mxu0 0.0
  %230 = vmatpush1.msra.mxu0 0.0
  %231 = vmatprep.subr.mxu0 0.0
  %232 = vmatpush1.msra.mxu0 0.0
  %233 = vmatprep.subr.mxu0 0.0
  %234 = vmatpush1.msra.mxu0 0.0
  %235 = vmatprep.subr.mxu0 0.0
  %236 = vmatpush1.msra.mxu0 0.0
  %237 = vmatprep.subr.mxu0 0.0
  %238 = vmatpush1.msra.mxu0 0.0
  %239 = vmatprep.subr.mxu0 0.0
  %240 = vmatpush1.msra.mxu0 0.0
  %241 = vmatprep.subr.mxu0 0.0
  %242 = vmatpush1.msra.mxu0 0.0
  %243 = vmatprep.subr.mxu0 0.0
  %244 = vmatpush1.msra.mxu0 0.0
  %245 = vmatprep.subr.mxu0 0.0
  %246 = vmatpush1.msra.mxu0 0.0
  %247 = vmatprep.subr.mxu0 0.0
  %248 = vmatpush1.msra.mxu0 0.0
  %249 = vmatprep.subr.mxu0 0.0
  %250 = vmatpush1.msra.mxu0 0.0
  %251 = vmatprep.subr.mxu0 0.0
  %252 = vmatpush1.msra.mxu0 0.0
  %253 = vmatprep.subr.mxu0 0.0
  %254 = vmatpush1.msra.mxu0 0.0
  %255 = vmatprep.subr.mxu0 0.0
  %256 = vmatpush1.msra.mxu0 0.0
  %257 = vmatprep.subr.mxu0 0.0
  %258 = vmatpush1.msra.mxu0 0.0
  %259 = vmatprep.subr.mxu0 0.0
  %260 = vmatpush1.msra.mxu0 0.0
  %261 = vmatprep.subr.mxu0 0.0
  %262 = vmatpush1.msra.mxu0 0.0
  %263 = vmatprep.subr.mxu0 0.0
  %264 = vmatpush1.msra.mxu0 0.0
  %265 = vmatprep.subr.mxu0 0.0
  %266 = vmatpush1.msra.mxu0 0.0
  %267 = vmatprep.subr.mxu0 0.0
  %268 = vmatpush1.msra.mxu0 0.0
  %269 = vmatprep.subr.mxu0 0.0
  %270 = vmatpush1.msra.mxu0 0.0
  %271 = vmatprep.subr.mxu0 0.0
  %272 = vmatpush1.msra.mxu0 0.0
  %273 = vmatprep.subr.mxu0 0.0
  %274 = vmatpush1.msra.mxu0 0.0
  %275 = vmatprep.subr.mxu0 0.0
  %276 = vmatpush1.msra.mxu0 0.0
  %277 = vmatprep.subr.mxu0 0.0
  %278 = vmatpush1.msra.mxu0 0.0
  %279 = vmatprep.subr.mxu0 0.0
  %280 = vmatpush1.msra.mxu0 0.0
  %281 = vmatprep.mubr.f32.mxu0 0.0
  %282 = vmatmul.mubr.f32.gmra.mrb[0].mxu0 %v62
  %v283 = vpop.f32.mrb[0].mxu0
  %v284 = vadd.f32 0.0, %v283
  %v285 = vpop.f32.mrb[0].mxu0
  %286 = vmatprep.mubr.f32.mxu0 0.0
  %287 = vmatmul.mubr.f32.gmra.mrb[0].mxu0 %v65
  %v288 = vpop.f32.mrb[0].mxu0
  %v289 = vadd.f32 0.0, %v288
  %v290 = vpop.f32.mrb[0].mxu0
  %291 = vdwg.mxu0
  %292 = vmatprep.subr.mxu0 0.0
  %293 = vmatpush1.msra.mxu0 %v50
  %294 = vmatprep.subr.mxu0 0.0
  %295 = vmatpush1.msra.mxu0 %v51
  %296 = vmatprep.subr.mxu0 0.0
  %297 = vmatpush1.msra.mxu0 %v52
  %298 = vmatprep.subr.mxu0 0.0
  %299 = vmatpush1.msra.mxu0 %v53
  %300 = vmatprep.subr.mxu0 0.0
  %301 = vmatpush1.msra.mxu0 %v54
  %302 = vmatprep.subr.mxu0 0.0
  %303 = vmatpush1.msra.mxu0 0.0
  %304 = vmatprep.subr.mxu0 0.0
  %305 = vmatpush1.msra.mxu0 0.0
  %306 = vmatprep.subr.mxu0 0.0
  %307 = vmatpush1.msra.mxu0 0.0
  %308 = vmatprep.subr.mxu0 0.0
  %309 = vmatpush1.msra.mxu0 0.0
  %310 = vmatprep.subr.mxu0 0.0
  %311 = vmatpush1.msra.mxu0 0.0
  %312 = vmatprep.subr.mxu0 0.0
  %313 = vmatpush1.msra.mxu0 0.0
  %314 = vmatprep.subr.mxu0 0.0
  %315 = vmatpush1.msra.mxu0 0.0
  %316 = vmatprep.subr.mxu0 0.0
  %317 = vmatpush1.msra.mxu0 0.0
  %318 = vmatprep.subr.mxu0 0.0
  %319 = vmatpush1.msra.mxu0 0.0
  %320 = vmatprep.subr.mxu0 0.0
  %321 = vmatpush1.msra.mxu0 0.0
  %322 = vmatprep.subr.mxu0 0.0
  %323 = vmatpush1.msra.mxu0 0.0
  %324 = vmatprep.subr.mxu0 0.0
  %325 = vmatpush1.msra.mxu0 0.0
  %326 = vmatprep.subr.mxu0 0.0
  %327 = vmatpush1.msra.mxu0 0.0
  %328 = vmatprep.subr.mxu0 0.0
  %329 = vmatpush1.msra.mxu0 0.0
  %330 = vmatprep.subr.mxu0 0.0
  %331 = vmatpush1.msra.mxu0 0.0
  %332 = vmatprep.subr.mxu0 0.0
  %333 = vmatpush1.msra.mxu0 0.0
  %334 = vmatprep.subr.mxu0 0.0
  %335 = vmatpush1.msra.mxu0 0.0
  %336 = vmatprep.subr.mxu0 0.0
  %337 = vmatpush1.msra.mxu0 0.0
  %338 = vmatprep.subr.mxu0 0.0
  %339 = vmatpush1.msra.mxu0 0.0
  %340 = vmatprep.subr.mxu0 0.0
  %341 = vmatpush1.msra.mxu0 0.0
  %342 = vmatprep.subr.mxu0 0.0
  %343 = vmatpush1.msra.mxu0 0.0
  %344 = vmatprep.subr.mxu0 0.0
  %345 = vmatpush1.msra.mxu0 0.0
  %346 = vmatprep.subr.mxu0 0.0
  %347 = vmatpush1.msra.mxu0 0.0
  %348 = vmatprep.subr.mxu0 0.0
  %349 = vmatpush1.msra.mxu0 0.0
  %350 = vmatprep.subr.mxu0 0.0
  %351 = vmatpush1.msra.mxu0 0.0
  %352 = vmatprep.subr.mxu0 0.0
  %353 = vmatpush1.msra.mxu0 0.0
  %354 = vmatprep.subr.mxu0 0.0
  %355 = vmatpush1.msra.mxu0 0.0
  %356 = vmatprep.mubr.f32.mxu0 0.0
  %357 = vmatmul.mubr.f32.gmra.mrb[0].mxu0 %v62
  %v358 = vpop.f32.mrb[0].mxu0
  %v359 = vadd.f32 0.0, %v358
  %v360 = vpop.f32.mrb[0].mxu0
  %361 = vmatprep.mubr.f32.mxu0 0.0
  %362 = vmatmul.mubr.f32.gmra.mrb[0].mxu0 %v65
  %v363 = vpop.f32.mrb[0].mxu0
  %v364 = vadd.f32 0.0, %v363
  %v365 = vpop.f32.mrb[0].mxu0
  %366 = vdwg.mxu0
  %367 = vmatprep.subr.mxu0 0.0
  %368 = vmatpush1.msra.mxu0 %v55
  %369 = vmatprep.subr.mxu0 0.0
  %370 = vmatpush1.msra.mxu0 %v56
  %371 = vmatprep.subr.mxu0 0.0
  %372 = vmatpush1.msra.mxu0 %v57
  %373 = vmatprep.subr.mxu0 0.0
  %374 = vmatpush1.msra.mxu0 %v58
  %375 = vmatprep.subr.mxu0 0.0
  %376 = vmatpush1.msra.mxu0 %v59
  %377 = vmatprep.subr.mxu0 0.0
  %378 = vmatpush1.msra.mxu0 0.0
  %379 = vmatprep.subr.mxu0 0.0
  %380 = vmatpush1.msra.mxu0 0.0
  %381 = vmatprep.subr.mxu0 0.0
  %382 = vmatpush1.msra.mxu0 0.0
  %383 = vmatprep.subr.mxu0 0.0
  %384 = vmatpush1.msra.mxu0 0.0
  %385 = vmatprep.subr.mxu0 0.0
  %386 = vmatpush1.msra.mxu0 0.0
  %387 = vmatprep.subr.mxu0 0.0
  %388 = vmatpush1.msra.mxu0 0.0
  %389 = vmatprep.subr.mxu0 0.0
  %390 = vmatpush1.msra.mxu0 0.0
  %391 = vmatprep.subr.mxu0 0.0
  %392 = vmatpush1.msra.mxu0 0.0
  %393 = vmatprep.subr.mxu0 0.0
  %394 = vmatpush1.msra.mxu0 0.0
  %395 = vmatprep.subr.mxu0 0.0
  %396 = vmatpush1.msra.mxu0 0.0
  %397 = vmatprep.subr.mxu0 0.0
  %398 = vmatpush1.msra.mxu0 0.0
  %399 = vmatprep.subr.mxu0 0.0
  %400 = vmatpush1.msra.mxu0 0.0
  %401 = vmatprep.subr.mxu0 0.0
  %402 = vmatpush1.msra.mxu0 0.0
  %403 = vmatprep.subr.mxu0 0.0
  %404 = vmatpush1.msra.mxu0 0.0
  %405 = vmatprep.subr.mxu0 0.0
  %406 = vmatpush1.msra.mxu0 0.0
  %407 = vmatprep.subr.mxu0 0.0
  %408 = vmatpush1.msra.mxu0 0.0
  %409 = vmatprep.subr.mxu0 0.0
  %410 = vmatpush1.msra.mxu0 0.0
  %411 = vmatprep.subr.mxu0 0.0
  %412 = vmatpush1.msra.mxu0 0.0
  %413 = vmatprep.subr.mxu0 0.0
  %414 = vmatpush1.msra.mxu0 0.0
  %415 = vmatprep.subr.mxu0 0.0
  %416 = vmatpush1.msra.mxu0 0.0
  %417 = vmatprep.subr.mxu0 0.0
  %418 = vmatpush1.msra.mxu0 0.0
  %419 = vmatprep.subr.mxu0 0.0
  %420 = vmatpush1.msra.mxu0 0.0
  %421 = vmatprep.subr.mxu0 0.0
  %422 = vmatpush1.msra.mxu0 0.0
  %423 = vmatprep.subr.mxu0 0.0
  %424 = vmatpush1.msra.mxu0 0.0
  %425 = vmatprep.subr.mxu0 0.0
  %426 = vmatpush1.msra.mxu0 0.0
  %427 = vmatprep.subr.mxu0 0.0
  %428 = vmatpush1.msra.mxu0 0.0
  %429 = vmatprep.subr.mxu0 0.0
  %430 = vmatpush1.msra.mxu0 0.0
  %431 = vmatprep.mubr.f32.mxu0 0.0
  %432 = vmatmul.mubr.f32.gmra.mrb[0].mxu0 %v62
  %v433 = vpop.f32.mrb[0].mxu0
  %v434 = vadd.f32 0.0, %v433
  %v435 = vpop.f32.mrb[0].mxu0
  %436 = vmatprep.mubr.f32.mxu0 0.0
  %437 = vmatmul.mubr.f32.gmra.mrb[0].mxu0 %v65
  %v438 = vpop.f32.mrb[0].mxu0
  %v439 = vadd.f32 0.0, %v438
  %v440 = vpop.f32.mrb[0].mxu0
  %441 = vdwg.mxu0
  %v442 = vld [vmem:[%s3] sm:$0xff]
  %v443 = vld [vmem:[%s3 + $0x8] sm:$0xff]
  %v444 = vld [vmem:[%s3 + $0x10] sm:$0xff]
  %v445 = vld [vmem:[%s3 + $0x18] sm:$0xff]
  %v446 = vld [vmem:[%s3 + $0x20] sm:$0xff]
  %v447 = vld [vmem:[%s3 + $0x28] sm:$0xff]
  %v448 = vld [vmem:[%s3 + $0x30] sm:$0xff]
  %v449 = vld [vmem:[%s3 + $0x38] sm:$0xff]
  %v450 = vld [vmem:[%s3 + $0x40] sm:$0xff]
  %v451 = vld [vmem:[%s3 + $0x48] sm:$0xff]
  %v452 = vld [vmem:[%s3 + $0x50] sm:$0xff]
  %v453 = vld [vmem:[%s3 + $0x58] sm:$0xff]
  %v454 = vld [vmem:[%s3 + $0x60] sm:$0xff]
  %v455 = vld [vmem:[%s3 + $0x68] sm:$0xff]
  %v456 = vld [vmem:[%s3 + $0x70] sm:$0xff]
  %vm457 = vcmask 195584
  %v459 = vsel %vm457, %v31, 0
  %v462 = vsel %vm457, %v32, 0
  %464 = vmatprep.subr.mxu0 0.0
  %465 = vmatpush1.msra.mxu0 %v442
  %466 = vmatprep.subr.mxu0 0.0
  %467 = vmatpush1.msra.mxu0 %v443
  %468 = vmatprep.subr.mxu0 0.0
  %469 = vmatpush1.msra.mxu0 %v444
  %470 = vmatprep.subr.mxu0 0.0
  %471 = vmatpush1.msra.mxu0 0.0
  %472 = vmatprep.subr.mxu0 0.0
  %473 = vmatpush1.msra.mxu0 0.0
  %474 = vmatprep.subr.mxu0 0.0
  %475 = vmatpush1.msra.mxu0 0.0
  %476 = vmatprep.subr.mxu0 0.0
  %477 = vmatpush1.msra.mxu0 0.0
  %478 = vmatprep.subr.mxu0 0.0
  %479 = vmatpush1.msra.mxu0 0.0
  %480 = vmatprep.subr.mxu0 0.0
  %481 = vmatpush1.msra.mxu0 0.0
  %482 = vmatprep.subr.mxu0 0.0
  %483 = vmatpush1.msra.mxu0 0.0
  %484 = vmatprep.subr.mxu0 0.0
  %485 = vmatpush1.msra.mxu0 0.0
  %486 = vmatprep.subr.mxu0 0.0
  %487 = vmatpush1.msra.mxu0 0.0
  %488 = vmatprep.subr.mxu0 0.0
  %489 = vmatpush1.msra.mxu0 0.0
  %490 = vmatprep.subr.mxu0 0.0
  %491 = vmatpush1.msra.mxu0 0.0
  %492 = vmatprep.subr.mxu0 0.0
  %493 = vmatpush1.msra.mxu0 0.0
  %494 = vmatprep.subr.mxu0 0.0
  %495 = vmatpush1.msra.mxu0 0.0
  %496 = vmatprep.subr.mxu0 0.0
  %497 = vmatpush1.msra.mxu0 0.0
  %498 = vmatprep.subr.mxu0 0.0
  %499 = vmatpush1.msra.mxu0 0.0
  %500 = vmatprep.subr.mxu0 0.0
  %501 = vmatpush1.msra.mxu0 0.0
  %502 = vmatprep.subr.mxu0 0.0
  %503 = vmatpush1.msra.mxu0 0.0
  %504 = vmatprep.subr.mxu0 0.0
  %505 = vmatpush1.msra.mxu0 0.0
  %506 = vmatprep.subr.mxu0 0.0
  %507 = vmatpush1.msra.mxu0 0.0
  %508 = vmatprep.subr.mxu0 0.0
  %509 = vmatpush1.msra.mxu0 0.0
  %510 = vmatprep.subr.mxu0 0.0
  %511 = vmatpush1.msra.mxu0 0.0
  %512 = vmatprep.subr.mxu0 0.0
  %513 = vmatpush1.msra.mxu0 0.0
  %514 = vmatprep.subr.mxu0 0.0
  %515 = vmatpush1.msra.mxu0 0.0
  %516 = vmatprep.subr.mxu0 0.0
  %517 = vmatpush1.msra.mxu0 0.0
  %518 = vmatprep.subr.mxu0 0.0
  %519 = vmatpush1.msra.mxu0 0.0
  %520 = vmatprep.subr.mxu0 0.0
  %521 = vmatpush1.msra.mxu0 0.0
  %522 = vmatprep.subr.mxu0 0.0
  %523 = vmatpush1.msra.mxu0 0.0
  %524 = vmatprep.subr.mxu0 0.0
  %525 = vmatpush1.msra.mxu0 0.0
  %526 = vmatprep.subr.mxu0 0.0
  %527 = vmatpush1.msra.mxu0 0.0
  %528 = vmatprep.mubr.f32.mxu0 0.0
  %529 = vmatmul.mubr.f32.gmra.mrb[0].mxu0 %v459
  %v530 = vpop.f32.mrb[0].mxu0
  %v531 = vadd.f32 0.0, %v530
  %v532 = vpop.f32.mrb[0].mxu0
  %533 = vmatprep.mubr.f32.mxu0 0.0
  %534 = vmatmul.mubr.f32.gmra.mrb[0].mxu0 %v462
  %v535 = vpop.f32.mrb[0].mxu0
  %v536 = vadd.f32 0.0, %v535
  %v537 = vpop.f32.mrb[0].mxu0
  %538 = vdwg.mxu0
  %539 = vmatprep.subr.mxu0 0.0
  %540 = vmatpush1.msra.mxu0 %v445
  %541 = vmatprep.subr.mxu0 0.0
  %542 = vmatpush1.msra.mxu0 %v446
  %543 = vmatprep.subr.mxu0 0.0
  %544 = vmatpush1.msra.mxu0 %v447
  %545 = vmatprep.subr.mxu0 0.0
  %546 = vmatpush1.msra.mxu0 0.0
  %547 = vmatprep.subr.mxu0 0.0
  %548 = vmatpush1.msra.mxu0 0.0
  %549 = vmatprep.subr.mxu0 0.0
  %550 = vmatpush1.msra.mxu0 0.0
  %551 = vmatprep.subr.mxu0 0.0
  %552 = vmatpush1.msra.mxu0 0.0
  %553 = vmatprep.subr.mxu0 0.0
  %554 = vmatpush1.msra.mxu0 0.0
  %555 = vmatprep.subr.mxu0 0.0
  %556 = vmatpush1.msra.mxu0 0.0
  %557 = vmatprep.subr.mxu0 0.0
  %558 = vmatpush1.msra.mxu0 0.0
  %559 = vmatprep.subr.mxu0 0.0
  %560 = vmatpush1.msra.mxu0 0.0
  %561 = vmatprep.subr.mxu0 0.0
  %562 = vmatpush1.msra.mxu0 0.0
  %563 = vmatprep.subr.mxu0 0.0
  %564 = vmatpush1.msra.mxu0 0.0
  %565 = vmatprep.subr.mxu0 0.0
  %566 = vmatpush1.msra.mxu0 0.0
  %567 = vmatprep.subr.mxu0 0.0
  %568 = vmatpush1.msra.mxu0 0.0
  %569 = vmatprep.subr.mxu0 0.0
  %570 = vmatpush1.msra.mxu0 0.0
  %571 = vmatprep.subr.mxu0 0.0
  %572 = vmatpush1.msra.mxu0 0.0
  %573 = vmatprep.subr.mxu0 0.0
  %574 = vmatpush1.msra.mxu0 0.0
  %575 = vmatprep.subr.mxu0 0.0
  %576 = vmatpush1.msra.mxu0 0.0
  %577 = vmatprep.subr.mxu0 0.0
  %578 = vmatpush1.msra.mxu0 0.0
  %579 = vmatprep.subr.mxu0 0.0
  %580 = vmatpush1.msra.mxu0 0.0
  %581 = vmatprep.subr.mxu0 0.0
  %582 = vmatpush1.msra.mxu0 0.0
  %583 = vmatprep.subr.mxu0 0.0
  %584 = vmatpush1.msra.mxu0 0.0
  %585 = vmatprep.subr.mxu0 0.0
  %586 = vmatpush1.msra.mxu0 0.0
  %587 = vmatprep.subr.mxu0 0.0
  %588 = vmatpush1.msra.mxu0 0.0
  %589 = vmatprep.subr.mxu0 0.0
  %590 = vmatpush1.msra.mxu0 0.0
  %591 = vmatprep.subr.mxu0 0.0
  %592 = vmatpush1.msra.mxu0 0.0
  %593 = vmatprep.subr.mxu0 0.0
  %594 = vmatpush1.msra.mxu0 0.0
  %595 = vmatprep.subr.mxu0 0.0
  %596 = vmatpush1.msra.mxu0 0.0
  %597 = vmatprep.subr.mxu0 0.0
  %598 = vmatpush1.msra.mxu0 0.0
  %599 = vmatprep.subr.mxu0 0.0
  %600 = vmatpush1.msra.mxu0 0.0
  %601 = vmatprep.subr.mxu0 0.0
  %602 = vmatpush1.msra.mxu0 0.0
  %603 = vmatprep.mubr.f32.mxu0 0.0
  %604 = vmatmul.mubr.f32.gmra.mrb[0].mxu0 %v459
  %v605 = vpop.f32.mrb[0].mxu0
  %v606 = vadd.f32 0.0, %v605
  %v607 = vpop.f32.mrb[0].mxu0
  %608 = vmatprep.mubr.f32.mxu0 0.0
  %609 = vmatmul.mubr.f32.gmra.mrb[0].mxu0 %v462
  %v610 = vpop.f32.mrb[0].mxu0
  %v611 = vadd.f32 0.0, %v610
  %v612 = vpop.f32.mrb[0].mxu0
  %613 = vdwg.mxu0
  %614 = vmatprep.subr.mxu0 0.0
  %615 = vmatpush1.msra.mxu0 %v448
  %616 = vmatprep.subr.mxu0 0.0
  %617 = vmatpush1.msra.mxu0 %v449
  %618 = vmatprep.subr.mxu0 0.0
  %619 = vmatpush1.msra.mxu0 %v450
  %620 = vmatprep.subr.mxu0 0.0
  %621 = vmatpush1.msra.mxu0 0.0
  %622 = vmatprep.subr.mxu0 0.0
  %623 = vmatpush1.msra.mxu0 0.0
  %624 = vmatprep.subr.mxu0 0.0
  %625 = vmatpush1.msra.mxu0 0.0
  %626 = vmatprep.subr.mxu0 0.0
  %627 = vmatpush1.msra.mxu0 0.0
  %628 = vmatprep.subr.mxu0 0.0
  %629 = vmatpush1.msra.mxu0 0.0
  %630 = vmatprep.subr.mxu0 0.0
  %631 = vmatpush1.msra.mxu0 0.0
  %632 = vmatprep.subr.mxu0 0.0
  %633 = vmatpush1.msra.mxu0 0.0
  %634 = vmatprep.subr.mxu0 0.0
  %635 = vmatpush1.msra.mxu0 0.0
  %636 = vmatprep.subr.mxu0 0.0
  %637 = vmatpush1.msra.mxu0 0.0
  %638 = vmatprep.subr.mxu0 0.0
  %639 = vmatpush1.msra.mxu0 0.0
  %640 = vmatprep.subr.mxu0 0.0
  %641 = vmatpush1.msra.mxu0 0.0
  %642 = vmatprep.subr.mxu0 0.0
  %643 = vmatpush1.msra.mxu0 0.0
  %644 = vmatprep.subr.mxu0 0.0
  %645 = vmatpush1.msra.mxu0 0.0
  %646 = vmatprep.subr.mxu0 0.0
  %647 = vmatpush1.msra.mxu0 0.0
  %648 = vmatprep.subr.mxu0 0.0
  %649 = vmatpush1.msra.mxu0 0.0
  %650 = vmatprep.subr.mxu0 0.0
  %651 = vmatpush1.msra.mxu0 0.0
  %652 = vmatprep.subr.mxu0 0.0
  %653 = vmatpush1.msra.mxu0 0.0
  %654 = vmatprep.subr.mxu0 0.0
  %655 = vmatpush1.msra.mxu0 0.0
  %656 = vmatprep.subr.mxu0 0.0
  %657 = vmatpush1.msra.mxu0 0.0
  %658 = vmatprep.subr.mxu0 0.0
  %659 = vmatpush1.msra.mxu0 0.0
  %660 = vmatprep.subr.mxu0 0.0
  %661 = vmatpush1.msra.mxu0 0.0
  %662 = vmatprep.subr.mxu0 0.0
  %663 = vmatpush1.msra.mxu0 0.0
  %664 = vmatprep.subr.mxu0 0.0
  %665 = vmatpush1.msra.mxu0 0.0
  %666 = vmatprep.subr.mxu0 0.0
  %667 = vmatpush1.msra.mxu0 0.0
  %668 = vmatprep.subr.mxu0 0.0
  %669 = vmatpush1.msra.mxu0 0.0
  %670 = vmatprep.subr.mxu0 0.0
  %671 = vmatpush1.msra.mxu0 0.0
  %672 = vmatprep.subr.mxu0 0.0
  %673 = vmatpush1.msra.mxu0 0.0
  %674 = vmatprep.subr.mxu0 0.0
  %675 = vmatpush1.msra.mxu0 0.0
  %676 = vmatprep.subr.mxu0 0.0
  %677 = vmatpush1.msra.mxu0 0.0
  %678 = vmatprep.mubr.f32.mxu0 0.0
  %679 = vmatmul.mubr.f32.gmra.mrb[0].mxu0 %v459
  %v680 = vpop.f32.mrb[0].mxu0
  %v681 = vadd.f32 0.0, %v680
  %v682 = vpop.f32.mrb[0].mxu0
  %683 = vmatprep.mubr.f32.mxu0 0.0
  %684 = vmatmul.mubr.f32.gmra.mrb[0].mxu0 %v462
  %v685 = vpop.f32.mrb[0].mxu0
  %v686 = vadd.f32 0.0, %v685
  %v687 = vpop.f32.mrb[0].mxu0
  %688 = vdwg.mxu0
  %689 = vmatprep.subr.mxu0 0.0
  %690 = vmatpush1.msra.mxu0 %v451
  %691 = vmatprep.subr.mxu0 0.0
  %692 = vmatpush1.msra.mxu0 %v452
  %693 = vmatprep.subr.mxu0 0.0
  %694 = vmatpush1.msra.mxu0 %v453
  %695 = vmatprep.subr.mxu0 0.0
  %696 = vmatpush1.msra.mxu0 0.0
  %697 = vmatprep.subr.mxu0 0.0
  %698 = vmatpush1.msra.mxu0 0.0
  %699 = vmatprep.subr.mxu0 0.0
  %700 = vmatpush1.msra.mxu0 0.0
  %701 = vmatprep.subr.mxu0 0.0
  %702 = vmatpush1.msra.mxu0 0.0
  %703 = vmatprep.subr.mxu0 0.0
  %704 = vmatpush1.msra.mxu0 0.0
  %705 = vmatprep.subr.mxu0 0.0
  %706 = vmatpush1.msra.mxu0 0.0
  %707 = vmatprep.subr.mxu0 0.0
  %708 = vmatpush1.msra.mxu0 0.0
  %709 = vmatprep.subr.mxu0 0.0
  %710 = vmatpush1.msra.mxu0 0.0
  %711 = vmatprep.subr.mxu0 0.0
  %712 = vmatpush1.msra.mxu0 0.0
  %713 = vmatprep.subr.mxu0 0.0
  %714 = vmatpush1.msra.mxu0 0.0
  %715 = vmatprep.subr.mxu0 0.0
  %716 = vmatpush1.msra.mxu0 0.0
  %717 = vmatprep.subr.mxu0 0.0
  %718 = vmatpush1.msra.mxu0 0.0
  %719 = vmatprep.subr.mxu0 0.0
  %720 = vmatpush1.msra.mxu0 0.0
  %721 = vmatprep.subr.mxu0 0.0
  %722 = vmatpush1.msra.mxu0 0.0
  %723 = vmatprep.subr.mxu0 0.0
  %724 = vmatpush1.msra.mxu0 0.0
  %725 = vmatprep.subr.mxu0 0.0
  %726 = vmatpush1.msra.mxu0 0.0
  %727 = vmatprep.subr.mxu0 0.0
  %728 = vmatpush1.msra.mxu0 0.0
  %729 = vmatprep.subr.mxu0 0.0
  %730 = vmatpush1.msra.mxu0 0.0
  %731 = vmatprep.subr.mxu0 0.0
  %732 = vmatpush1.msra.mxu0 0.0
  %733 = vmatprep.subr.mxu0 0.0
  %734 = vmatpush1.msra.mxu0 0.0
  %735 = vmatprep.subr.mxu0 0.0
  %736 = vmatpush1.msra.mxu0 0.0
  %737 = vmatprep.subr.mxu0 0.0
  %738 = vmatpush1.msra.mxu0 0.0
  %739 = vmatprep.subr.mxu0 0.0
  %740 = vmatpush1.msra.mxu0 0.0
  %741 = vmatprep.subr.mxu0 0.0
  %742 = vmatpush1.msra.mxu0 0.0
  %743 = vmatprep.subr.mxu0 0.0
  %744 = vmatpush1.msra.mxu0 0.0
  %745 = vmatprep.subr.mxu0 0.0
  %746 = vmatpush1.msra.mxu0 0.0
  %747 = vmatprep.subr.mxu0 0.0
  %748 = vmatpush1.msra.mxu0 0.0
  %749 = vmatprep.subr.mxu0 0.0
  %750 = vmatpush1.msra.mxu0 0.0
  %751 = vmatprep.subr.mxu0 0.0
  %752 = vmatpush1.msra.mxu0 0.0
  %753 = vmatprep.mubr.f32.mxu0 0.0
  %754 = vmatmul.mubr.f32.gmra.mrb[0].mxu0 %v459
  %v755 = vpop.f32.mrb[0].mxu0
  %v756 = vadd.f32 0.0, %v755
  %v757 = vpop.f32.mrb[0].mxu0
  %758 = vmatprep.mubr.f32.mxu0 0.0
  %759 = vmatmul.mubr.f32.gmra.mrb[0].mxu0 %v462
  %v760 = vpop.f32.mrb[0].mxu0
  %v761 = vadd.f32 0.0, %v760
  %v762 = vpop.f32.mrb[0].mxu0
  %763 = vdwg.mxu0
  %764 = vmatprep.subr.mxu0 0.0
  %765 = vmatpush1.msra.mxu0 %v454
  %766 = vmatprep.subr.mxu0 0.0
  %767 = vmatpush1.msra.mxu0 %v455
  %768 = vmatprep.subr.mxu0 0.0
  %769 = vmatpush1.msra.mxu0 %v456
  %770 = vmatprep.subr.mxu0 0.0
  %771 = vmatpush1.msra.mxu0 0.0
  %772 = vmatprep.subr.mxu0 0.0
  %773 = vmatpush1.msra.mxu0 0.0
  %774 = vmatprep.subr.mxu0 0.0
  %775 = vmatpush1.msra.mxu0 0.0
  %776 = vmatprep.subr.mxu0 0.0
  %777 = vmatpush1.msra.mxu0 0.0
  %778 = vmatprep.subr.mxu0 0.0
  %779 = vmatpush1.msra.mxu0 0.0
  %780 = vmatprep.subr.mxu0 0.0
  %781 = vmatpush1.msra.mxu0 0.0
  %782 = vmatprep.subr.mxu0 0.0
  %783 = vmatpush1.msra.mxu0 0.0
  %784 = vmatprep.subr.mxu0 0.0
  %785 = vmatpush1.msra.mxu0 0.0
  %786 = vmatprep.subr.mxu0 0.0
  %787 = vmatpush1.msra.mxu0 0.0
  %788 = vmatprep.subr.mxu0 0.0
  %789 = vmatpush1.msra.mxu0 0.0
  %790 = vmatprep.subr.mxu0 0.0
  %791 = vmatpush1.msra.mxu0 0.0
  %792 = vmatprep.subr.mxu0 0.0
  %793 = vmatpush1.msra.mxu0 0.0
  %794 = vmatprep.subr.mxu0 0.0
  %795 = vmatpush1.msra.mxu0 0.0
  %796 = vmatprep.subr.mxu0 0.0
  %797 = vmatpush1.msra.mxu0 0.0
  %798 = vmatprep.subr.mxu0 0.0
  %799 = vmatpush1.msra.mxu0 0.0
  %800 = vmatprep.subr.mxu0 0.0
  %801 = vmatpush1.msra.mxu0 0.0
  %802 = vmatprep.subr.mxu0 0.0
  %803 = vmatpush1.msra.mxu0 0.0
  %804 = vmatprep.subr.mxu0 0.0
  %805 = vmatpush1.msra.mxu0 0.0
  %806 = vmatprep.subr.mxu0 0.0
  %807 = vmatpush1.msra.mxu0 0.0
  %808 = vmatprep.subr.mxu0 0.0
  %809 = vmatpush1.msra.mxu0 0.0
  %810 = vmatprep.subr.mxu0 0.0
  %811 = vmatpush1.msra.mxu0 0.0
  %812 = vmatprep.subr.mxu0 0.0
  %813 = vmatpush1.msra.mxu0 0.0
  %814 = vmatprep.subr.mxu0 0.0
  %815 = vmatpush1.msra.mxu0 0.0
  %816 = vmatprep.subr.mxu0 0.0
  %817 = vmatpush1.msra.mxu0 0.0
  %818 = vmatprep.subr.mxu0 0.0
  %819 = vmatpush1.msra.mxu0 0.0
  %820 = vmatprep.subr.mxu0 0.0
  %821 = vmatpush1.msra.mxu0 0.0
  %822 = vmatprep.subr.mxu0 0.0
  %823 = vmatpush1.msra.mxu0 0.0
  %824 = vmatprep.subr.mxu0 0.0
  %825 = vmatpush1.msra.mxu0 0.0
  %826 = vmatprep.subr.mxu0 0.0
  %827 = vmatpush1.msra.mxu0 0.0
  %828 = vmatprep.mubr.f32.mxu0 0.0
  %829 = vmatmul.mubr.f32.gmra.mrb[0].mxu0 %v459
  %v830 = vpop.f32.mrb[0].mxu0
  %v831 = vadd.f32 0.0, %v830
  %v832 = vpop.f32.mrb[0].mxu0
  %833 = vmatprep.mubr.f32.mxu0 0.0
  %834 = vmatmul.mubr.f32.gmra.mrb[0].mxu0 %v462
  %v835 = vpop.f32.mrb[0].mxu0
  %v836 = vadd.f32 0.0, %v835
  %v837 = vpop.f32.mrb[0].mxu0
  %838 = vdwg.mxu0
  %v839 = vld [vmem:[%s4] sm:$0xff]
  %v840 = vld [vmem:[%s4 + $0x8] sm:$0xff]
  %v841 = vld [vmem:[%s4 + $0x10] sm:$0xff]
  %v842 = vld [vmem:[%s4 + $0x18] sm:$0xff]
  %v843 = vld [vmem:[%s4 + $0x20] sm:$0xff]
  %v844 = vld [vmem:[%s6] sm:$0x1]
  %847 = vrot.lane.b32.xlu0 %v531, 120
  %v848 = vpop.permute.xlu0 %847
  %849 = vrot.lane.b32.xlu0 %v536, 120
  %v850 = vpop.permute.xlu0 %849
  %vm851 = vcmask 64512
  %v853 = vsel %vm851, %v134, 0
  %v856 = vsel %vm851, %v139, 0
  %v858 = vsel %vm851, %v848, 0
  %v860 = vsel %vm851, %v850, 0
  %862 = vmatprep.subr.mxu0 0.0
  %863 = vmatpush1.xpose.msra.mxu0 %v858
  %864 = vmatprep.subr.mxu0 0.0
  %865 = vmatpush1.xpose.msra.mxu0 %v860
  %866 = vmatprep.subr.mxu0 0.0
  %867 = vmatpush1.xpose.msra.mxu0 0.0
  %868 = vmatprep.subr.mxu0 0.0
  %869 = vmatpush1.xpose.msra.mxu0 0.0
  %870 = vmatprep.subr.mxu0 0.0
  %871 = vmatpush1.xpose.msra.mxu0 0.0
  %872 = vmatprep.subr.mxu0 0.0
  %873 = vmatpush1.xpose.msra.mxu0 0.0
  %874 = vmatprep.subr.mxu0 0.0
  %875 = vmatpush1.xpose.msra.mxu0 0.0
  %876 = vmatprep.subr.mxu0 0.0
  %877 = vmatpush1.xpose.msra.mxu0 0.0
  %878 = vmatprep.subr.mxu0 0.0
  %879 = vmatpush1.xpose.msra.mxu0 0.0
  %880 = vmatprep.subr.mxu0 0.0
  %881 = vmatpush1.xpose.msra.mxu0 0.0
  %882 = vmatprep.subr.mxu0 0.0
  %883 = vmatpush1.xpose.msra.mxu0 0.0
  %884 = vmatprep.subr.mxu0 0.0
  %885 = vmatpush1.xpose.msra.mxu0 0.0
  %886 = vmatprep.subr.mxu0 0.0
  %887 = vmatpush1.xpose.msra.mxu0 0.0
  %888 = vmatprep.subr.mxu0 0.0
  %889 = vmatpush1.xpose.msra.mxu0 0.0
  %890 = vmatprep.subr.mxu0 0.0
  %891 = vmatpush1.xpose.msra.mxu0 0.0
  %892 = vmatprep.subr.mxu0 0.0
  %893 = vmatpush1.xpose.msra.mxu0 0.0
  %894 = vmatprep.subr.mxu0 0.0
  %895 = vmatpush1.xpose.msra.mxu0 0.0
  %896 = vmatprep.subr.mxu0 0.0
  %897 = vmatpush1.xpose.msra.mxu0 0.0
  %898 = vmatprep.subr.mxu0 0.0
  %899 = vmatpush1.xpose.msra.mxu0 0.0
  %900 = vmatprep.subr.mxu0 0.0
  %901 = vmatpush1.xpose.msra.mxu0 0.0
  %902 = vmatprep.subr.mxu0 0.0
  %903 = vmatpush1.xpose.msra.mxu0 0.0
  %904 = vmatprep.subr.mxu0 0.0
  %905 = vmatpush1.xpose.msra.mxu0 0.0
  %906 = vmatprep.subr.mxu0 0.0
  %907 = vmatpush1.xpose.msra.mxu0 0.0
  %908 = vmatprep.subr.mxu0 0.0
  %909 = vmatpush1.xpose.msra.mxu0 0.0
  %910 = vmatprep.subr.mxu0 0.0
  %911 = vmatpush1.xpose.msra.mxu0 0.0
  %912 = vmatprep.subr.mxu0 0.0
  %913 = vmatpush1.xpose.msra.mxu0 0.0
  %914 = vmatprep.subr.mxu0 0.0
  %915 = vmatpush1.xpose.msra.mxu0 0.0
  %916 = vmatprep.subr.mxu0 0.0
  %917 = vmatpush1.xpose.msra.mxu0 0.0
  %918 = vmatprep.subr.mxu0 0.0
  %919 = vmatpush1.xpose.msra.mxu0 0.0
  %920 = vmatprep.subr.mxu0 0.0
  %921 = vmatpush1.xpose.msra.mxu0 0.0
  %922 = vmatprep.subr.mxu0 0.0
  %923 = vmatpush1.xpose.msra.mxu0 0.0
  %924 = vmatprep.subr.mxu0 0.0
  %925 = vmatpush1.xpose.msra.mxu0 0.0
  %926 = vmatprep.mubr.f32.mxu0 0.0
  %927 = vmatmul.mubr.f32.gmra.mrb[0].mxu0 %v853
  %v928 = vpop.f32.mrb[0].mxu0
  %v929 = vadd.f32 %v33, %v928
  %v930 = vpop.f32.mrb[0].mxu0
  %931 = vmatprep.mubr.f32.mxu0 0.0
  %932 = vmatmul.mubr.f32.gmra.mrb[0].mxu0 %v856
  %v933 = vpop.f32.mrb[0].mxu0
  %v934 = vadd.f32 %v34, %v933
  %v935 = vpop.f32.mrb[0].mxu0
  %936 = vdwg.mxu0
  %939 = vrot.lane.b32.xlu0 %v606, 120
  %v940 = vpop.permute.xlu0 %939
  %941 = vrot.lane.b32.xlu0 %v611, 120
  %v942 = vpop.permute.xlu0 %941
  %v944 = vsel %vm851, %v209, 0
  %v947 = vsel %vm851, %v214, 0
  %v949 = vsel %vm851, %v940, 0
  %v951 = vsel %vm851, %v942, 0
  %953 = vmatprep.subr.mxu0 0.0
  %954 = vmatpush1.xpose.msra.mxu0 %v949
  %955 = vmatprep.subr.mxu0 0.0
  %956 = vmatpush1.xpose.msra.mxu0 %v951
  %957 = vmatprep.subr.mxu0 0.0
  %958 = vmatpush1.xpose.msra.mxu0 0.0
  %959 = vmatprep.subr.mxu0 0.0
  %960 = vmatpush1.xpose.msra.mxu0 0.0
  %961 = vmatprep.subr.mxu0 0.0
  %962 = vmatpush1.xpose.msra.mxu0 0.0
  %963 = vmatprep.subr.mxu0 0.0
  %964 = vmatpush1.xpose.msra.mxu0 0.0
  %965 = vmatprep.subr.mxu0 0.0
  %966 = vmatpush1.xpose.msra.mxu0 0.0
  %967 = vmatprep.subr.mxu0 0.0
  %968 = vmatpush1.xpose.msra.mxu0 0.0
  %969 = vmatprep.subr.mxu0 0.0
  %970 = vmatpush1.xpose.msra.mxu0 0.0
  %971 = vmatprep.subr.mxu0 0.0
  %972 = vmatpush1.xpose.msra.mxu0 0.0
  %973 = vmatprep.subr.mxu0 0.0
  %974 = vmatpush1.xpose.msra.mxu0 0.0
  %975 = vmatprep.subr.mxu0 0.0
  %976 = vmatpush1.xpose.msra.mxu0 0.0
  %977 = vmatprep.subr.mxu0 0.0
  %978 = vmatpush1.xpose.msra.mxu0 0.0
  %979 = vmatprep.subr.mxu0 0.0
  %980 = vmatpush1.xpose.msra.mxu0 0.0
  %981 = vmatprep.subr.mxu0 0.0
  %982 = vmatpush1.xpose.msra.mxu0 0.0
  %983 = vmatprep.subr.mxu0 0.0
  %984 = vmatpush1.xpose.msra.mxu0 0.0
  %985 = vmatprep.subr.mxu0 0.0
  %986 = vmatpush1.xpose.msra.mxu0 0.0
  %987 = vmatprep.subr.mxu0 0.0
  %988 = vmatpush1.xpose.msra.mxu0 0.0
  %989 = vmatprep.subr.mxu0 0.0
  %990 = vmatpush1.xpose.msra.mxu0 0.0
  %991 = vmatprep.subr.mxu0 0.0
  %992 = vmatpush1.xpose.msra.mxu0 0.0
  %993 = vmatprep.subr.mxu0 0.0
  %994 = vmatpush1.xpose.msra.mxu0 0.0
  %995 = vmatprep.subr.mxu0 0.0
  %996 = vmatpush1.xpose.msra.mxu0 0.0
  %997 = vmatprep.subr.mxu0 0.0
  %998 = vmatpush1.xpose.msra.mxu0 0.0
  %999 = vmatprep.subr.mxu0 0.0
  %1000 = vmatpush1.xpose.msra.mxu0 0.0
  %1001 = vmatprep.subr.mxu0 0.0
  %1002 = vmatpush1.xpose.msra.mxu0 0.0
  %1003 = vmatprep.subr.mxu0 0.0
  %1004 = vmatpush1.xpose.msra.mxu0 0.0
  %1005 = vmatprep.subr.mxu0 0.0
  %1006 = vmatpush1.xpose.msra.mxu0 0.0
  %1007 = vmatprep.subr.mxu0 0.0
  %1008 = vmatpush1.xpose.msra.mxu0 0.0
  %1009 = vmatprep.subr.mxu0 0.0
  %1010 = vmatpush1.xpose.msra.mxu0 0.0
  %1011 = vmatprep.subr.mxu0 0.0
  %1012 = vmatpush1.xpose.msra.mxu0 0.0
  %1013 = vmatprep.subr.mxu0 0.0
  %1014 = vmatpush1.xpose.msra.mxu0 0.0
  %1015 = vmatprep.subr.mxu0 0.0
  %1016 = vmatpush1.xpose.msra.mxu0 0.0
  %1017 = vmatprep.mubr.f32.mxu0 0.0
  %1018 = vmatmul.mubr.f32.gmra.mrb[0].mxu0 %v944
  %v1019 = vpop.f32.mrb[0].mxu0
  %v1020 = vadd.f32 %v33, %v1019
  %v1021 = vpop.f32.mrb[0].mxu0
  %1022 = vmatprep.mubr.f32.mxu0 0.0
  %1023 = vmatmul.mubr.f32.gmra.mrb[0].mxu0 %v947
  %v1024 = vpop.f32.mrb[0].mxu0
  %v1025 = vadd.f32 %v34, %v1024
  %v1026 = vpop.f32.mrb[0].mxu0
  %1027 = vdwg.mxu0
  %1030 = vrot.lane.b32.xlu0 %v681, 120
  %v1031 = vpop.permute.xlu0 %1030
  %1032 = vrot.lane.b32.xlu0 %v686, 120
  %v1033 = vpop.permute.xlu0 %1032
  %v1035 = vsel %vm851, %v284, 0
  %v1038 = vsel %vm851, %v289, 0
  %v1040 = vsel %vm851, %v1031, 0
  %v1042 = vsel %vm851, %v1033, 0
  %1044 = vmatprep.subr.mxu0 0.0
  %1045 = vmatpush1.xpose.msra.mxu0 %v1040
  %1046 = vmatprep.subr.mxu0 0.0
  %1047 = vmatpush1.xpose.msra.mxu0 %v1042
  %1048 = vmatprep.subr.mxu0 0.0
  %1049 = vmatpush1.xpose.msra.mxu0 0.0
  %1050 = vmatprep.subr.mxu0 0.0
  %1051 = vmatpush1.xpose.msra.mxu0 0.0
  %1052 = vmatprep.subr.mxu0 0.0
  %1053 = vmatpush1.xpose.msra.mxu0 0.0
  %1054 = vmatprep.subr.mxu0 0.0
  %1055 = vmatpush1.xpose.msra.mxu0 0.0
  %1056 = vmatprep.subr.mxu0 0.0
  %1057 = vmatpush1.xpose.msra.mxu0 0.0
  %1058 = vmatprep.subr.mxu0 0.0
  %1059 = vmatpush1.xpose.msra.mxu0 0.0
  %1060 = vmatprep.subr.mxu0 0.0
  %1061 = vmatpush1.xpose.msra.mxu0 0.0
  %1062 = vmatprep.subr.mxu0 0.0
  %1063 = vmatpush1.xpose.msra.mxu0 0.0
  %1064 = vmatprep.subr.mxu0 0.0
  %1065 = vmatpush1.xpose.msra.mxu0 0.0
  %1066 = vmatprep.subr.mxu0 0.0
  %1067 = vmatpush1.xpose.msra.mxu0 0.0
  %1068 = vmatprep.subr.mxu0 0.0
  %1069 = vmatpush1.xpose.msra.mxu0 0.0
  %1070 = vmatprep.subr.mxu0 0.0
  %1071 = vmatpush1.xpose.msra.mxu0 0.0
  %1072 = vmatprep.subr.mxu0 0.0
  %1073 = vmatpush1.xpose.msra.mxu0 0.0
  %1074 = vmatprep.subr.mxu0 0.0
  %1075 = vmatpush1.xpose.msra.mxu0 0.0
  %1076 = vmatprep.subr.mxu0 0.0
  %1077 = vmatpush1.xpose.msra.mxu0 0.0
  %1078 = vmatprep.subr.mxu0 0.0
  %1079 = vmatpush1.xpose.msra.mxu0 0.0
  %1080 = vmatprep.subr.mxu0 0.0
  %1081 = vmatpush1.xpose.msra.mxu0 0.0
  %1082 = vmatprep.subr.mxu0 0.0
  %1083 = vmatpush1.xpose.msra.mxu0 0.0
  %1084 = vmatprep.subr.mxu0 0.0
  %1085 = vmatpush1.xpose.msra.mxu0 0.0
  %1086 = vmatprep.subr.mxu0 0.0
  %1087 = vmatpush1.xpose.msra.mxu0 0.0
  %1088 = vmatprep.subr.mxu0 0.0
  %1089 = vmatpush1.xpose.msra.mxu0 0.0
  %1090 = vmatprep.subr.mxu0 0.0
  %1091 = vmatpush1.xpose.msra.mxu0 0.0
  %1092 = vmatprep.subr.mxu0 0.0
  %1093 = vmatpush1.xpose.msra.mxu0 0.0
  %1094 = vmatprep.subr.mxu0 0.0
  %1095 = vmatpush1.xpose.msra.mxu0 0.0
  %1096 = vmatprep.subr.mxu0 0.0
  %1097 = vmatpush1.xpose.msra.mxu0 0.0
  %1098 = vmatprep.subr.mxu0 0.0
  %1099 = vmatpush1.xpose.msra.mxu0 0.0
  %1100 = vmatprep.subr.mxu0 0.0
  %1101 = vmatpush1.xpose.msra.mxu0 0.0
  %1102 = vmatprep.subr.mxu0 0.0
  %1103 = vmatpush1.xpose.msra.mxu0 0.0
  %1104 = vmatprep.subr.mxu0 0.0
  %1105 = vmatpush1.xpose.msra.mxu0 0.0
  %1106 = vmatprep.subr.mxu0 0.0
  %1107 = vmatpush1.xpose.msra.mxu0 0.0
  %1108 = vmatprep.mubr.f32.mxu0 0.0
  %1109 = vmatmul.mubr.f32.gmra.mrb[0].mxu0 %v1035
  %v1110 = vpop.f32.mrb[0].mxu0
  %v1111 = vadd.f32 %v33, %v1110
  %v1112 = vpop.f32.mrb[0].mxu0
  %1113 = vmatprep.mubr.f32.mxu0 0.0
  %1114 = vmatmul.mubr.f32.gmra.mrb[0].mxu0 %v1038
  %v1115 = vpop.f32.mrb[0].mxu0
  %v1116 = vadd.f32 %v34, %v1115
  %v1117 = vpop.f32.mrb[0].mxu0
  %1118 = vdwg.mxu0
  %1121 = vrot.lane.b32.xlu0 %v756, 120
  %v1122 = vpop.permute.xlu0 %1121
  %1123 = vrot.lane.b32.xlu0 %v761, 120
  %v1124 = vpop.permute.xlu0 %1123
  %v1126 = vsel %vm851, %v359, 0
  %v1129 = vsel %vm851, %v364, 0
  %v1131 = vsel %vm851, %v1122, 0
  %v1133 = vsel %vm851, %v1124, 0
  %1135 = vmatprep.subr.mxu0 0.0
  %1136 = vmatpush1.xpose.msra.mxu0 %v1131
  %1137 = vmatprep.subr.mxu0 0.0
  %1138 = vmatpush1.xpose.msra.mxu0 %v1133
  %1139 = vmatprep.subr.mxu0 0.0
  %1140 = vmatpush1.xpose.msra.mxu0 0.0
  %1141 = vmatprep.subr.mxu0 0.0
  %1142 = vmatpush1.xpose.msra.mxu0 0.0
  %1143 = vmatprep.subr.mxu0 0.0
  %1144 = vmatpush1.xpose.msra.mxu0 0.0
  %1145 = vmatprep.subr.mxu0 0.0
  %1146 = vmatpush1.xpose.msra.mxu0 0.0
  %1147 = vmatprep.subr.mxu0 0.0
  %1148 = vmatpush1.xpose.msra.mxu0 0.0
  %1149 = vmatprep.subr.mxu0 0.0
  %1150 = vmatpush1.xpose.msra.mxu0 0.0
  %1151 = vmatprep.subr.mxu0 0.0
  %1152 = vmatpush1.xpose.msra.mxu0 0.0
  %1153 = vmatprep.subr.mxu0 0.0
  %1154 = vmatpush1.xpose.msra.mxu0 0.0
  %1155 = vmatprep.subr.mxu0 0.0
  %1156 = vmatpush1.xpose.msra.mxu0 0.0
  %1157 = vmatprep.subr.mxu0 0.0
  %1158 = vmatpush1.xpose.msra.mxu0 0.0
  %1159 = vmatprep.subr.mxu0 0.0
  %1160 = vmatpush1.xpose.msra.mxu0 0.0
  %1161 = vmatprep.subr.mxu0 0.0
  %1162 = vmatpush1.xpose.msra.mxu0 0.0
  %1163 = vmatprep.subr.mxu0 0.0
  %1164 = vmatpush1.xpose.msra.mxu0 0.0
  %1165 = vmatprep.subr.mxu0 0.0
  %1166 = vmatpush1.xpose.msra.mxu0 0.0
  %1167 = vmatprep.subr.mxu0 0.0
  %1168 = vmatpush1.xpose.msra.mxu0 0.0
  %1169 = vmatprep.subr.mxu0 0.0
  %1170 = vmatpush1.xpose.msra.mxu0 0.0
  %1171 = vmatprep.subr.mxu0 0.0
  %1172 = vmatpush1.xpose.msra.mxu0 0.0
  %1173 = vmatprep.subr.mxu0 0.0
  %1174 = vmatpush1.xpose.msra.mxu0 0.0
  %1175 = vmatprep.subr.mxu0 0.0
  %1176 = vmatpush1.xpose.msra.mxu0 0.0
  %1177 = vmatprep.subr.mxu0 0.0
  %1178 = vmatpush1.xpose.msra.mxu0 0.0
  %1179 = vmatprep.subr.mxu0 0.0
  %1180 = vmatpush1.xpose.msra.mxu0 0.0
  %1181 = vmatprep.subr.mxu0 0.0
  %1182 = vmatpush1.xpose.msra.mxu0 0.0
  %1183 = vmatprep.subr.mxu0 0.0
  %1184 = vmatpush1.xpose.msra.mxu0 0.0
  %1185 = vmatprep.subr.mxu0 0.0
  %1186 = vmatpush1.xpose.msra.mxu0 0.0
  %1187 = vmatprep.subr.mxu0 0.0
  %1188 = vmatpush1.xpose.msra.mxu0 0.0
  %1189 = vmatprep.subr.mxu0 0.0
  %1190 = vmatpush1.xpose.msra.mxu0 0.0
  %1191 = vmatprep.subr.mxu0 0.0
  %1192 = vmatpush1.xpose.msra.mxu0 0.0
  %1193 = vmatprep.subr.mxu0 0.0
  %1194 = vmatpush1.xpose.msra.mxu0 0.0
  %1195 = vmatprep.subr.mxu0 0.0
  %1196 = vmatpush1.xpose.msra.mxu0 0.0
  %1197 = vmatprep.subr.mxu0 0.0
  %1198 = vmatpush1.xpose.msra.mxu0 0.0
  %1199 = vmatprep.mubr.f32.mxu0 0.0
  %1200 = vmatmul.mubr.f32.gmra.mrb[0].mxu0 %v1126
  %v1201 = vpop.f32.mrb[0].mxu0
  %v1202 = vadd.f32 %v33, %v1201
  %v1203 = vpop.f32.mrb[0].mxu0
  %1204 = vmatprep.mubr.f32.mxu0 0.0
  %1205 = vmatmul.mubr.f32.gmra.mrb[0].mxu0 %v1129
  %v1206 = vpop.f32.mrb[0].mxu0
  %v1207 = vadd.f32 %v34, %v1206
  %v1208 = vpop.f32.mrb[0].mxu0
  %1209 = vdwg.mxu0
  %1212 = vrot.lane.b32.xlu0 %v831, 120
  %v1213 = vpop.permute.xlu0 %1212
  %1214 = vrot.lane.b32.xlu0 %v836, 120
  %v1215 = vpop.permute.xlu0 %1214
  %v1217 = vsel %vm851, %v434, 0
  %v1220 = vsel %vm851, %v439, 0
  %v1222 = vsel %vm851, %v1213, 0
  %v1224 = vsel %vm851, %v1215, 0
  %1226 = vmatprep.subr.mxu0 0.0
  %1227 = vmatpush1.xpose.msra.mxu0 %v1222
  %1228 = vmatprep.subr.mxu0 0.0
  %1229 = vmatpush1.xpose.msra.mxu0 %v1224
  %1230 = vmatprep.subr.mxu0 0.0
  %1231 = vmatpush1.xpose.msra.mxu0 0.0
  %1232 = vmatprep.subr.mxu0 0.0
  %1233 = vmatpush1.xpose.msra.mxu0 0.0
  %1234 = vmatprep.subr.mxu0 0.0
  %1235 = vmatpush1.xpose.msra.mxu0 0.0
  %1236 = vmatprep.subr.mxu0 0.0
  %1237 = vmatpush1.xpose.msra.mxu0 0.0
  %1238 = vmatprep.subr.mxu0 0.0
  %1239 = vmatpush1.xpose.msra.mxu0 0.0
  %1240 = vmatprep.subr.mxu0 0.0
  %1241 = vmatpush1.xpose.msra.mxu0 0.0
  %1242 = vmatprep.subr.mxu0 0.0
  %1243 = vmatpush1.xpose.msra.mxu0 0.0
  %1244 = vmatprep.subr.mxu0 0.0
  %1245 = vmatpush1.xpose.msra.mxu0 0.0
  %1246 = vmatprep.subr.mxu0 0.0
  %1247 = vmatpush1.xpose.msra.mxu0 0.0
  %1248 = vmatprep.subr.mxu0 0.0
  %1249 = vmatpush1.xpose.msra.mxu0 0.0
  %1250 = vmatprep.subr.mxu0 0.0
  %1251 = vmatpush1.xpose.msra.mxu0 0.0
  %1252 = vmatprep.subr.mxu0 0.0
  %1253 = vmatpush1.xpose.msra.mxu0 0.0
  %1254 = vmatprep.subr.mxu0 0.0
  %1255 = vmatpush1.xpose.msra.mxu0 0.0
  %1256 = vmatprep.subr.mxu0 0.0
  %1257 = vmatpush1.xpose.msra.mxu0 0.0
  %1258 = vmatprep.subr.mxu0 0.0
  %1259 = vmatpush1.xpose.msra.mxu0 0.0
  %1260 = vmatprep.subr.mxu0 0.0
  %1261 = vmatpush1.xpose.msra.mxu0 0.0
  %1262 = vmatprep.subr.mxu0 0.0
  %1263 = vmatpush1.xpose.msra.mxu0 0.0
  %1264 = vmatprep.subr.mxu0 0.0
  %1265 = vmatpush1.xpose.msra.mxu0 0.0
  %1266 = vmatprep.subr.mxu0 0.0
  %1267 = vmatpush1.xpose.msra.mxu0 0.0
  %1268 = vmatprep.subr.mxu0 0.0
  %1269 = vmatpush1.xpose.msra.mxu0 0.0
  %1270 = vmatprep.subr.mxu0 0.0
  %1271 = vmatpush1.xpose.msra.mxu0 0.0
  %1272 = vmatprep.subr.mxu0 0.0
  %1273 = vmatpush1.xpose.msra.mxu0 0.0
  %1274 = vmatprep.subr.mxu0 0.0
  %1275 = vmatpush1.xpose.msra.mxu0 0.0
  %1276 = vmatprep.subr.mxu0 0.0
  %1277 = vmatpush1.xpose.msra.mxu0 0.0
  %1278 = vmatprep.subr.mxu0 0.0
  %1279 = vmatpush1.xpose.msra.mxu0 0.0
  %1280 = vmatprep.subr.mxu0 0.0
  %1281 = vmatpush1.xpose.msra.mxu0 0.0
  %1282 = vmatprep.subr.mxu0 0.0
  %1283 = vmatpush1.xpose.msra.mxu0 0.0
  %1284 = vmatprep.subr.mxu0 0.0
  %1285 = vmatpush1.xpose.msra.mxu0 0.0
  %1286 = vmatprep.subr.mxu0 0.0
  %1287 = vmatpush1.xpose.msra.mxu0 0.0
  %1288 = vmatprep.subr.mxu0 0.0
  %1289 = vmatpush1.xpose.msra.mxu0 0.0
  %1290 = vmatprep.mubr.f32.mxu0 0.0
  %1291 = vmatmul.mubr.f32.gmra.mrb[0].mxu0 %v1217
  %v1292 = vpop.f32.mrb[0].mxu0
  %v1293 = vadd.f32 %v33, %v1292
  %v1294 = vpop.f32.mrb[0].mxu0
  %1295 = vmatprep.mubr.f32.mxu0 0.0
  %1296 = vmatmul.mubr.f32.gmra.mrb[0].mxu0 %v1220
  %v1297 = vpop.f32.mrb[0].mxu0
  %v1298 = vadd.f32 %v34, %v1297
  %v1299 = vpop.f32.mrb[0].mxu0
  %1300 = vdwg.mxu0
  %vm1301 = vcmask 130048
  %v1302 = vsel %vm1301, %v929, -inf
  %1303 = vmax.xlane.f32.xlu0 %v1302
  %v1304 = vpop.xlane.xlu0 %1303
  %v1305 = vsel %vm1301, %v934, -inf
  %1306 = vmax.xlane.f32.xlu0 %v1305
  %v1307 = vpop.xlane.xlu0 %1306
  %v1308 = vsel %vm1301, %v1020, -inf
  %1309 = vmax.xlane.f32.xlu0 %v1308
  %v1310 = vpop.xlane.xlu0 %1309
  %v1311 = vsel %vm1301, %v1025, -inf
  %1312 = vmax.xlane.f32.xlu0 %v1311
  %v1313 = vpop.xlane.xlu0 %1312
  %v1314 = vsel %vm1301, %v1111, -inf
  %1315 = vmax.xlane.f32.xlu0 %v1314
  %v1316 = vpop.xlane.xlu0 %1315
  %v1317 = vsel %vm1301, %v1116, -inf
  %1318 = vmax.xlane.f32.xlu0 %v1317
  %v1319 = vpop.xlane.xlu0 %1318
  %v1320 = vsel %vm1301, %v1202, -inf
  %1321 = vmax.xlane.f32.xlu0 %v1320
  %v1322 = vpop.xlane.xlu0 %1321
  %v1323 = vsel %vm1301, %v1207, -inf
  %1324 = vmax.xlane.f32.xlu0 %v1323
  %v1325 = vpop.xlane.xlu0 %1324
  %v1326 = vsel %vm1301, %v1293, -inf
  %1327 = vmax.xlane.f32.xlu0 %v1326
  %v1328 = vpop.xlane.xlu0 %1327
  %v1329 = vsel %vm1301, %v1298, -inf
  %1330 = vmax.xlane.f32.xlu0 %v1329
  %v1331 = vpop.xlane.xlu0 %1330
  %v1332 = vsub.f32 %v929, %v1304
  %v1333 = vsub.f32 %v934, %v1307
  %v1334 = vsub.f32 %v1020, %v1310
  %v1335 = vsub.f32 %v1025, %v1313
  %v1336 = vsub.f32 %v1111, %v1316
  %v1337 = vsub.f32 %v1116, %v1319
  %v1338 = vsub.f32 %v1202, %v1322
  %v1339 = vsub.f32 %v1207, %v1325
  %v1340 = vsub.f32 %v1293, %v1328
  %v1341 = vsub.f32 %v1298, %v1331
  %v1342 = vmul.f32 %v1332, 1.442695
  %v1343 = vpow.pop %v1342
  %v1344 = vmul.f32 %v1333, 1.442695
  %v1345 = vpow.pop %v1344
  %v1346 = vmul.f32 %v1334, 1.442695
  %v1347 = vpow.pop %v1346
  %v1348 = vmul.f32 %v1335, 1.442695
  %v1349 = vpow.pop %v1348
  %v1350 = vmul.f32 %v1336, 1.442695
  %v1351 = vpow.pop %v1350
  %v1352 = vmul.f32 %v1337, 1.442695
  %v1353 = vpow.pop %v1352
  %v1354 = vmul.f32 %v1338, 1.442695
  %v1355 = vpow.pop %v1354
  %v1356 = vmul.f32 %v1339, 1.442695
  %v1357 = vpow.pop %v1356
  %v1358 = vmul.f32 %v1340, 1.442695
  %v1359 = vpow.pop %v1358
  %v1360 = vmul.f32 %v1341, 1.442695
  %v1361 = vpow.pop %v1360
  %v1362 = vsel %vm1301, %v1343, 0.0
  %1363 = vadd.xlane.f32.xlu0 %v1362
  %v1364 = vpop.xlane.xlu0 %1363
  %v1365 = vsel %vm1301, %v1345, 0.0
  %1366 = vadd.xlane.f32.xlu0 %v1365
  %v1367 = vpop.xlane.xlu0 %1366
  %v1368 = vsel %vm1301, %v1347, 0.0
  %1369 = vadd.xlane.f32.xlu0 %v1368
  %v1370 = vpop.xlane.xlu0 %1369
  %v1371 = vsel %vm1301, %v1349, 0.0
  %1372 = vadd.xlane.f32.xlu0 %v1371
  %v1373 = vpop.xlane.xlu0 %1372
  %v1374 = vsel %vm1301, %v1351, 0.0
  %1375 = vadd.xlane.f32.xlu0 %v1374
  %v1376 = vpop.xlane.xlu0 %1375
  %v1377 = vsel %vm1301, %v1353, 0.0
  %1378 = vadd.xlane.f32.xlu0 %v1377
  %v1379 = vpop.xlane.xlu0 %1378
  %v1380 = vsel %vm1301, %v1355, 0.0
  %1381 = vadd.xlane.f32.xlu0 %v1380
  %v1382 = vpop.xlane.xlu0 %1381
  %v1383 = vsel %vm1301, %v1357, 0.0
  %1384 = vadd.xlane.f32.xlu0 %v1383
  %v1385 = vpop.xlane.xlu0 %1384
  %v1386 = vsel %vm1301, %v1359, 0.0
  %1387 = vadd.xlane.f32.xlu0 %v1386
  %v1388 = vpop.xlane.xlu0 %1387
  %v1389 = vsel %vm1301, %v1361, 0.0
  %1390 = vadd.xlane.f32.xlu0 %v1389
  %v1391 = vpop.xlane.xlu0 %1390
  %v1392 = vrcp.pop %v1364
  %v1393 = vmul.f32 %v1343, %v1392
  %v1394 = vrcp.pop %v1367
  %v1395 = vmul.f32 %v1345, %v1394
  %v1396 = vrcp.pop %v1370
  %v1397 = vmul.f32 %v1347, %v1396
  %v1398 = vrcp.pop %v1373
  %v1399 = vmul.f32 %v1349, %v1398
  %v1400 = vrcp.pop %v1376
  %v1401 = vmul.f32 %v1351, %v1400
  %v1402 = vrcp.pop %v1379
  %v1403 = vmul.f32 %v1353, %v1402
  %v1404 = vrcp.pop %v1382
  %v1405 = vmul.f32 %v1355, %v1404
  %v1406 = vrcp.pop %v1385
  %v1407 = vmul.f32 %v1357, %v1406
  %v1408 = vrcp.pop %v1388
  %v1409 = vmul.f32 %v1359, %v1408
  %v1410 = vrcp.pop %v1391
  %v1411 = vmul.f32 %v1361, %v1410
  %1412 = vrot.lane.b32.xlu0 %v531, 112
  %v1413 = vpop.permute.xlu0 %1412
  %1414 = vrot.lane.b32.xlu0 %v536, 112
  %v1415 = vpop.permute.xlu0 %1414
  %v1419 = vsel %vm1301, %v1393, 0
  %v1422 = vsel %vm1301, %v1395, 0
  %1424 = vmatprep.subr.mxu0 0.0
  %1425 = vmatpush1.msra.mxu0 %v1413
  %1426 = vmatprep.subr.mxu0 0.0
  %1427 = vmatpush1.msra.mxu0 %v1415
  %1428 = vmatprep.subr.mxu0 0.0
  %1429 = vmatpush1.msra.mxu0 0.0
  %1430 = vmatprep.subr.mxu0 0.0
  %1431 = vmatpush1.msra.mxu0 0.0
  %1432 = vmatprep.subr.mxu0 0.0
  %1433 = vmatpush1.msra.mxu0 0.0
  %1434 = vmatprep.subr.mxu0 0.0
  %1435 = vmatpush1.msra.mxu0 0.0
  %1436 = vmatprep.subr.mxu0 0.0
  %1437 = vmatpush1.msra.mxu0 0.0
  %1438 = vmatprep.subr.mxu0 0.0
  %1439 = vmatpush1.msra.mxu0 0.0
  %1440 = vmatprep.subr.mxu0 0.0
  %1441 = vmatpush1.msra.mxu0 0.0
  %1442 = vmatprep.subr.mxu0 0.0
  %1443 = vmatpush1.msra.mxu0 0.0
  %1444 = vmatprep.subr.mxu0 0.0
  %1445 = vmatpush1.msra.mxu0 0.0
  %1446 = vmatprep.subr.mxu0 0.0
  %1447 = vmatpush1.msra.mxu0 0.0
  %1448 = vmatprep.subr.mxu0 0.0
  %1449 = vmatpush1.msra.mxu0 0.0
  %1450 = vmatprep.subr.mxu0 0.0
  %1451 = vmatpush1.msra.mxu0 0.0
  %1452 = vmatprep.subr.mxu0 0.0
  %1453 = vmatpush1.msra.mxu0 0.0
  %1454 = vmatprep.subr.mxu0 0.0
  %1455 = vmatpush1.msra.mxu0 0.0
  %1456 = vmatprep.subr.mxu0 0.0
  %1457 = vmatpush1.msra.mxu0 0.0
  %1458 = vmatprep.subr.mxu0 0.0
  %1459 = vmatpush1.msra.mxu0 0.0
  %1460 = vmatprep.subr.mxu0 0.0
  %1461 = vmatpush1.msra.mxu0 0.0
  %1462 = vmatprep.subr.mxu0 0.0
  %1463 = vmatpush1.msra.mxu0 0.0
  %1464 = vmatprep.subr.mxu0 0.0
  %1465 = vmatpush1.msra.mxu0 0.0
  %1466 = vmatprep.subr.mxu0 0.0
  %1467 = vmatpush1.msra.mxu0 0.0
  %1468 = vmatprep.subr.mxu0 0.0
  %1469 = vmatpush1.msra.mxu0 0.0
  %1470 = vmatprep.subr.mxu0 0.0
  %1471 = vmatpush1.msra.mxu0 0.0
  %1472 = vmatprep.subr.mxu0 0.0
  %1473 = vmatpush1.msra.mxu0 0.0
  %1474 = vmatprep.subr.mxu0 0.0
  %1475 = vmatpush1.msra.mxu0 0.0
  %1476 = vmatprep.subr.mxu0 0.0
  %1477 = vmatpush1.msra.mxu0 0.0
  %1478 = vmatprep.subr.mxu0 0.0
  %1479 = vmatpush1.msra.mxu0 0.0
  %1480 = vmatprep.subr.mxu0 0.0
  %1481 = vmatpush1.msra.mxu0 0.0
  %1482 = vmatprep.subr.mxu0 0.0
  %1483 = vmatpush1.msra.mxu0 0.0
  %1484 = vmatprep.subr.mxu0 0.0
  %1485 = vmatpush1.msra.mxu0 0.0
  %1486 = vmatprep.subr.mxu0 0.0
  %1487 = vmatpush1.msra.mxu0 0.0
  %1488 = vmatprep.mubr.f32.mxu0 0.0
  %1489 = vmatmul.mubr.f32.gmra.mrb[0].mxu0 %v1419
  %v1490 = vpop.f32.mrb[0].mxu0
  %v1491 = vadd.f32 0.0, %v1490
  %v1492 = vpop.f32.mrb[0].mxu0
  %1493 = vmatprep.mubr.f32.mxu0 0.0
  %1494 = vmatmul.mubr.f32.gmra.mrb[0].mxu0 %v1422
  %v1495 = vpop.f32.mrb[0].mxu0
  %v1496 = vadd.f32 0.0, %v1495
  %v1497 = vpop.f32.mrb[0].mxu0
  %1498 = vdwg.mxu0
  %1499 = vrot.lane.b32.xlu0 %v606, 112
  %v1500 = vpop.permute.xlu0 %1499
  %1501 = vrot.lane.b32.xlu0 %v611, 112
  %v1502 = vpop.permute.xlu0 %1501
  %v1506 = vsel %vm1301, %v1397, 0
  %v1509 = vsel %vm1301, %v1399, 0
  %1511 = vmatprep.subr.mxu0 0.0
  %1512 = vmatpush1.msra.mxu0 %v1500
  %1513 = vmatprep.subr.mxu0 0.0
  %1514 = vmatpush1.msra.mxu0 %v1502
  %1515 = vmatprep.subr.mxu0 0.0
  %1516 = vmatpush1.msra.mxu0 0.0
  %1517 = vmatprep.subr.mxu0 0.0
  %1518 = vmatpush1.msra.mxu0 0.0
  %1519 = vmatprep.subr.mxu0 0.0
  %1520 = vmatpush1.msra.mxu0 0.0
  %1521 = vmatprep.subr.mxu0 0.0
  %1522 = vmatpush1.msra.mxu0 0.0
  %1523 = vmatprep.subr.mxu0 0.0
  %1524 = vmatpush1.msra.mxu0 0.0
  %1525 = vmatprep.subr.mxu0 0.0
  %1526 = vmatpush1.msra.mxu0 0.0
  %1527 = vmatprep.subr.mxu0 0.0
  %1528 = vmatpush1.msra.mxu0 0.0
  %1529 = vmatprep.subr.mxu0 0.0
  %1530 = vmatpush1.msra.mxu0 0.0
  %1531 = vmatprep.subr.mxu0 0.0
  %1532 = vmatpush1.msra.mxu0 0.0
  %1533 = vmatprep.subr.mxu0 0.0
  %1534 = vmatpush1.msra.mxu0 0.0
  %1535 = vmatprep.subr.mxu0 0.0
  %1536 = vmatpush1.msra.mxu0 0.0
  %1537 = vmatprep.subr.mxu0 0.0
  %1538 = vmatpush1.msra.mxu0 0.0
  %1539 = vmatprep.subr.mxu0 0.0
  %1540 = vmatpush1.msra.mxu0 0.0
  %1541 = vmatprep.subr.mxu0 0.0
  %1542 = vmatpush1.msra.mxu0 0.0
  %1543 = vmatprep.subr.mxu0 0.0
  %1544 = vmatpush1.msra.mxu0 0.0
  %1545 = vmatprep.subr.mxu0 0.0
  %1546 = vmatpush1.msra.mxu0 0.0
  %1547 = vmatprep.subr.mxu0 0.0
  %1548 = vmatpush1.msra.mxu0 0.0
  %1549 = vmatprep.subr.mxu0 0.0
  %1550 = vmatpush1.msra.mxu0 0.0
  %1551 = vmatprep.subr.mxu0 0.0
  %1552 = vmatpush1.msra.mxu0 0.0
  %1553 = vmatprep.subr.mxu0 0.0
  %1554 = vmatpush1.msra.mxu0 0.0
  %1555 = vmatprep.subr.mxu0 0.0
  %1556 = vmatpush1.msra.mxu0 0.0
  %1557 = vmatprep.subr.mxu0 0.0
  %1558 = vmatpush1.msra.mxu0 0.0
  %1559 = vmatprep.subr.mxu0 0.0
  %1560 = vmatpush1.msra.mxu0 0.0
  %1561 = vmatprep.subr.mxu0 0.0
  %1562 = vmatpush1.msra.mxu0 0.0
  %1563 = vmatprep.subr.mxu0 0.0
  %1564 = vmatpush1.msra.mxu0 0.0
  %1565 = vmatprep.subr.mxu0 0.0
  %1566 = vmatpush1.msra.mxu0 0.0
  %1567 = vmatprep.subr.mxu0 0.0
  %1568 = vmatpush1.msra.mxu0 0.0
  %1569 = vmatprep.subr.mxu0 0.0
  %1570 = vmatpush1.msra.mxu0 0.0
  %1571 = vmatprep.subr.mxu0 0.0
  %1572 = vmatpush1.msra.mxu0 0.0
  %1573 = vmatprep.subr.mxu0 0.0
  %1574 = vmatpush1.msra.mxu0 0.0
  %1575 = vmatprep.mubr.f32.mxu0 0.0
  %1576 = vmatmul.mubr.f32.gmra.mrb[0].mxu0 %v1506
  %v1577 = vpop.f32.mrb[0].mxu0
  %v1578 = vadd.f32 0.0, %v1577
  %v1579 = vpop.f32.mrb[0].mxu0
  %1580 = vmatprep.mubr.f32.mxu0 0.0
  %1581 = vmatmul.mubr.f32.gmra.mrb[0].mxu0 %v1509
  %v1582 = vpop.f32.mrb[0].mxu0
  %v1583 = vadd.f32 0.0, %v1582
  %v1584 = vpop.f32.mrb[0].mxu0
  %1585 = vdwg.mxu0
  %1586 = vrot.lane.b32.xlu0 %v681, 112
  %v1587 = vpop.permute.xlu0 %1586
  %1588 = vrot.lane.b32.xlu0 %v686, 112
  %v1589 = vpop.permute.xlu0 %1588
  %v1593 = vsel %vm1301, %v1401, 0
  %v1596 = vsel %vm1301, %v1403, 0
  %1598 = vmatprep.subr.mxu0 0.0
  %1599 = vmatpush1.msra.mxu0 %v1587
  %1600 = vmatprep.subr.mxu0 0.0
  %1601 = vmatpush1.msra.mxu0 %v1589
  %1602 = vmatprep.subr.mxu0 0.0
  %1603 = vmatpush1.msra.mxu0 0.0
  %1604 = vmatprep.subr.mxu0 0.0
  %1605 = vmatpush1.msra.mxu0 0.0
  %1606 = vmatprep.subr.mxu0 0.0
  %1607 = vmatpush1.msra.mxu0 0.0
  %1608 = vmatprep.subr.mxu0 0.0
  %1609 = vmatpush1.msra.mxu0 0.0
  %1610 = vmatprep.subr.mxu0 0.0
  %1611 = vmatpush1.msra.mxu0 0.0
  %1612 = vmatprep.subr.mxu0 0.0
  %1613 = vmatpush1.msra.mxu0 0.0
  %1614 = vmatprep.subr.mxu0 0.0
  %1615 = vmatpush1.msra.mxu0 0.0
  %1616 = vmatprep.subr.mxu0 0.0
  %1617 = vmatpush1.msra.mxu0 0.0
  %1618 = vmatprep.subr.mxu0 0.0
  %1619 = vmatpush1.msra.mxu0 0.0
  %1620 = vmatprep.subr.mxu0 0.0
  %1621 = vmatpush1.msra.mxu0 0.0
  %1622 = vmatprep.subr.mxu0 0.0
  %1623 = vmatpush1.msra.mxu0 0.0
  %1624 = vmatprep.subr.mxu0 0.0
  %1625 = vmatpush1.msra.mxu0 0.0
  %1626 = vmatprep.subr.mxu0 0.0
  %1627 = vmatpush1.msra.mxu0 0.0
  %1628 = vmatprep.subr.mxu0 0.0
  %1629 = vmatpush1.msra.mxu0 0.0
  %1630 = vmatprep.subr.mxu0 0.0
  %1631 = vmatpush1.msra.mxu0 0.0
  %1632 = vmatprep.subr.mxu0 0.0
  %1633 = vmatpush1.msra.mxu0 0.0
  %1634 = vmatprep.subr.mxu0 0.0
  %1635 = vmatpush1.msra.mxu0 0.0
  %1636 = vmatprep.subr.mxu0 0.0
  %1637 = vmatpush1.msra.mxu0 0.0
  %1638 = vmatprep.subr.mxu0 0.0
  %1639 = vmatpush1.msra.mxu0 0.0
  %1640 = vmatprep.subr.mxu0 0.0
  %1641 = vmatpush1.msra.mxu0 0.0
  %1642 = vmatprep.subr.mxu0 0.0
  %1643 = vmatpush1.msra.mxu0 0.0
  %1644 = vmatprep.subr.mxu0 0.0
  %1645 = vmatpush1.msra.mxu0 0.0
  %1646 = vmatprep.subr.mxu0 0.0
  %1647 = vmatpush1.msra.mxu0 0.0
  %1648 = vmatprep.subr.mxu0 0.0
  %1649 = vmatpush1.msra.mxu0 0.0
  %1650 = vmatprep.subr.mxu0 0.0
  %1651 = vmatpush1.msra.mxu0 0.0
  %1652 = vmatprep.subr.mxu0 0.0
  %1653 = vmatpush1.msra.mxu0 0.0
  %1654 = vmatprep.subr.mxu0 0.0
  %1655 = vmatpush1.msra.mxu0 0.0
  %1656 = vmatprep.subr.mxu0 0.0
  %1657 = vmatpush1.msra.mxu0 0.0
  %1658 = vmatprep.subr.mxu0 0.0
  %1659 = vmatpush1.msra.mxu0 0.0
  %1660 = vmatprep.subr.mxu0 0.0
  %1661 = vmatpush1.msra.mxu0 0.0
  %1662 = vmatprep.mubr.f32.mxu0 0.0
  %1663 = vmatmul.mubr.f32.gmra.mrb[0].mxu0 %v1593
  %v1664 = vpop.f32.mrb[0].mxu0
  %v1665 = vadd.f32 0.0, %v1664
  %v1666 = vpop.f32.mrb[0].mxu0
  %1667 = vmatprep.mubr.f32.mxu0 0.0
  %1668 = vmatmul.mubr.f32.gmra.mrb[0].mxu0 %v1596
  %v1669 = vpop.f32.mrb[0].mxu0
  %v1670 = vadd.f32 0.0, %v1669
  %v1671 = vpop.f32.mrb[0].mxu0
  %1672 = vdwg.mxu0
  %1673 = vrot.lane.b32.xlu0 %v756, 112
  %v1674 = vpop.permute.xlu0 %1673
  %1675 = vrot.lane.b32.xlu0 %v761, 112
  %v1676 = vpop.permute.xlu0 %1675
  %v1680 = vsel %vm1301, %v1405, 0
  %v1683 = vsel %vm1301, %v1407, 0
  %1685 = vmatprep.subr.mxu0 0.0
  %1686 = vmatpush1.msra.mxu0 %v1674
  %1687 = vmatprep.subr.mxu0 0.0
  %1688 = vmatpush1.msra.mxu0 %v1676
  %1689 = vmatprep.subr.mxu0 0.0
  %1690 = vmatpush1.msra.mxu0 0.0
  %1691 = vmatprep.subr.mxu0 0.0
  %1692 = vmatpush1.msra.mxu0 0.0
  %1693 = vmatprep.subr.mxu0 0.0
  %1694 = vmatpush1.msra.mxu0 0.0
  %1695 = vmatprep.subr.mxu0 0.0
  %1696 = vmatpush1.msra.mxu0 0.0
  %1697 = vmatprep.subr.mxu0 0.0
  %1698 = vmatpush1.msra.mxu0 0.0
  %1699 = vmatprep.subr.mxu0 0.0
  %1700 = vmatpush1.msra.mxu0 0.0
  %1701 = vmatprep.subr.mxu0 0.0
  %1702 = vmatpush1.msra.mxu0 0.0
  %1703 = vmatprep.subr.mxu0 0.0
  %1704 = vmatpush1.msra.mxu0 0.0
  %1705 = vmatprep.subr.mxu0 0.0
  %1706 = vmatpush1.msra.mxu0 0.0
  %1707 = vmatprep.subr.mxu0 0.0
  %1708 = vmatpush1.msra.mxu0 0.0
  %1709 = vmatprep.subr.mxu0 0.0
  %1710 = vmatpush1.msra.mxu0 0.0
  %1711 = vmatprep.subr.mxu0 0.0
  %1712 = vmatpush1.msra.mxu0 0.0
  %1713 = vmatprep.subr.mxu0 0.0
  %1714 = vmatpush1.msra.mxu0 0.0
  %1715 = vmatprep.subr.mxu0 0.0
  %1716 = vmatpush1.msra.mxu0 0.0
  %1717 = vmatprep.subr.mxu0 0.0
  %1718 = vmatpush1.msra.mxu0 0.0
  %1719 = vmatprep.subr.mxu0 0.0
  %1720 = vmatpush1.msra.mxu0 0.0
  %1721 = vmatprep.subr.mxu0 0.0
  %1722 = vmatpush1.msra.mxu0 0.0
  %1723 = vmatprep.subr.mxu0 0.0
  %1724 = vmatpush1.msra.mxu0 0.0
  %1725 = vmatprep.subr.mxu0 0.0
  %1726 = vmatpush1.msra.mxu0 0.0
  %1727 = vmatprep.subr.mxu0 0.0
  %1728 = vmatpush1.msra.mxu0 0.0
  %1729 = vmatprep.subr.mxu0 0.0
  %1730 = vmatpush1.msra.mxu0 0.0
  %1731 = vmatprep.subr.mxu0 0.0
  %1732 = vmatpush1.msra.mxu0 0.0
  %1733 = vmatprep.subr.mxu0 0.0
  %1734 = vmatpush1.msra.mxu0 0.0
  %1735 = vmatprep.subr.mxu0 0.0
  %1736 = vmatpush1.msra.mxu0 0.0
  %1737 = vmatprep.subr.mxu0 0.0
  %1738 = vmatpush1.msra.mxu0 0.0
  %1739 = vmatprep.subr.mxu0 0.0
  %1740 = vmatpush1.msra.mxu0 0.0
  %1741 = vmatprep.subr.mxu0 0.0
  %1742 = vmatpush1.msra.mxu0 0.0
  %1743 = vmatprep.subr.mxu0 0.0
  %1744 = vmatpush1.msra.mxu0 0.0
  %1745 = vmatprep.subr.mxu0 0.0
  %1746 = vmatpush1.msra.mxu0 0.0
  %1747 = vmatprep.subr.mxu0 0.0
  %1748 = vmatpush1.msra.mxu0 0.0
  %1749 = vmatprep.mubr.f32.mxu0 0.0
  %1750 = vmatmul.mubr.f32.gmra.mrb[0].mxu0 %v1680
  %v1751 = vpop.f32.mrb[0].mxu0
  %v1752 = vadd.f32 0.0, %v1751
  %v1753 = vpop.f32.mrb[0].mxu0
  %1754 = vmatprep.mubr.f32.mxu0 0.0
  %1755 = vmatmul.mubr.f32.gmra.mrb[0].mxu0 %v1683
  %v1756 = vpop.f32.mrb[0].mxu0
  %v1757 = vadd.f32 0.0, %v1756
  %v1758 = vpop.f32.mrb[0].mxu0
  %1759 = vdwg.mxu0
  %1760 = vrot.lane.b32.xlu0 %v831, 112
  %v1761 = vpop.permute.xlu0 %1760
  %1762 = vrot.lane.b32.xlu0 %v836, 112
  %v1763 = vpop.permute.xlu0 %1762
  %v1767 = vsel %vm1301, %v1409, 0
  %v1770 = vsel %vm1301, %v1411, 0
  %1772 = vmatprep.subr.mxu0 0.0
  %1773 = vmatpush1.msra.mxu0 %v1761
  %1774 = vmatprep.subr.mxu0 0.0
  %1775 = vmatpush1.msra.mxu0 %v1763
  %1776 = vmatprep.subr.mxu0 0.0
  %1777 = vmatpush1.msra.mxu0 0.0
  %1778 = vmatprep.subr.mxu0 0.0
  %1779 = vmatpush1.msra.mxu0 0.0
  %1780 = vmatprep.subr.mxu0 0.0
  %1781 = vmatpush1.msra.mxu0 0.0
  %1782 = vmatprep.subr.mxu0 0.0
  %1783 = vmatpush1.msra.mxu0 0.0
  %1784 = vmatprep.subr.mxu0 0.0
  %1785 = vmatpush1.msra.mxu0 0.0
  %1786 = vmatprep.subr.mxu0 0.0
  %1787 = vmatpush1.msra.mxu0 0.0
  %1788 = vmatprep.subr.mxu0 0.0
  %1789 = vmatpush1.msra.mxu0 0.0
  %1790 = vmatprep.subr.mxu0 0.0
  %1791 = vmatpush1.msra.mxu0 0.0
  %1792 = vmatprep.subr.mxu0 0.0
  %1793 = vmatpush1.msra.mxu0 0.0
  %1794 = vmatprep.subr.mxu0 0.0
  %1795 = vmatpush1.msra.mxu0 0.0
  %1796 = vmatprep.subr.mxu0 0.0
  %1797 = vmatpush1.msra.mxu0 0.0
  %1798 = vmatprep.subr.mxu0 0.0
  %1799 = vmatpush1.msra.mxu0 0.0
  %1800 = vmatprep.subr.mxu0 0.0
  %1801 = vmatpush1.msra.mxu0 0.0
  %1802 = vmatprep.subr.mxu0 0.0
  %1803 = vmatpush1.msra.mxu0 0.0
  %1804 = vmatprep.subr.mxu0 0.0
  %1805 = vmatpush1.msra.mxu0 0.0
  %1806 = vmatprep.subr.mxu0 0.0
  %1807 = vmatpush1.msra.mxu0 0.0
  %1808 = vmatprep.subr.mxu0 0.0
  %1809 = vmatpush1.msra.mxu0 0.0
  %1810 = vmatprep.subr.mxu0 0.0
  %1811 = vmatpush1.msra.mxu0 0.0
  %1812 = vmatprep.subr.mxu0 0.0
  %1813 = vmatpush1.msra.mxu0 0.0
  %1814 = vmatprep.subr.mxu0 0.0
  %1815 = vmatpush1.msra.mxu0 0.0
  %1816 = vmatprep.subr.mxu0 0.0
  %1817 = vmatpush1.msra.mxu0 0.0
  %1818 = vmatprep.subr.mxu0 0.0
  %1819 = vmatpush1.msra.mxu0 0.0
  %1820 = vmatprep.subr.mxu0 0.0
  %1821 = vmatpush1.msra.mxu0 0.0
  %1822 = vmatprep.subr.mxu0 0.0
  %1823 = vmatpush1.msra.mxu0 0.0
  %1824 = vmatprep.subr.mxu0 0.0
  %1825 = vmatpush1.msra.mxu0 0.0
  %1826 = vmatprep.subr.mxu0 0.0
  %1827 = vmatpush1.msra.mxu0 0.0
  %1828 = vmatprep.subr.mxu0 0.0
  %1829 = vmatpush1.msra.mxu0 0.0
  %1830 = vmatprep.subr.mxu0 0.0
  %1831 = vmatpush1.msra.mxu0 0.0
  %1832 = vmatprep.subr.mxu0 0.0
  %1833 = vmatpush1.msra.mxu0 0.0
  %1834 = vmatprep.subr.mxu0 0.0
  %1835 = vmatpush1.msra.mxu0 0.0
  %1836 = vmatprep.mubr.f32.mxu0 0.0
  %1837 = vmatmul.mubr.f32.gmra.mrb[0].mxu0 %v1767
  %v1838 = vpop.f32.mrb[0].mxu0
  %v1839 = vadd.f32 0.0, %v1838
  %v1840 = vpop.f32.mrb[0].mxu0
  %1841 = vmatprep.mubr.f32.mxu0 0.0
  %1842 = vmatmul.mubr.f32.gmra.mrb[0].mxu0 %v1770
  %v1843 = vpop.f32.mrb[0].mxu0
  %v1844 = vadd.f32 0.0, %v1843
  %v1845 = vpop.f32.mrb[0].mxu0
  %1846 = vdwg.mxu0
  %v1848 = vsel %vm851, %v1491, 0
  %v1851 = vsel %vm851, %v1496, 0
  %1853 = vmatprep.subr.mxu0 0.0
  %1854 = vmatpush1.msra.mxu0 %v839
  %1855 = vmatprep.subr.mxu0 0.0
  %1856 = vmatpush1.msra.mxu0 0.0
  %1857 = vmatprep.subr.mxu0 0.0
  %1858 = vmatpush1.msra.mxu0 0.0
  %1859 = vmatprep.subr.mxu0 0.0
  %1860 = vmatpush1.msra.mxu0 0.0
  %1861 = vmatprep.subr.mxu0 0.0
  %1862 = vmatpush1.msra.mxu0 0.0
  %1863 = vmatprep.subr.mxu0 0.0
  %1864 = vmatpush1.msra.mxu0 0.0
  %1865 = vmatprep.subr.mxu0 0.0
  %1866 = vmatpush1.msra.mxu0 0.0
  %1867 = vmatprep.subr.mxu0 0.0
  %1868 = vmatpush1.msra.mxu0 0.0
  %1869 = vmatprep.subr.mxu0 0.0
  %1870 = vmatpush1.msra.mxu0 0.0
  %1871 = vmatprep.subr.mxu0 0.0
  %1872 = vmatpush1.msra.mxu0 0.0
  %1873 = vmatprep.subr.mxu0 0.0
  %1874 = vmatpush1.msra.mxu0 0.0
  %1875 = vmatprep.subr.mxu0 0.0
  %1876 = vmatpush1.msra.mxu0 0.0
  %1877 = vmatprep.subr.mxu0 0.0
  %1878 = vmatpush1.msra.mxu0 0.0
  %1879 = vmatprep.subr.mxu0 0.0
  %1880 = vmatpush1.msra.mxu0 0.0
  %1881 = vmatprep.subr.mxu0 0.0
  %1882 = vmatpush1.msra.mxu0 0.0
  %1883 = vmatprep.subr.mxu0 0.0
  %1884 = vmatpush1.msra.mxu0 0.0
  %1885 = vmatprep.subr.mxu0 0.0
  %1886 = vmatpush1.msra.mxu0 0.0
  %1887 = vmatprep.subr.mxu0 0.0
  %1888 = vmatpush1.msra.mxu0 0.0
  %1889 = vmatprep.subr.mxu0 0.0
  %1890 = vmatpush1.msra.mxu0 0.0
  %1891 = vmatprep.subr.mxu0 0.0
  %1892 = vmatpush1.msra.mxu0 0.0
  %1893 = vmatprep.subr.mxu0 0.0
  %1894 = vmatpush1.msra.mxu0 0.0
  %1895 = vmatprep.subr.mxu0 0.0
  %1896 = vmatpush1.msra.mxu0 0.0
  %1897 = vmatprep.subr.mxu0 0.0
  %1898 = vmatpush1.msra.mxu0 0.0
  %1899 = vmatprep.subr.mxu0 0.0
  %1900 = vmatpush1.msra.mxu0 0.0
  %1901 = vmatprep.subr.mxu0 0.0
  %1902 = vmatpush1.msra.mxu0 0.0
  %1903 = vmatprep.subr.mxu0 0.0
  %1904 = vmatpush1.msra.mxu0 0.0
  %1905 = vmatprep.subr.mxu0 0.0
  %1906 = vmatpush1.msra.mxu0 0.0
  %1907 = vmatprep.subr.mxu0 0.0
  %1908 = vmatpush1.msra.mxu0 0.0
  %1909 = vmatprep.subr.mxu0 0.0
  %1910 = vmatpush1.msra.mxu0 0.0
  %1911 = vmatprep.subr.mxu0 0.0
  %1912 = vmatpush1.msra.mxu0 0.0
  %1913 = vmatprep.subr.mxu0 0.0
  %1914 = vmatpush1.msra.mxu0 0.0
  %1915 = vmatprep.subr.mxu0 0.0
  %1916 = vmatpush1.msra.mxu0 0.0
  %1917 = vmatprep.mubr.f32.mxu0 0.0
  %1918 = vmatmul.mubr.f32.gmra.mrb[0].mxu0 %v1848
  %v1919 = vpop.f32.mrb[0].mxu0
  %v1920 = vadd.f32 0.0, %v1919
  %v1921 = vpop.f32.mrb[0].mxu0
  %1922 = vmatprep.mubr.f32.mxu0 0.0
  %1923 = vmatmul.mubr.f32.gmra.mrb[0].mxu0 %v1851
  %v1924 = vpop.f32.mrb[0].mxu0
  %v1925 = vadd.f32 0.0, %v1924
  %v1926 = vpop.f32.mrb[0].mxu0
  %1927 = vdwg.mxu0
  %v1929 = vsel %vm851, %v1578, 0
  %v1932 = vsel %vm851, %v1583, 0
  %1934 = vmatprep.subr.mxu0 0.0
  %1935 = vmatpush1.msra.mxu0 %v840
  %1936 = vmatprep.subr.mxu0 0.0
  %1937 = vmatpush1.msra.mxu0 0.0
  %1938 = vmatprep.subr.mxu0 0.0
  %1939 = vmatpush1.msra.mxu0 0.0
  %1940 = vmatprep.subr.mxu0 0.0
  %1941 = vmatpush1.msra.mxu0 0.0
  %1942 = vmatprep.subr.mxu0 0.0
  %1943 = vmatpush1.msra.mxu0 0.0
  %1944 = vmatprep.subr.mxu0 0.0
  %1945 = vmatpush1.msra.mxu0 0.0
  %1946 = vmatprep.subr.mxu0 0.0
  %1947 = vmatpush1.msra.mxu0 0.0
  %1948 = vmatprep.subr.mxu0 0.0
  %1949 = vmatpush1.msra.mxu0 0.0
  %1950 = vmatprep.subr.mxu0 0.0
  %1951 = vmatpush1.msra.mxu0 0.0
  %1952 = vmatprep.subr.mxu0 0.0
  %1953 = vmatpush1.msra.mxu0 0.0
  %1954 = vmatprep.subr.mxu0 0.0
  %1955 = vmatpush1.msra.mxu0 0.0
  %1956 = vmatprep.subr.mxu0 0.0
  %1957 = vmatpush1.msra.mxu0 0.0
  %1958 = vmatprep.subr.mxu0 0.0
  %1959 = vmatpush1.msra.mxu0 0.0
  %1960 = vmatprep.subr.mxu0 0.0
  %1961 = vmatpush1.msra.mxu0 0.0
  %1962 = vmatprep.subr.mxu0 0.0
  %1963 = vmatpush1.msra.mxu0 0.0
  %1964 = vmatprep.subr.mxu0 0.0
  %1965 = vmatpush1.msra.mxu0 0.0
  %1966 = vmatprep.subr.mxu0 0.0
  %1967 = vmatpush1.msra.mxu0 0.0
  %1968 = vmatprep.subr.mxu0 0.0
  %1969 = vmatpush1.msra.mxu0 0.0
  %1970 = vmatprep.subr.mxu0 0.0
  %1971 = vmatpush1.msra.mxu0 0.0
  %1972 = vmatprep.subr.mxu0 0.0
  %1973 = vmatpush1.msra.mxu0 0.0
  %1974 = vmatprep.subr.mxu0 0.0
  %1975 = vmatpush1.msra.mxu0 0.0
  %1976 = vmatprep.subr.mxu0 0.0
  %1977 = vmatpush1.msra.mxu0 0.0
  %1978 = vmatprep.subr.mxu0 0.0
  %1979 = vmatpush1.msra.mxu0 0.0
  %1980 = vmatprep.subr.mxu0 0.0
  %1981 = vmatpush1.msra.mxu0 0.0
  %1982 = vmatprep.subr.mxu0 0.0
  %1983 = vmatpush1.msra.mxu0 0.0
  %1984 = vmatprep.subr.mxu0 0.0
  %1985 = vmatpush1.msra.mxu0 0.0
  %1986 = vmatprep.subr.mxu0 0.0
  %1987 = vmatpush1.msra.mxu0 0.0
  %1988 = vmatprep.subr.mxu0 0.0
  %1989 = vmatpush1.msra.mxu0 0.0
  %1990 = vmatprep.subr.mxu0 0.0
  %1991 = vmatpush1.msra.mxu0 0.0
  %1992 = vmatprep.subr.mxu0 0.0
  %1993 = vmatpush1.msra.mxu0 0.0
  %1994 = vmatprep.subr.mxu0 0.0
  %1995 = vmatpush1.msra.mxu0 0.0
  %1996 = vmatprep.subr.mxu0 0.0
  %1997 = vmatpush1.msra.mxu0 0.0
  %1998 = vmatprep.mubr.f32.mxu0 0.0
  %1999 = vmatmul.mubr.f32.gmra.mrb[0].mxu0 %v1929
  %v2000 = vpop.f32.mrb[0].mxu0
  %v2001 = vadd.f32 0.0, %v2000
  %v2002 = vpop.f32.mrb[0].mxu0
  %2003 = vmatprep.mubr.f32.mxu0 0.0
  %2004 = vmatmul.mubr.f32.gmra.mrb[0].mxu0 %v1932
  %v2005 = vpop.f32.mrb[0].mxu0
  %v2006 = vadd.f32 0.0, %v2005
  %v2007 = vpop.f32.mrb[0].mxu0
  %2008 = vdwg.mxu0
  %v2010 = vsel %vm851, %v1665, 0
  %v2013 = vsel %vm851, %v1670, 0
  %2015 = vmatprep.subr.mxu0 0.0
  %2016 = vmatpush1.msra.mxu0 %v841
  %2017 = vmatprep.subr.mxu0 0.0
  %2018 = vmatpush1.msra.mxu0 0.0
  %2019 = vmatprep.subr.mxu0 0.0
  %2020 = vmatpush1.msra.mxu0 0.0
  %2021 = vmatprep.subr.mxu0 0.0
  %2022 = vmatpush1.msra.mxu0 0.0
  %2023 = vmatprep.subr.mxu0 0.0
  %2024 = vmatpush1.msra.mxu0 0.0
  %2025 = vmatprep.subr.mxu0 0.0
  %2026 = vmatpush1.msra.mxu0 0.0
  %2027 = vmatprep.subr.mxu0 0.0
  %2028 = vmatpush1.msra.mxu0 0.0
  %2029 = vmatprep.subr.mxu0 0.0
  %2030 = vmatpush1.msra.mxu0 0.0
  %2031 = vmatprep.subr.mxu0 0.0
  %2032 = vmatpush1.msra.mxu0 0.0
  %2033 = vmatprep.subr.mxu0 0.0
  %2034 = vmatpush1.msra.mxu0 0.0
  %2035 = vmatprep.subr.mxu0 0.0
  %2036 = vmatpush1.msra.mxu0 0.0
  %2037 = vmatprep.subr.mxu0 0.0
  %2038 = vmatpush1.msra.mxu0 0.0
  %2039 = vmatprep.subr.mxu0 0.0
  %2040 = vmatpush1.msra.mxu0 0.0
  %2041 = vmatprep.subr.mxu0 0.0
  %2042 = vmatpush1.msra.mxu0 0.0
  %2043 = vmatprep.subr.mxu0 0.0
  %2044 = vmatpush1.msra.mxu0 0.0
  %2045 = vmatprep.subr.mxu0 0.0
  %2046 = vmatpush1.msra.mxu0 0.0
  %2047 = vmatprep.subr.mxu0 0.0
  %2048 = vmatpush1.msra.mxu0 0.0
  %2049 = vmatprep.subr.mxu0 0.0
  %2050 = vmatpush1.msra.mxu0 0.0
  %2051 = vmatprep.subr.mxu0 0.0
  %2052 = vmatpush1.msra.mxu0 0.0
  %2053 = vmatprep.subr.mxu0 0.0
  %2054 = vmatpush1.msra.mxu0 0.0
  %2055 = vmatprep.subr.mxu0 0.0
  %2056 = vmatpush1.msra.mxu0 0.0
  %2057 = vmatprep.subr.mxu0 0.0
  %2058 = vmatpush1.msra.mxu0 0.0
  %2059 = vmatprep.subr.mxu0 0.0
  %2060 = vmatpush1.msra.mxu0 0.0
  %2061 = vmatprep.subr.mxu0 0.0
  %2062 = vmatpush1.msra.mxu0 0.0
  %2063 = vmatprep.subr.mxu0 0.0
  %2064 = vmatpush1.msra.mxu0 0.0
  %2065 = vmatprep.subr.mxu0 0.0
  %2066 = vmatpush1.msra.mxu0 0.0
  %2067 = vmatprep.subr.mxu0 0.0
  %2068 = vmatpush1.msra.mxu0 0.0
  %2069 = vmatprep.subr.mxu0 0.0
  %2070 = vmatpush1.msra.mxu0 0.0
  %2071 = vmatprep.subr.mxu0 0.0
  %2072 = vmatpush1.msra.mxu0 0.0
  %2073 = vmatprep.subr.mxu0 0.0
  %2074 = vmatpush1.msra.mxu0 0.0
  %2075 = vmatprep.subr.mxu0 0.0
  %2076 = vmatpush1.msra.mxu0 0.0
  %2077 = vmatprep.subr.mxu0 0.0
  %2078 = vmatpush1.msra.mxu0 0.0
  %2079 = vmatprep.mubr.f32.mxu0 0.0
  %2080 = vmatmul.mubr.f32.gmra.mrb[0].mxu0 %v2010
  %v2081 = vpop.f32.mrb[0].mxu0
  %v2082 = vadd.f32 0.0, %v2081
  %v2083 = vpop.f32.mrb[0].mxu0
  %2084 = vmatprep.mubr.f32.mxu0 0.0
  %2085 = vmatmul.mubr.f32.gmra.mrb[0].mxu0 %v2013
  %v2086 = vpop.f32.mrb[0].mxu0
  %v2087 = vadd.f32 0.0, %v2086
  %v2088 = vpop.f32.mrb[0].mxu0
  %2089 = vdwg.mxu0
  %v2091 = vsel %vm851, %v1752, 0
  %v2094 = vsel %vm851, %v1757, 0
  %2096 = vmatprep.subr.mxu0 0.0
  %2097 = vmatpush1.msra.mxu0 %v842
  %2098 = vmatprep.subr.mxu0 0.0
  %2099 = vmatpush1.msra.mxu0 0.0
  %2100 = vmatprep.subr.mxu0 0.0
  %2101 = vmatpush1.msra.mxu0 0.0
  %2102 = vmatprep.subr.mxu0 0.0
  %2103 = vmatpush1.msra.mxu0 0.0
  %2104 = vmatprep.subr.mxu0 0.0
  %2105 = vmatpush1.msra.mxu0 0.0
  %2106 = vmatprep.subr.mxu0 0.0
  %2107 = vmatpush1.msra.mxu0 0.0
  %2108 = vmatprep.subr.mxu0 0.0
  %2109 = vmatpush1.msra.mxu0 0.0
  %2110 = vmatprep.subr.mxu0 0.0
  %2111 = vmatpush1.msra.mxu0 0.0
  %2112 = vmatprep.subr.mxu0 0.0
  %2113 = vmatpush1.msra.mxu0 0.0
  %2114 = vmatprep.subr.mxu0 0.0
  %2115 = vmatpush1.msra.mxu0 0.0
  %2116 = vmatprep.subr.mxu0 0.0
  %2117 = vmatpush1.msra.mxu0 0.0
  %2118 = vmatprep.subr.mxu0 0.0
  %2119 = vmatpush1.msra.mxu0 0.0
  %2120 = vmatprep.subr.mxu0 0.0
  %2121 = vmatpush1.msra.mxu0 0.0
  %2122 = vmatprep.subr.mxu0 0.0
  %2123 = vmatpush1.msra.mxu0 0.0
  %2124 = vmatprep.subr.mxu0 0.0
  %2125 = vmatpush1.msra.mxu0 0.0
  %2126 = vmatprep.subr.mxu0 0.0
  %2127 = vmatpush1.msra.mxu0 0.0
  %2128 = vmatprep.subr.mxu0 0.0
  %2129 = vmatpush1.msra.mxu0 0.0
  %2130 = vmatprep.subr.mxu0 0.0
  %2131 = vmatpush1.msra.mxu0 0.0
  %2132 = vmatprep.subr.mxu0 0.0
  %2133 = vmatpush1.msra.mxu0 0.0
  %2134 = vmatprep.subr.mxu0 0.0
  %2135 = vmatpush1.msra.mxu0 0.0
  %2136 = vmatprep.subr.mxu0 0.0
  %2137 = vmatpush1.msra.mxu0 0.0
  %2138 = vmatprep.subr.mxu0 0.0
  %2139 = vmatpush1.msra.mxu0 0.0
  %2140 = vmatprep.subr.mxu0 0.0
  %2141 = vmatpush1.msra.mxu0 0.0
  %2142 = vmatprep.subr.mxu0 0.0
  %2143 = vmatpush1.msra.mxu0 0.0
  %2144 = vmatprep.subr.mxu0 0.0
  %2145 = vmatpush1.msra.mxu0 0.0
  %2146 = vmatprep.subr.mxu0 0.0
  %2147 = vmatpush1.msra.mxu0 0.0
  %2148 = vmatprep.subr.mxu0 0.0
  %2149 = vmatpush1.msra.mxu0 0.0
  %2150 = vmatprep.subr.mxu0 0.0
  %2151 = vmatpush1.msra.mxu0 0.0
  %2152 = vmatprep.subr.mxu0 0.0
  %2153 = vmatpush1.msra.mxu0 0.0
  %2154 = vmatprep.subr.mxu0 0.0
  %2155 = vmatpush1.msra.mxu0 0.0
  %2156 = vmatprep.subr.mxu0 0.0
  %2157 = vmatpush1.msra.mxu0 0.0
  %2158 = vmatprep.subr.mxu0 0.0
  %2159 = vmatpush1.msra.mxu0 0.0
  %2160 = vmatprep.mubr.f32.mxu0 0.0
  %2161 = vmatmul.mubr.f32.gmra.mrb[0].mxu0 %v2091
  %v2162 = vpop.f32.mrb[0].mxu0
  %v2163 = vadd.f32 0.0, %v2162
  %v2164 = vpop.f32.mrb[0].mxu0
  %2165 = vmatprep.mubr.f32.mxu0 0.0
  %2166 = vmatmul.mubr.f32.gmra.mrb[0].mxu0 %v2094
  %v2167 = vpop.f32.mrb[0].mxu0
  %v2168 = vadd.f32 0.0, %v2167
  %v2169 = vpop.f32.mrb[0].mxu0
  %2170 = vdwg.mxu0
  %v2172 = vsel %vm851, %v1839, 0
  %v2175 = vsel %vm851, %v1844, 0
  %2177 = vmatprep.subr.mxu0 0.0
  %2178 = vmatpush1.msra.mxu0 %v843
  %2179 = vmatprep.subr.mxu0 0.0
  %2180 = vmatpush1.msra.mxu0 0.0
  %2181 = vmatprep.subr.mxu0 0.0
  %2182 = vmatpush1.msra.mxu0 0.0
  %2183 = vmatprep.subr.mxu0 0.0
  %2184 = vmatpush1.msra.mxu0 0.0
  %2185 = vmatprep.subr.mxu0 0.0
  %2186 = vmatpush1.msra.mxu0 0.0
  %2187 = vmatprep.subr.mxu0 0.0
  %2188 = vmatpush1.msra.mxu0 0.0
  %2189 = vmatprep.subr.mxu0 0.0
  %2190 = vmatpush1.msra.mxu0 0.0
  %2191 = vmatprep.subr.mxu0 0.0
  %2192 = vmatpush1.msra.mxu0 0.0
  %2193 = vmatprep.subr.mxu0 0.0
  %2194 = vmatpush1.msra.mxu0 0.0
  %2195 = vmatprep.subr.mxu0 0.0
  %2196 = vmatpush1.msra.mxu0 0.0
  %2197 = vmatprep.subr.mxu0 0.0
  %2198 = vmatpush1.msra.mxu0 0.0
  %2199 = vmatprep.subr.mxu0 0.0
  %2200 = vmatpush1.msra.mxu0 0.0
  %2201 = vmatprep.subr.mxu0 0.0
  %2202 = vmatpush1.msra.mxu0 0.0
  %2203 = vmatprep.subr.mxu0 0.0
  %2204 = vmatpush1.msra.mxu0 0.0
  %2205 = vmatprep.subr.mxu0 0.0
  %2206 = vmatpush1.msra.mxu0 0.0
  %2207 = vmatprep.subr.mxu0 0.0
  %2208 = vmatpush1.msra.mxu0 0.0
  %2209 = vmatprep.subr.mxu0 0.0
  %2210 = vmatpush1.msra.mxu0 0.0
  %2211 = vmatprep.subr.mxu0 0.0
  %2212 = vmatpush1.msra.mxu0 0.0
  %2213 = vmatprep.subr.mxu0 0.0
  %2214 = vmatpush1.msra.mxu0 0.0
  %2215 = vmatprep.subr.mxu0 0.0
  %2216 = vmatpush1.msra.mxu0 0.0
  %2217 = vmatprep.subr.mxu0 0.0
  %2218 = vmatpush1.msra.mxu0 0.0
  %2219 = vmatprep.subr.mxu0 0.0
  %2220 = vmatpush1.msra.mxu0 0.0
  %2221 = vmatprep.subr.mxu0 0.0
  %2222 = vmatpush1.msra.mxu0 0.0
  %2223 = vmatprep.subr.mxu0 0.0
  %2224 = vmatpush1.msra.mxu0 0.0
  %2225 = vmatprep.subr.mxu0 0.0
  %2226 = vmatpush1.msra.mxu0 0.0
  %2227 = vmatprep.subr.mxu0 0.0
  %2228 = vmatpush1.msra.mxu0 0.0
  %2229 = vmatprep.subr.mxu0 0.0
  %2230 = vmatpush1.msra.mxu0 0.0
  %2231 = vmatprep.subr.mxu0 0.0
  %2232 = vmatpush1.msra.mxu0 0.0
  %2233 = vmatprep.subr.mxu0 0.0
  %2234 = vmatpush1.msra.mxu0 0.0
  %2235 = vmatprep.subr.mxu0 0.0
  %2236 = vmatpush1.msra.mxu0 0.0
  %2237 = vmatprep.subr.mxu0 0.0
  %2238 = vmatpush1.msra.mxu0 0.0
  %2239 = vmatprep.subr.mxu0 0.0
  %2240 = vmatpush1.msra.mxu0 0.0
  %2241 = vmatprep.mubr.f32.mxu0 0.0
  %2242 = vmatmul.mubr.f32.gmra.mrb[0].mxu0 %v2172
  %v2243 = vpop.f32.mrb[0].mxu0
  %v2244 = vadd.f32 0.0, %v2243
  %v2245 = vpop.f32.mrb[0].mxu0
  %2246 = vmatprep.mubr.f32.mxu0 0.0
  %2247 = vmatmul.mubr.f32.gmra.mrb[0].mxu0 %v2175
  %v2248 = vpop.f32.mrb[0].mxu0
  %v2249 = vadd.f32 0.0, %v2248
  %v2250 = vpop.f32.mrb[0].mxu0
  %2251 = vdwg.mxu0
  %v2252 = vsel %vm60, %v1920, 0.0
  %v2253 = vsel %vm60, %v2001, 0.0
  %v2254 = vadd.f32 %v2252, %v2253
  %v2255 = vsel %vm60, %v2082, 0.0
  %v2256 = vadd.f32 %v2254, %v2255
  %v2257 = vsel %vm60, %v2163, 0.0
  %v2258 = vadd.f32 %v2256, %v2257
  %v2259 = vsel %vm60, %v2244, 0.0
  %v2260 = vadd.f32 %v2258, %v2259
  %v2261 = vsel %vm60, %v1925, 0.0
  %v2262 = vsel %vm60, %v2006, 0.0
  %v2263 = vadd.f32 %v2261, %v2262
  %v2264 = vsel %vm60, %v2087, 0.0
  %v2265 = vadd.f32 %v2263, %v2264
  %v2266 = vsel %vm60, %v2168, 0.0
  %v2267 = vadd.f32 %v2265, %v2266
  %v2268 = vsel %vm60, %v2249, 0.0
  %v2269 = vadd.f32 %v2267, %v2268
  %v2271 = vlaneseq
  %v2272 = vshrl.u32 %v2271, 7
  %v2273 = vsub.s32 0, %v2272
  %v2274 = vrot.slane %v844, %v2273
  %v2276 = vadd.f32 %v2260, %v2274
  %v2277 = vadd.f32 %v2269, %v2274
  %v2278 = vld [vmem:[%s5] sm:$0xff]
  %v2279 = vld [vmem:[%s5 + $0x8] sm:$0xff]
  %v2280 = vld [vmem:[%s5 + $0x10] sm:$0xff]
  %v2281 = vld [vmem:[%s5 + $0x18] sm:$0xff]
  %v2282 = vld [vmem:[%s5 + $0x20] sm:$0xff]
  %s2283 = scalar_lea.vmem %s6, 1
  %v2284 = vld [vmem:[%s2283] sm:$0x1]
  %2285 = vrot.lane.b32.xlu0 %v134, 120
  %v2286 = vpop.permute.xlu0 %2285
  %2287 = vrot.lane.b32.xlu0 %v139, 120
  %v2288 = vpop.permute.xlu0 %2287
  %v2289 = vsel %vm851, %v531, 0
  %v2291 = vsel %vm851, %v536, 0
  %v2293 = vsel %vm851, %v2286, 0
  %v2295 = vsel %vm851, %v2288, 0
  %2297 = vmatprep.subr.mxu0 0.0
  %2298 = vmatpush1.xpose.msra.mxu0 %v2293
  %2299 = vmatprep.subr.mxu0 0.0
  %2300 = vmatpush1.xpose.msra.mxu0 %v2295
  %2301 = vmatprep.subr.mxu0 0.0
  %2302 = vmatpush1.xpose.msra.mxu0 0.0
  %2303 = vmatprep.subr.mxu0 0.0
  %2304 = vmatpush1.xpose.msra.mxu0 0.0
  %2305 = vmatprep.subr.mxu0 0.0
  %2306 = vmatpush1.xpose.msra.mxu0 0.0
  %2307 = vmatprep.subr.mxu0 0.0
  %2308 = vmatpush1.xpose.msra.mxu0 0.0
  %2309 = vmatprep.subr.mxu0 0.0
  %2310 = vmatpush1.xpose.msra.mxu0 0.0
  %2311 = vmatprep.subr.mxu0 0.0
  %2312 = vmatpush1.xpose.msra.mxu0 0.0
  %2313 = vmatprep.subr.mxu0 0.0
  %2314 = vmatpush1.xpose.msra.mxu0 0.0
  %2315 = vmatprep.subr.mxu0 0.0
  %2316 = vmatpush1.xpose.msra.mxu0 0.0
  %2317 = vmatprep.subr.mxu0 0.0
  %2318 = vmatpush1.xpose.msra.mxu0 0.0
  %2319 = vmatprep.subr.mxu0 0.0
  %2320 = vmatpush1.xpose.msra.mxu0 0.0
  %2321 = vmatprep.subr.mxu0 0.0
  %2322 = vmatpush1.xpose.msra.mxu0 0.0
  %2323 = vmatprep.subr.mxu0 0.0
  %2324 = vmatpush1.xpose.msra.mxu0 0.0
  %2325 = vmatprep.subr.mxu0 0.0
  %2326 = vmatpush1.xpose.msra.mxu0 0.0
  %2327 = vmatprep.subr.mxu0 0.0
  %2328 = vmatpush1.xpose.msra.mxu0 0.0
  %2329 = vmatprep.subr.mxu0 0.0
  %2330 = vmatpush1.xpose.msra.mxu0 0.0
  %2331 = vmatprep.subr.mxu0 0.0
  %2332 = vmatpush1.xpose.msra.mxu0 0.0
  %2333 = vmatprep.subr.mxu0 0.0
  %2334 = vmatpush1.xpose.msra.mxu0 0.0
  %2335 = vmatprep.subr.mxu0 0.0
  %2336 = vmatpush1.xpose.msra.mxu0 0.0
  %2337 = vmatprep.subr.mxu0 0.0
  %2338 = vmatpush1.xpose.msra.mxu0 0.0
  %2339 = vmatprep.subr.mxu0 0.0
  %2340 = vmatpush1.xpose.msra.mxu0 0.0
  %2341 = vmatprep.subr.mxu0 0.0
  %2342 = vmatpush1.xpose.msra.mxu0 0.0
  %2343 = vmatprep.subr.mxu0 0.0
  %2344 = vmatpush1.xpose.msra.mxu0 0.0
  %2345 = vmatprep.subr.mxu0 0.0
  %2346 = vmatpush1.xpose.msra.mxu0 0.0
  %2347 = vmatprep.subr.mxu0 0.0
  %2348 = vmatpush1.xpose.msra.mxu0 0.0
  %2349 = vmatprep.subr.mxu0 0.0
  %2350 = vmatpush1.xpose.msra.mxu0 0.0
  %2351 = vmatprep.subr.mxu0 0.0
  %2352 = vmatpush1.xpose.msra.mxu0 0.0
  %2353 = vmatprep.subr.mxu0 0.0
  %2354 = vmatpush1.xpose.msra.mxu0 0.0
  %2355 = vmatprep.subr.mxu0 0.0
  %2356 = vmatpush1.xpose.msra.mxu0 0.0
  %2357 = vmatprep.subr.mxu0 0.0
  %2358 = vmatpush1.xpose.msra.mxu0 0.0
  %2359 = vmatprep.subr.mxu0 0.0
  %2360 = vmatpush1.xpose.msra.mxu0 0.0
  %2361 = vmatprep.mubr.f32.mxu0 0.0
  %2362 = vmatmul.mubr.f32.gmra.mrb[0].mxu0 %v2289
  %v2363 = vpop.f32.mrb[0].mxu0
  %v2364 = vadd.f32 %v33, %v2363
  %v2365 = vpop.f32.mrb[0].mxu0
  %2366 = vmatprep.mubr.f32.mxu0 0.0
  %2367 = vmatmul.mubr.f32.gmra.mrb[0].mxu0 %v2291
  %v2368 = vpop.f32.mrb[0].mxu0
  %v2369 = vadd.f32 %v34, %v2368
  %v2370 = vpop.f32.mrb[0].mxu0
  %2371 = vdwg.mxu0
  %2372 = vrot.lane.b32.xlu0 %v209, 120
  %v2373 = vpop.permute.xlu0 %2372
  %2374 = vrot.lane.b32.xlu0 %v214, 120
  %v2375 = vpop.permute.xlu0 %2374
  %v2376 = vsel %vm851, %v606, 0
  %v2378 = vsel %vm851, %v611, 0
  %v2380 = vsel %vm851, %v2373, 0
  %v2382 = vsel %vm851, %v2375, 0
  %2384 = vmatprep.subr.mxu0 0.0
  %2385 = vmatpush1.xpose.msra.mxu0 %v2380
  %2386 = vmatprep.subr.mxu0 0.0
  %2387 = vmatpush1.xpose.msra.mxu0 %v2382
  %2388 = vmatprep.subr.mxu0 0.0
  %2389 = vmatpush1.xpose.msra.mxu0 0.0
  %2390 = vmatprep.subr.mxu0 0.0
  %2391 = vmatpush1.xpose.msra.mxu0 0.0
  %2392 = vmatprep.subr.mxu0 0.0
  %2393 = vmatpush1.xpose.msra.mxu0 0.0
  %2394 = vmatprep.subr.mxu0 0.0
  %2395 = vmatpush1.xpose.msra.mxu0 0.0
  %2396 = vmatprep.subr.mxu0 0.0
  %2397 = vmatpush1.xpose.msra.mxu0 0.0
  %2398 = vmatprep.subr.mxu0 0.0
  %2399 = vmatpush1.xpose.msra.mxu0 0.0
  %2400 = vmatprep.subr.mxu0 0.0
  %2401 = vmatpush1.xpose.msra.mxu0 0.0
  %2402 = vmatprep.subr.mxu0 0.0
  %2403 = vmatpush1.xpose.msra.mxu0 0.0
  %2404 = vmatprep.subr.mxu0 0.0
  %2405 = vmatpush1.xpose.msra.mxu0 0.0
  %2406 = vmatprep.subr.mxu0 0.0
  %2407 = vmatpush1.xpose.msra.mxu0 0.0
  %2408 = vmatprep.subr.mxu0 0.0
  %2409 = vmatpush1.xpose.msra.mxu0 0.0
  %2410 = vmatprep.subr.mxu0 0.0
  %2411 = vmatpush1.xpose.msra.mxu0 0.0
  %2412 = vmatprep.subr.mxu0 0.0
  %2413 = vmatpush1.xpose.msra.mxu0 0.0
  %2414 = vmatprep.subr.mxu0 0.0
  %2415 = vmatpush1.xpose.msra.mxu0 0.0
  %2416 = vmatprep.subr.mxu0 0.0
  %2417 = vmatpush1.xpose.msra.mxu0 0.0
  %2418 = vmatprep.subr.mxu0 0.0
  %2419 = vmatpush1.xpose.msra.mxu0 0.0
  %2420 = vmatprep.subr.mxu0 0.0
  %2421 = vmatpush1.xpose.msra.mxu0 0.0
  %2422 = vmatprep.subr.mxu0 0.0
  %2423 = vmatpush1.xpose.msra.mxu0 0.0
  %2424 = vmatprep.subr.mxu0 0.0
  %2425 = vmatpush1.xpose.msra.mxu0 0.0
  %2426 = vmatprep.subr.mxu0 0.0
  %2427 = vmatpush1.xpose.msra.mxu0 0.0
  %2428 = vmatprep.subr.mxu0 0.0
  %2429 = vmatpush1.xpose.msra.mxu0 0.0
  %2430 = vmatprep.subr.mxu0 0.0
  %2431 = vmatpush1.xpose.msra.mxu0 0.0
  %2432 = vmatprep.subr.mxu0 0.0
  %2433 = vmatpush1.xpose.msra.mxu0 0.0
  %2434 = vmatprep.subr.mxu0 0.0
  %2435 = vmatpush1.xpose.msra.mxu0 0.0
  %2436 = vmatprep.subr.mxu0 0.0
  %2437 = vmatpush1.xpose.msra.mxu0 0.0
  %2438 = vmatprep.subr.mxu0 0.0
  %2439 = vmatpush1.xpose.msra.mxu0 0.0
  %2440 = vmatprep.subr.mxu0 0.0
  %2441 = vmatpush1.xpose.msra.mxu0 0.0
  %2442 = vmatprep.subr.mxu0 0.0
  %2443 = vmatpush1.xpose.msra.mxu0 0.0
  %2444 = vmatprep.subr.mxu0 0.0
  %2445 = vmatpush1.xpose.msra.mxu0 0.0
  %2446 = vmatprep.subr.mxu0 0.0
  %2447 = vmatpush1.xpose.msra.mxu0 0.0
  %2448 = vmatprep.mubr.f32.mxu0 0.0
  %2449 = vmatmul.mubr.f32.gmra.mrb[0].mxu0 %v2376
  %v2450 = vpop.f32.mrb[0].mxu0
  %v2451 = vadd.f32 %v33, %v2450
  %v2452 = vpop.f32.mrb[0].mxu0
  %2453 = vmatprep.mubr.f32.mxu0 0.0
  %2454 = vmatmul.mubr.f32.gmra.mrb[0].mxu0 %v2378
  %v2455 = vpop.f32.mrb[0].mxu0
  %v2456 = vadd.f32 %v34, %v2455
  %v2457 = vpop.f32.mrb[0].mxu0
  %2458 = vdwg.mxu0
  %2459 = vrot.lane.b32.xlu0 %v284, 120
  %v2460 = vpop.permute.xlu0 %2459
  %2461 = vrot.lane.b32.xlu0 %v289, 120
  %v2462 = vpop.permute.xlu0 %2461
  %v2463 = vsel %vm851, %v681, 0
  %v2465 = vsel %vm851, %v686, 0
  %v2467 = vsel %vm851, %v2460, 0
  %v2469 = vsel %vm851, %v2462, 0
  %2471 = vmatprep.subr.mxu0 0.0
  %2472 = vmatpush1.xpose.msra.mxu0 %v2467
  %2473 = vmatprep.subr.mxu0 0.0
  %2474 = vmatpush1.xpose.msra.mxu0 %v2469
  %2475 = vmatprep.subr.mxu0 0.0
  %2476 = vmatpush1.xpose.msra.mxu0 0.0
  %2477 = vmatprep.subr.mxu0 0.0
  %2478 = vmatpush1.xpose.msra.mxu0 0.0
  %2479 = vmatprep.subr.mxu0 0.0
  %2480 = vmatpush1.xpose.msra.mxu0 0.0
  %2481 = vmatprep.subr.mxu0 0.0
  %2482 = vmatpush1.xpose.msra.mxu0 0.0
  %2483 = vmatprep.subr.mxu0 0.0
  %2484 = vmatpush1.xpose.msra.mxu0 0.0
  %2485 = vmatprep.subr.mxu0 0.0
  %2486 = vmatpush1.xpose.msra.mxu0 0.0
  %2487 = vmatprep.subr.mxu0 0.0
  %2488 = vmatpush1.xpose.msra.mxu0 0.0
  %2489 = vmatprep.subr.mxu0 0.0
  %2490 = vmatpush1.xpose.msra.mxu0 0.0
  %2491 = vmatprep.subr.mxu0 0.0
  %2492 = vmatpush1.xpose.msra.mxu0 0.0
  %2493 = vmatprep.subr.mxu0 0.0
  %2494 = vmatpush1.xpose.msra.mxu0 0.0
  %2495 = vmatprep.subr.mxu0 0.0
  %2496 = vmatpush1.xpose.msra.mxu0 0.0
  %2497 = vmatprep.subr.mxu0 0.0
  %2498 = vmatpush1.xpose.msra.mxu0 0.0
  %2499 = vmatprep.subr.mxu0 0.0
  %2500 = vmatpush1.xpose.msra.mxu0 0.0
  %2501 = vmatprep.subr.mxu0 0.0
  %2502 = vmatpush1.xpose.msra.mxu0 0.0
  %2503 = vmatprep.subr.mxu0 0.0
  %2504 = vmatpush1.xpose.msra.mxu0 0.0
  %2505 = vmatprep.subr.mxu0 0.0
  %2506 = vmatpush1.xpose.msra.mxu0 0.0
  %2507 = vmatprep.subr.mxu0 0.0
  %2508 = vmatpush1.xpose.msra.mxu0 0.0
  %2509 = vmatprep.subr.mxu0 0.0
  %2510 = vmatpush1.xpose.msra.mxu0 0.0
  %2511 = vmatprep.subr.mxu0 0.0
  %2512 = vmatpush1.xpose.msra.mxu0 0.0
  %2513 = vmatprep.subr.mxu0 0.0
  %2514 = vmatpush1.xpose.msra.mxu0 0.0
  %2515 = vmatprep.subr.mxu0 0.0
  %2516 = vmatpush1.xpose.msra.mxu0 0.0
  %2517 = vmatprep.subr.mxu0 0.0
  %2518 = vmatpush1.xpose.msra.mxu0 0.0
  %2519 = vmatprep.subr.mxu0 0.0
  %2520 = vmatpush1.xpose.msra.mxu0 0.0
  %2521 = vmatprep.subr.mxu0 0.0
  %2522 = vmatpush1.xpose.msra.mxu0 0.0
  %2523 = vmatprep.subr.mxu0 0.0
  %2524 = vmatpush1.xpose.msra.mxu0 0.0
  %2525 = vmatprep.subr.mxu0 0.0
  %2526 = vmatpush1.xpose.msra.mxu0 0.0
  %2527 = vmatprep.subr.mxu0 0.0
  %2528 = vmatpush1.xpose.msra.mxu0 0.0
  %2529 = vmatprep.subr.mxu0 0.0
  %2530 = vmatpush1.xpose.msra.mxu0 0.0
  %2531 = vmatprep.subr.mxu0 0.0
  %2532 = vmatpush1.xpose.msra.mxu0 0.0
  %2533 = vmatprep.subr.mxu0 0.0
  %2534 = vmatpush1.xpose.msra.mxu0 0.0
  %2535 = vmatprep.mubr.f32.mxu0 0.0
  %2536 = vmatmul.mubr.f32.gmra.mrb[0].mxu0 %v2463
  %v2537 = vpop.f32.mrb[0].mxu0
  %v2538 = vadd.f32 %v33, %v2537
  %v2539 = vpop.f32.mrb[0].mxu0
  %2540 = vmatprep.mubr.f32.mxu0 0.0
  %2541 = vmatmul.mubr.f32.gmra.mrb[0].mxu0 %v2465
  %v2542 = vpop.f32.mrb[0].mxu0
  %v2543 = vadd.f32 %v34, %v2542
  %v2544 = vpop.f32.mrb[0].mxu0
  %2545 = vdwg.mxu0
  %2546 = vrot.lane.b32.xlu0 %v359, 120
  %v2547 = vpop.permute.xlu0 %2546
  %2548 = vrot.lane.b32.xlu0 %v364, 120
  %v2549 = vpop.permute.xlu0 %2548
  %v2550 = vsel %vm851, %v756, 0
  %v2552 = vsel %vm851, %v761, 0
  %v2554 = vsel %vm851, %v2547, 0
  %v2556 = vsel %vm851, %v2549, 0
  %2558 = vmatprep.subr.mxu0 0.0
  %2559 = vmatpush1.xpose.msra.mxu0 %v2554
  %2560 = vmatprep.subr.mxu0 0.0
  %2561 = vmatpush1.xpose.msra.mxu0 %v2556
  %2562 = vmatprep.subr.mxu0 0.0
  %2563 = vmatpush1.xpose.msra.mxu0 0.0
  %2564 = vmatprep.subr.mxu0 0.0
  %2565 = vmatpush1.xpose.msra.mxu0 0.0
  %2566 = vmatprep.subr.mxu0 0.0
  %2567 = vmatpush1.xpose.msra.mxu0 0.0
  %2568 = vmatprep.subr.mxu0 0.0
  %2569 = vmatpush1.xpose.msra.mxu0 0.0
  %2570 = vmatprep.subr.mxu0 0.0
  %2571 = vmatpush1.xpose.msra.mxu0 0.0
  %2572 = vmatprep.subr.mxu0 0.0
  %2573 = vmatpush1.xpose.msra.mxu0 0.0
  %2574 = vmatprep.subr.mxu0 0.0
  %2575 = vmatpush1.xpose.msra.mxu0 0.0
  %2576 = vmatprep.subr.mxu0 0.0
  %2577 = vmatpush1.xpose.msra.mxu0 0.0
  %2578 = vmatprep.subr.mxu0 0.0
  %2579 = vmatpush1.xpose.msra.mxu0 0.0
  %2580 = vmatprep.subr.mxu0 0.0
  %2581 = vmatpush1.xpose.msra.mxu0 0.0
  %2582 = vmatprep.subr.mxu0 0.0
  %2583 = vmatpush1.xpose.msra.mxu0 0.0
  %2584 = vmatprep.subr.mxu0 0.0
  %2585 = vmatpush1.xpose.msra.mxu0 0.0
  %2586 = vmatprep.subr.mxu0 0.0
  %2587 = vmatpush1.xpose.msra.mxu0 0.0
  %2588 = vmatprep.subr.mxu0 0.0
  %2589 = vmatpush1.xpose.msra.mxu0 0.0
  %2590 = vmatprep.subr.mxu0 0.0
  %2591 = vmatpush1.xpose.msra.mxu0 0.0
  %2592 = vmatprep.subr.mxu0 0.0
  %2593 = vmatpush1.xpose.msra.mxu0 0.0
  %2594 = vmatprep.subr.mxu0 0.0
  %2595 = vmatpush1.xpose.msra.mxu0 0.0
  %2596 = vmatprep.subr.mxu0 0.0
  %2597 = vmatpush1.xpose.msra.mxu0 0.0
  %2598 = vmatprep.subr.mxu0 0.0
  %2599 = vmatpush1.xpose.msra.mxu0 0.0
  %2600 = vmatprep.subr.mxu0 0.0
  %2601 = vmatpush1.xpose.msra.mxu0 0.0
  %2602 = vmatprep.subr.mxu0 0.0
  %2603 = vmatpush1.xpose.msra.mxu0 0.0
  %2604 = vmatprep.subr.mxu0 0.0
  %2605 = vmatpush1.xpose.msra.mxu0 0.0
  %2606 = vmatprep.subr.mxu0 0.0
  %2607 = vmatpush1.xpose.msra.mxu0 0.0
  %2608 = vmatprep.subr.mxu0 0.0
  %2609 = vmatpush1.xpose.msra.mxu0 0.0
  %2610 = vmatprep.subr.mxu0 0.0
  %2611 = vmatpush1.xpose.msra.mxu0 0.0
  %2612 = vmatprep.subr.mxu0 0.0
  %2613 = vmatpush1.xpose.msra.mxu0 0.0
  %2614 = vmatprep.subr.mxu0 0.0
  %2615 = vmatpush1.xpose.msra.mxu0 0.0
  %2616 = vmatprep.subr.mxu0 0.0
  %2617 = vmatpush1.xpose.msra.mxu0 0.0
  %2618 = vmatprep.subr.mxu0 0.0
  %2619 = vmatpush1.xpose.msra.mxu0 0.0
  %2620 = vmatprep.subr.mxu0 0.0
  %2621 = vmatpush1.xpose.msra.mxu0 0.0
  %2622 = vmatprep.mubr.f32.mxu0 0.0
  %2623 = vmatmul.mubr.f32.gmra.mrb[0].mxu0 %v2550
  %v2624 = vpop.f32.mrb[0].mxu0
  %v2625 = vadd.f32 %v33, %v2624
  %v2626 = vpop.f32.mrb[0].mxu0
  %2627 = vmatprep.mubr.f32.mxu0 0.0
  %2628 = vmatmul.mubr.f32.gmra.mrb[0].mxu0 %v2552
  %v2629 = vpop.f32.mrb[0].mxu0
  %v2630 = vadd.f32 %v34, %v2629
  %v2631 = vpop.f32.mrb[0].mxu0
  %2632 = vdwg.mxu0
  %2633 = vrot.lane.b32.xlu0 %v434, 120
  %v2634 = vpop.permute.xlu0 %2633
  %2635 = vrot.lane.b32.xlu0 %v439, 120
  %v2636 = vpop.permute.xlu0 %2635
  %v2637 = vsel %vm851, %v831, 0
  %v2639 = vsel %vm851, %v836, 0
  %v2641 = vsel %vm851, %v2634, 0
  %v2643 = vsel %vm851, %v2636, 0
  %2645 = vmatprep.subr.mxu0 0.0
  %2646 = vmatpush1.xpose.msra.mxu0 %v2641
  %2647 = vmatprep.subr.mxu0 0.0
  %2648 = vmatpush1.xpose.msra.mxu0 %v2643
  %2649 = vmatprep.subr.mxu0 0.0
  %2650 = vmatpush1.xpose.msra.mxu0 0.0
  %2651 = vmatprep.subr.mxu0 0.0
  %2652 = vmatpush1.xpose.msra.mxu0 0.0
  %2653 = vmatprep.subr.mxu0 0.0
  %2654 = vmatpush1.xpose.msra.mxu0 0.0
  %2655 = vmatprep.subr.mxu0 0.0
  %2656 = vmatpush1.xpose.msra.mxu0 0.0
  %2657 = vmatprep.subr.mxu0 0.0
  %2658 = vmatpush1.xpose.msra.mxu0 0.0
  %2659 = vmatprep.subr.mxu0 0.0
  %2660 = vmatpush1.xpose.msra.mxu0 0.0
  %2661 = vmatprep.subr.mxu0 0.0
  %2662 = vmatpush1.xpose.msra.mxu0 0.0
  %2663 = vmatprep.subr.mxu0 0.0
  %2664 = vmatpush1.xpose.msra.mxu0 0.0
  %2665 = vmatprep.subr.mxu0 0.0
  %2666 = vmatpush1.xpose.msra.mxu0 0.0
  %2667 = vmatprep.subr.mxu0 0.0
  %2668 = vmatpush1.xpose.msra.mxu0 0.0
  %2669 = vmatprep.subr.mxu0 0.0
  %2670 = vmatpush1.xpose.msra.mxu0 0.0
  %2671 = vmatprep.subr.mxu0 0.0
  %2672 = vmatpush1.xpose.msra.mxu0 0.0
  %2673 = vmatprep.subr.mxu0 0.0
  %2674 = vmatpush1.xpose.msra.mxu0 0.0
  %2675 = vmatprep.subr.mxu0 0.0
  %2676 = vmatpush1.xpose.msra.mxu0 0.0
  %2677 = vmatprep.subr.mxu0 0.0
  %2678 = vmatpush1.xpose.msra.mxu0 0.0
  %2679 = vmatprep.subr.mxu0 0.0
  %2680 = vmatpush1.xpose.msra.mxu0 0.0
  %2681 = vmatprep.subr.mxu0 0.0
  %2682 = vmatpush1.xpose.msra.mxu0 0.0
  %2683 = vmatprep.subr.mxu0 0.0
  %2684 = vmatpush1.xpose.msra.mxu0 0.0
  %2685 = vmatprep.subr.mxu0 0.0
  %2686 = vmatpush1.xpose.msra.mxu0 0.0
  %2687 = vmatprep.subr.mxu0 0.0
  %2688 = vmatpush1.xpose.msra.mxu0 0.0
  %2689 = vmatprep.subr.mxu0 0.0
  %2690 = vmatpush1.xpose.msra.mxu0 0.0
  %2691 = vmatprep.subr.mxu0 0.0
  %2692 = vmatpush1.xpose.msra.mxu0 0.0
  %2693 = vmatprep.subr.mxu0 0.0
  %2694 = vmatpush1.xpose.msra.mxu0 0.0
  %2695 = vmatprep.subr.mxu0 0.0
  %2696 = vmatpush1.xpose.msra.mxu0 0.0
  %2697 = vmatprep.subr.mxu0 0.0
  %2698 = vmatpush1.xpose.msra.mxu0 0.0
  %2699 = vmatprep.subr.mxu0 0.0
  %2700 = vmatpush1.xpose.msra.mxu0 0.0
  %2701 = vmatprep.subr.mxu0 0.0
  %2702 = vmatpush1.xpose.msra.mxu0 0.0
  %2703 = vmatprep.subr.mxu0 0.0
  %2704 = vmatpush1.xpose.msra.mxu0 0.0
  %2705 = vmatprep.subr.mxu0 0.0
  %2706 = vmatpush1.xpose.msra.mxu0 0.0
  %2707 = vmatprep.subr.mxu0 0.0
  %2708 = vmatpush1.xpose.msra.mxu0 0.0
  %2709 = vmatprep.mubr.f32.mxu0 0.0
  %2710 = vmatmul.mubr.f32.gmra.mrb[0].mxu0 %v2637
  %v2711 = vpop.f32.mrb[0].mxu0
  %v2712 = vadd.f32 %v33, %v2711
  %v2713 = vpop.f32.mrb[0].mxu0
  %2714 = vmatprep.mubr.f32.mxu0 0.0
  %2715 = vmatmul.mubr.f32.gmra.mrb[0].mxu0 %v2639
  %v2716 = vpop.f32.mrb[0].mxu0
  %v2717 = vadd.f32 %v34, %v2716
  %v2718 = vpop.f32.mrb[0].mxu0
  %2719 = vdwg.mxu0
  %v2720 = vsel %vm1301, %v2364, -inf
  %2721 = vmax.xlane.f32.xlu0 %v2720
  %v2722 = vpop.xlane.xlu0 %2721
  %v2723 = vsel %vm1301, %v2369, -inf
  %2724 = vmax.xlane.f32.xlu0 %v2723
  %v2725 = vpop.xlane.xlu0 %2724
  %v2726 = vsel %vm1301, %v2451, -inf
  %2727 = vmax.xlane.f32.xlu0 %v2726
  %v2728 = vpop.xlane.xlu0 %2727
  %v2729 = vsel %vm1301, %v2456, -inf
  %2730 = vmax.xlane.f32.xlu0 %v2729
  %v2731 = vpop.xlane.xlu0 %2730
  %v2732 = vsel %vm1301, %v2538, -inf
  %2733 = vmax.xlane.f32.xlu0 %v2732
  %v2734 = vpop.xlane.xlu0 %2733
  %v2735 = vsel %vm1301, %v2543, -inf
  %2736 = vmax.xlane.f32.xlu0 %v2735
  %v2737 = vpop.xlane.xlu0 %2736
  %v2738 = vsel %vm1301, %v2625, -inf
  %2739 = vmax.xlane.f32.xlu0 %v2738
  %v2740 = vpop.xlane.xlu0 %2739
  %v2741 = vsel %vm1301, %v2630, -inf
  %2742 = vmax.xlane.f32.xlu0 %v2741
  %v2743 = vpop.xlane.xlu0 %2742
  %v2744 = vsel %vm1301, %v2712, -inf
  %2745 = vmax.xlane.f32.xlu0 %v2744
  %v2746 = vpop.xlane.xlu0 %2745
  %v2747 = vsel %vm1301, %v2717, -inf
  %2748 = vmax.xlane.f32.xlu0 %v2747
  %v2749 = vpop.xlane.xlu0 %2748
  %v2750 = vsub.f32 %v2364, %v2722
  %v2751 = vsub.f32 %v2369, %v2725
  %v2752 = vsub.f32 %v2451, %v2728
  %v2753 = vsub.f32 %v2456, %v2731
  %v2754 = vsub.f32 %v2538, %v2734
  %v2755 = vsub.f32 %v2543, %v2737
  %v2756 = vsub.f32 %v2625, %v2740
  %v2757 = vsub.f32 %v2630, %v2743
  %v2758 = vsub.f32 %v2712, %v2746
  %v2759 = vsub.f32 %v2717, %v2749
  %v2760 = vmul.f32 %v2750, 1.442695
  %v2761 = vpow.pop %v2760
  %v2762 = vmul.f32 %v2751, 1.442695
  %v2763 = vpow.pop %v2762
  %v2764 = vmul.f32 %v2752, 1.442695
  %v2765 = vpow.pop %v2764
  %v2766 = vmul.f32 %v2753, 1.442695
  %v2767 = vpow.pop %v2766
  %v2768 = vmul.f32 %v2754, 1.442695
  %v2769 = vpow.pop %v2768
  %v2770 = vmul.f32 %v2755, 1.442695
  %v2771 = vpow.pop %v2770
  %v2772 = vmul.f32 %v2756, 1.442695
  %v2773 = vpow.pop %v2772
  %v2774 = vmul.f32 %v2757, 1.442695
  %v2775 = vpow.pop %v2774
  %v2776 = vmul.f32 %v2758, 1.442695
  %v2777 = vpow.pop %v2776
  %v2778 = vmul.f32 %v2759, 1.442695
  %v2779 = vpow.pop %v2778
  %v2780 = vsel %vm1301, %v2761, 0.0
  %2781 = vadd.xlane.f32.xlu0 %v2780
  %v2782 = vpop.xlane.xlu0 %2781
  %v2783 = vsel %vm1301, %v2763, 0.0
  %2784 = vadd.xlane.f32.xlu0 %v2783
  %v2785 = vpop.xlane.xlu0 %2784
  %v2786 = vsel %vm1301, %v2765, 0.0
  %2787 = vadd.xlane.f32.xlu0 %v2786
  %v2788 = vpop.xlane.xlu0 %2787
  %v2789 = vsel %vm1301, %v2767, 0.0
  %2790 = vadd.xlane.f32.xlu0 %v2789
  %v2791 = vpop.xlane.xlu0 %2790
  %v2792 = vsel %vm1301, %v2769, 0.0
  %2793 = vadd.xlane.f32.xlu0 %v2792
  %v2794 = vpop.xlane.xlu0 %2793
  %v2795 = vsel %vm1301, %v2771, 0.0
  %2796 = vadd.xlane.f32.xlu0 %v2795
  %v2797 = vpop.xlane.xlu0 %2796
  %v2798 = vsel %vm1301, %v2773, 0.0
  %2799 = vadd.xlane.f32.xlu0 %v2798
  %v2800 = vpop.xlane.xlu0 %2799
  %v2801 = vsel %vm1301, %v2775, 0.0
  %2802 = vadd.xlane.f32.xlu0 %v2801
  %v2803 = vpop.xlane.xlu0 %2802
  %v2804 = vsel %vm1301, %v2777, 0.0
  %2805 = vadd.xlane.f32.xlu0 %v2804
  %v2806 = vpop.xlane.xlu0 %2805
  %v2807 = vsel %vm1301, %v2779, 0.0
  %2808 = vadd.xlane.f32.xlu0 %v2807
  %v2809 = vpop.xlane.xlu0 %2808
  %v2810 = vrcp.pop %v2782
  %v2811 = vmul.f32 %v2761, %v2810
  %v2812 = vrcp.pop %v2785
  %v2813 = vmul.f32 %v2763, %v2812
  %v2814 = vrcp.pop %v2788
  %v2815 = vmul.f32 %v2765, %v2814
  %v2816 = vrcp.pop %v2791
  %v2817 = vmul.f32 %v2767, %v2816
  %v2818 = vrcp.pop %v2794
  %v2819 = vmul.f32 %v2769, %v2818
  %v2820 = vrcp.pop %v2797
  %v2821 = vmul.f32 %v2771, %v2820
  %v2822 = vrcp.pop %v2800
  %v2823 = vmul.f32 %v2773, %v2822
  %v2824 = vrcp.pop %v2803
  %v2825 = vmul.f32 %v2775, %v2824
  %v2826 = vrcp.pop %v2806
  %v2827 = vmul.f32 %v2777, %v2826
  %v2828 = vrcp.pop %v2809
  %v2829 = vmul.f32 %v2779, %v2828
  %2830 = vrot.lane.b32.xlu0 %v134, 112
  %v2831 = vpop.permute.xlu0 %2830
  %2832 = vrot.lane.b32.xlu0 %v139, 112
  %v2833 = vpop.permute.xlu0 %2832
  %v2837 = vsel %vm1301, %v2811, 0
  %v2840 = vsel %vm1301, %v2813, 0
  %2842 = vmatprep.subr.mxu0 0.0
  %2843 = vmatpush1.msra.mxu0 %v2831
  %2844 = vmatprep.subr.mxu0 0.0
  %2845 = vmatpush1.msra.mxu0 %v2833
  %2846 = vmatprep.subr.mxu0 0.0
  %2847 = vmatpush1.msra.mxu0 0.0
  %2848 = vmatprep.subr.mxu0 0.0
  %2849 = vmatpush1.msra.mxu0 0.0
  %2850 = vmatprep.subr.mxu0 0.0
  %2851 = vmatpush1.msra.mxu0 0.0
  %2852 = vmatprep.subr.mxu0 0.0
  %2853 = vmatpush1.msra.mxu0 0.0
  %2854 = vmatprep.subr.mxu0 0.0
  %2855 = vmatpush1.msra.mxu0 0.0
  %2856 = vmatprep.subr.mxu0 0.0
  %2857 = vmatpush1.msra.mxu0 0.0
  %2858 = vmatprep.subr.mxu0 0.0
  %2859 = vmatpush1.msra.mxu0 0.0
  %2860 = vmatprep.subr.mxu0 0.0
  %2861 = vmatpush1.msra.mxu0 0.0
  %2862 = vmatprep.subr.mxu0 0.0
  %2863 = vmatpush1.msra.mxu0 0.0
  %2864 = vmatprep.subr.mxu0 0.0
  %2865 = vmatpush1.msra.mxu0 0.0
  %2866 = vmatprep.subr.mxu0 0.0
  %2867 = vmatpush1.msra.mxu0 0.0
  %2868 = vmatprep.subr.mxu0 0.0
  %2869 = vmatpush1.msra.mxu0 0.0
  %2870 = vmatprep.subr.mxu0 0.0
  %2871 = vmatpush1.msra.mxu0 0.0
  %2872 = vmatprep.subr.mxu0 0.0
  %2873 = vmatpush1.msra.mxu0 0.0
  %2874 = vmatprep.subr.mxu0 0.0
  %2875 = vmatpush1.msra.mxu0 0.0
  %2876 = vmatprep.subr.mxu0 0.0
  %2877 = vmatpush1.msra.mxu0 0.0
  %2878 = vmatprep.subr.mxu0 0.0
  %2879 = vmatpush1.msra.mxu0 0.0
  %2880 = vmatprep.subr.mxu0 0.0
  %2881 = vmatpush1.msra.mxu0 0.0
  %2882 = vmatprep.subr.mxu0 0.0
  %2883 = vmatpush1.msra.mxu0 0.0
  %2884 = vmatprep.subr.mxu0 0.0
  %2885 = vmatpush1.msra.mxu0 0.0
  %2886 = vmatprep.subr.mxu0 0.0
  %2887 = vmatpush1.msra.mxu0 0.0
  %2888 = vmatprep.subr.mxu0 0.0
  %2889 = vmatpush1.msra.mxu0 0.0
  %2890 = vmatprep.subr.mxu0 0.0
  %2891 = vmatpush1.msra.mxu0 0.0
  %2892 = vmatprep.subr.mxu0 0.0
  %2893 = vmatpush1.msra.mxu0 0.0
  %2894 = vmatprep.subr.mxu0 0.0
  %2895 = vmatpush1.msra.mxu0 0.0
  %2896 = vmatprep.subr.mxu0 0.0
  %2897 = vmatpush1.msra.mxu0 0.0
  %2898 = vmatprep.subr.mxu0 0.0
  %2899 = vmatpush1.msra.mxu0 0.0
  %2900 = vmatprep.subr.mxu0 0.0
  %2901 = vmatpush1.msra.mxu0 0.0
  %2902 = vmatprep.subr.mxu0 0.0
  %2903 = vmatpush1.msra.mxu0 0.0
  %2904 = vmatprep.subr.mxu0 0.0
  %2905 = vmatpush1.msra.mxu0 0.0
  %2906 = vmatprep.mubr.f32.mxu0 0.0
  %2907 = vmatmul.mubr.f32.gmra.mrb[0].mxu0 %v2837
  %v2908 = vpop.f32.mrb[0].mxu0
  %v2909 = vadd.f32 0.0, %v2908
  %v2910 = vpop.f32.mrb[0].mxu0
  %2911 = vmatprep.mubr.f32.mxu0 0.0
  %2912 = vmatmul.mubr.f32.gmra.mrb[0].mxu0 %v2840
  %v2913 = vpop.f32.mrb[0].mxu0
  %v2914 = vadd.f32 0.0, %v2913
  %v2915 = vpop.f32.mrb[0].mxu0
  %2916 = vdwg.mxu0
  %2917 = vrot.lane.b32.xlu0 %v209, 112
  %v2918 = vpop.permute.xlu0 %2917
  %2919 = vrot.lane.b32.xlu0 %v214, 112
  %v2920 = vpop.permute.xlu0 %2919
  %v2924 = vsel %vm1301, %v2815, 0
  %v2927 = vsel %vm1301, %v2817, 0
  %2929 = vmatprep.subr.mxu0 0.0
  %2930 = vmatpush1.msra.mxu0 %v2918
  %2931 = vmatprep.subr.mxu0 0.0
  %2932 = vmatpush1.msra.mxu0 %v2920
  %2933 = vmatprep.subr.mxu0 0.0
  %2934 = vmatpush1.msra.mxu0 0.0
  %2935 = vmatprep.subr.mxu0 0.0
  %2936 = vmatpush1.msra.mxu0 0.0
  %2937 = vmatprep.subr.mxu0 0.0
  %2938 = vmatpush1.msra.mxu0 0.0
  %2939 = vmatprep.subr.mxu0 0.0
  %2940 = vmatpush1.msra.mxu0 0.0
  %2941 = vmatprep.subr.mxu0 0.0
  %2942 = vmatpush1.msra.mxu0 0.0
  %2943 = vmatprep.subr.mxu0 0.0
  %2944 = vmatpush1.msra.mxu0 0.0
  %2945 = vmatprep.subr.mxu0 0.0
  %2946 = vmatpush1.msra.mxu0 0.0
  %2947 = vmatprep.subr.mxu0 0.0
  %2948 = vmatpush1.msra.mxu0 0.0
  %2949 = vmatprep.subr.mxu0 0.0
  %2950 = vmatpush1.msra.mxu0 0.0
  %2951 = vmatprep.subr.mxu0 0.0
  %2952 = vmatpush1.msra.mxu0 0.0
  %2953 = vmatprep.subr.mxu0 0.0
  %2954 = vmatpush1.msra.mxu0 0.0
  %2955 = vmatprep.subr.mxu0 0.0
  %2956 = vmatpush1.msra.mxu0 0.0
  %2957 = vmatprep.subr.mxu0 0.0
  %2958 = vmatpush1.msra.mxu0 0.0
  %2959 = vmatprep.subr.mxu0 0.0
  %2960 = vmatpush1.msra.mxu0 0.0
  %2961 = vmatprep.subr.mxu0 0.0
  %2962 = vmatpush1.msra.mxu0 0.0
  %2963 = vmatprep.subr.mxu0 0.0
  %2964 = vmatpush1.msra.mxu0 0.0
  %2965 = vmatprep.subr.mxu0 0.0
  %2966 = vmatpush1.msra.mxu0 0.0
  %2967 = vmatprep.subr.mxu0 0.0
  %2968 = vmatpush1.msra.mxu0 0.0
  %2969 = vmatprep.subr.mxu0 0.0
  %2970 = vmatpush1.msra.mxu0 0.0
  %2971 = vmatprep.subr.mxu0 0.0
  %2972 = vmatpush1.msra.mxu0 0.0
  %2973 = vmatprep.subr.mxu0 0.0
  %2974 = vmatpush1.msra.mxu0 0.0
  %2975 = vmatprep.subr.mxu0 0.0
  %2976 = vmatpush1.msra.mxu0 0.0
  %2977 = vmatprep.subr.mxu0 0.0
  %2978 = vmatpush1.msra.mxu0 0.0
  %2979 = vmatprep.subr.mxu0 0.0
  %2980 = vmatpush1.msra.mxu0 0.0
  %2981 = vmatprep.subr.mxu0 0.0
  %2982 = vmatpush1.msra.mxu0 0.0
  %2983 = vmatprep.subr.mxu0 0.0
  %2984 = vmatpush1.msra.mxu0 0.0
  %2985 = vmatprep.subr.mxu0 0.0
  %2986 = vmatpush1.msra.mxu0 0.0
  %2987 = vmatprep.subr.mxu0 0.0
  %2988 = vmatpush1.msra.mxu0 0.0
  %2989 = vmatprep.subr.mxu0 0.0
  %2990 = vmatpush1.msra.mxu0 0.0
  %2991 = vmatprep.subr.mxu0 0.0
  %2992 = vmatpush1.msra.mxu0 0.0
  %2993 = vmatprep.mubr.f32.mxu0 0.0
  %2994 = vmatmul.mubr.f32.gmra.mrb[0].mxu0 %v2924
  %v2995 = vpop.f32.mrb[0].mxu0
  %v2996 = vadd.f32 0.0, %v2995
  %v2997 = vpop.f32.mrb[0].mxu0
  %2998 = vmatprep.mubr.f32.mxu0 0.0
  %2999 = vmatmul.mubr.f32.gmra.mrb[0].mxu0 %v2927
  %v3000 = vpop.f32.mrb[0].mxu0
  %v3001 = vadd.f32 0.0, %v3000
  %v3002 = vpop.f32.mrb[0].mxu0
  %3003 = vdwg.mxu0
  %3004 = vrot.lane.b32.xlu0 %v284, 112
  %v3005 = vpop.permute.xlu0 %3004
  %3006 = vrot.lane.b32.xlu0 %v289, 112
  %v3007 = vpop.permute.xlu0 %3006
  %v3011 = vsel %vm1301, %v2819, 0
  %v3014 = vsel %vm1301, %v2821, 0
  %3016 = vmatprep.subr.mxu0 0.0
  %3017 = vmatpush1.msra.mxu0 %v3005
  %3018 = vmatprep.subr.mxu0 0.0
  %3019 = vmatpush1.msra.mxu0 %v3007
  %3020 = vmatprep.subr.mxu0 0.0
  %3021 = vmatpush1.msra.mxu0 0.0
  %3022 = vmatprep.subr.mxu0 0.0
  %3023 = vmatpush1.msra.mxu0 0.0
  %3024 = vmatprep.subr.mxu0 0.0
  %3025 = vmatpush1.msra.mxu0 0.0
  %3026 = vmatprep.subr.mxu0 0.0
  %3027 = vmatpush1.msra.mxu0 0.0
  %3028 = vmatprep.subr.mxu0 0.0
  %3029 = vmatpush1.msra.mxu0 0.0
  %3030 = vmatprep.subr.mxu0 0.0
  %3031 = vmatpush1.msra.mxu0 0.0
  %3032 = vmatprep.subr.mxu0 0.0
  %3033 = vmatpush1.msra.mxu0 0.0
  %3034 = vmatprep.subr.mxu0 0.0
  %3035 = vmatpush1.msra.mxu0 0.0
  %3036 = vmatprep.subr.mxu0 0.0
  %3037 = vmatpush1.msra.mxu0 0.0
  %3038 = vmatprep.subr.mxu0 0.0
  %3039 = vmatpush1.msra.mxu0 0.0
  %3040 = vmatprep.subr.mxu0 0.0
  %3041 = vmatpush1.msra.mxu0 0.0
  %3042 = vmatprep.subr.mxu0 0.0
  %3043 = vmatpush1.msra.mxu0 0.0
  %3044 = vmatprep.subr.mxu0 0.0
  %3045 = vmatpush1.msra.mxu0 0.0
  %3046 = vmatprep.subr.mxu0 0.0
  %3047 = vmatpush1.msra.mxu0 0.0
  %3048 = vmatprep.subr.mxu0 0.0
  %3049 = vmatpush1.msra.mxu0 0.0
  %3050 = vmatprep.subr.mxu0 0.0
  %3051 = vmatpush1.msra.mxu0 0.0
  %3052 = vmatprep.subr.mxu0 0.0
  %3053 = vmatpush1.msra.mxu0 0.0
  %3054 = vmatprep.subr.mxu0 0.0
  %3055 = vmatpush1.msra.mxu0 0.0
  %3056 = vmatprep.subr.mxu0 0.0
  %3057 = vmatpush1.msra.mxu0 0.0
  %3058 = vmatprep.subr.mxu0 0.0
  %3059 = vmatpush1.msra.mxu0 0.0
  %3060 = vmatprep.subr.mxu0 0.0
  %3061 = vmatpush1.msra.mxu0 0.0
  %3062 = vmatprep.subr.mxu0 0.0
  %3063 = vmatpush1.msra.mxu0 0.0
  %3064 = vmatprep.subr.mxu0 0.0
  %3065 = vmatpush1.msra.mxu0 0.0
  %3066 = vmatprep.subr.mxu0 0.0
  %3067 = vmatpush1.msra.mxu0 0.0
  %3068 = vmatprep.subr.mxu0 0.0
  %3069 = vmatpush1.msra.mxu0 0.0
  %3070 = vmatprep.subr.mxu0 0.0
  %3071 = vmatpush1.msra.mxu0 0.0
  %3072 = vmatprep.subr.mxu0 0.0
  %3073 = vmatpush1.msra.mxu0 0.0
  %3074 = vmatprep.subr.mxu0 0.0
  %3075 = vmatpush1.msra.mxu0 0.0
  %3076 = vmatprep.subr.mxu0 0.0
  %3077 = vmatpush1.msra.mxu0 0.0
  %3078 = vmatprep.subr.mxu0 0.0
  %3079 = vmatpush1.msra.mxu0 0.0
  %3080 = vmatprep.mubr.f32.mxu0 0.0
  %3081 = vmatmul.mubr.f32.gmra.mrb[0].mxu0 %v3011
  %v3082 = vpop.f32.mrb[0].mxu0
  %v3083 = vadd.f32 0.0, %v3082
  %v3084 = vpop.f32.mrb[0].mxu0
  %3085 = vmatprep.mubr.f32.mxu0 0.0
  %3086 = vmatmul.mubr.f32.gmra.mrb[0].mxu0 %v3014
  %v3087 = vpop.f32.mrb[0].mxu0
  %v3088 = vadd.f32 0.0, %v3087
  %v3089 = vpop.f32.mrb[0].mxu0
  %3090 = vdwg.mxu0
  %3091 = vrot.lane.b32.xlu0 %v359, 112
  %v3092 = vpop.permute.xlu0 %3091
  %3093 = vrot.lane.b32.xlu0 %v364, 112
  %v3094 = vpop.permute.xlu0 %3093
  %v3098 = vsel %vm1301, %v2823, 0
  %v3101 = vsel %vm1301, %v2825, 0
  %3103 = vmatprep.subr.mxu0 0.0
  %3104 = vmatpush1.msra.mxu0 %v3092
  %3105 = vmatprep.subr.mxu0 0.0
  %3106 = vmatpush1.msra.mxu0 %v3094
  %3107 = vmatprep.subr.mxu0 0.0
  %3108 = vmatpush1.msra.mxu0 0.0
  %3109 = vmatprep.subr.mxu0 0.0
  %3110 = vmatpush1.msra.mxu0 0.0
  %3111 = vmatprep.subr.mxu0 0.0
  %3112 = vmatpush1.msra.mxu0 0.0
  %3113 = vmatprep.subr.mxu0 0.0
  %3114 = vmatpush1.msra.mxu0 0.0
  %3115 = vmatprep.subr.mxu0 0.0
  %3116 = vmatpush1.msra.mxu0 0.0
  %3117 = vmatprep.subr.mxu0 0.0
  %3118 = vmatpush1.msra.mxu0 0.0
  %3119 = vmatprep.subr.mxu0 0.0
  %3120 = vmatpush1.msra.mxu0 0.0
  %3121 = vmatprep.subr.mxu0 0.0
  %3122 = vmatpush1.msra.mxu0 0.0
  %3123 = vmatprep.subr.mxu0 0.0
  %3124 = vmatpush1.msra.mxu0 0.0
  %3125 = vmatprep.subr.mxu0 0.0
  %3126 = vmatpush1.msra.mxu0 0.0
  %3127 = vmatprep.subr.mxu0 0.0
  %3128 = vmatpush1.msra.mxu0 0.0
  %3129 = vmatprep.subr.mxu0 0.0
  %3130 = vmatpush1.msra.mxu0 0.0
  %3131 = vmatprep.subr.mxu0 0.0
  %3132 = vmatpush1.msra.mxu0 0.0
  %3133 = vmatprep.subr.mxu0 0.0
  %3134 = vmatpush1.msra.mxu0 0.0
  %3135 = vmatprep.subr.mxu0 0.0
  %3136 = vmatpush1.msra.mxu0 0.0
  %3137 = vmatprep.subr.mxu0 0.0
  %3138 = vmatpush1.msra.mxu0 0.0
  %3139 = vmatprep.subr.mxu0 0.0
  %3140 = vmatpush1.msra.mxu0 0.0
  %3141 = vmatprep.subr.mxu0 0.0
  %3142 = vmatpush1.msra.mxu0 0.0
  %3143 = vmatprep.subr.mxu0 0.0
  %3144 = vmatpush1.msra.mxu0 0.0
  %3145 = vmatprep.subr.mxu0 0.0
  %3146 = vmatpush1.msra.mxu0 0.0
  %3147 = vmatprep.subr.mxu0 0.0
  %3148 = vmatpush1.msra.mxu0 0.0
  %3149 = vmatprep.subr.mxu0 0.0
  %3150 = vmatpush1.msra.mxu0 0.0
  %3151 = vmatprep.subr.mxu0 0.0
  %3152 = vmatpush1.msra.mxu0 0.0
  %3153 = vmatprep.subr.mxu0 0.0
  %3154 = vmatpush1.msra.mxu0 0.0
  %3155 = vmatprep.subr.mxu0 0.0
  %3156 = vmatpush1.msra.mxu0 0.0
  %3157 = vmatprep.subr.mxu0 0.0
  %3158 = vmatpush1.msra.mxu0 0.0
  %3159 = vmatprep.subr.mxu0 0.0
  %3160 = vmatpush1.msra.mxu0 0.0
  %3161 = vmatprep.subr.mxu0 0.0
  %3162 = vmatpush1.msra.mxu0 0.0
  %3163 = vmatprep.subr.mxu0 0.0
  %3164 = vmatpush1.msra.mxu0 0.0
  %3165 = vmatprep.subr.mxu0 0.0
  %3166 = vmatpush1.msra.mxu0 0.0
  %3167 = vmatprep.mubr.f32.mxu0 0.0
  %3168 = vmatmul.mubr.f32.gmra.mrb[0].mxu0 %v3098
  %v3169 = vpop.f32.mrb[0].mxu0
  %v3170 = vadd.f32 0.0, %v3169
  %v3171 = vpop.f32.mrb[0].mxu0
  %3172 = vmatprep.mubr.f32.mxu0 0.0
  %3173 = vmatmul.mubr.f32.gmra.mrb[0].mxu0 %v3101
  %v3174 = vpop.f32.mrb[0].mxu0
  %v3175 = vadd.f32 0.0, %v3174
  %v3176 = vpop.f32.mrb[0].mxu0
  %3177 = vdwg.mxu0
  %3178 = vrot.lane.b32.xlu0 %v434, 112
  %v3179 = vpop.permute.xlu0 %3178
  %3180 = vrot.lane.b32.xlu0 %v439, 112
  %v3181 = vpop.permute.xlu0 %3180
  %v3185 = vsel %vm1301, %v2827, 0
  %v3188 = vsel %vm1301, %v2829, 0
  %3190 = vmatprep.subr.mxu0 0.0
  %3191 = vmatpush1.msra.mxu0 %v3179
  %3192 = vmatprep.subr.mxu0 0.0
  %3193 = vmatpush1.msra.mxu0 %v3181
  %3194 = vmatprep.subr.mxu0 0.0
  %3195 = vmatpush1.msra.mxu0 0.0
  %3196 = vmatprep.subr.mxu0 0.0
  %3197 = vmatpush1.msra.mxu0 0.0
  %3198 = vmatprep.subr.mxu0 0.0
  %3199 = vmatpush1.msra.mxu0 0.0
  %3200 = vmatprep.subr.mxu0 0.0
  %3201 = vmatpush1.msra.mxu0 0.0
  %3202 = vmatprep.subr.mxu0 0.0
  %3203 = vmatpush1.msra.mxu0 0.0
  %3204 = vmatprep.subr.mxu0 0.0
  %3205 = vmatpush1.msra.mxu0 0.0
  %3206 = vmatprep.subr.mxu0 0.0
  %3207 = vmatpush1.msra.mxu0 0.0
  %3208 = vmatprep.subr.mxu0 0.0
  %3209 = vmatpush1.msra.mxu0 0.0
  %3210 = vmatprep.subr.mxu0 0.0
  %3211 = vmatpush1.msra.mxu0 0.0
  %3212 = vmatprep.subr.mxu0 0.0
  %3213 = vmatpush1.msra.mxu0 0.0
  %3214 = vmatprep.subr.mxu0 0.0
  %3215 = vmatpush1.msra.mxu0 0.0
  %3216 = vmatprep.subr.mxu0 0.0
  %3217 = vmatpush1.msra.mxu0 0.0
  %3218 = vmatprep.subr.mxu0 0.0
  %3219 = vmatpush1.msra.mxu0 0.0
  %3220 = vmatprep.subr.mxu0 0.0
  %3221 = vmatpush1.msra.mxu0 0.0
  %3222 = vmatprep.subr.mxu0 0.0
  %3223 = vmatpush1.msra.mxu0 0.0
  %3224 = vmatprep.subr.mxu0 0.0
  %3225 = vmatpush1.msra.mxu0 0.0
  %3226 = vmatprep.subr.mxu0 0.0
  %3227 = vmatpush1.msra.mxu0 0.0
  %3228 = vmatprep.subr.mxu0 0.0
  %3229 = vmatpush1.msra.mxu0 0.0
  %3230 = vmatprep.subr.mxu0 0.0
  %3231 = vmatpush1.msra.mxu0 0.0
  %3232 = vmatprep.subr.mxu0 0.0
  %3233 = vmatpush1.msra.mxu0 0.0
  %3234 = vmatprep.subr.mxu0 0.0
  %3235 = vmatpush1.msra.mxu0 0.0
  %3236 = vmatprep.subr.mxu0 0.0
  %3237 = vmatpush1.msra.mxu0 0.0
  %3238 = vmatprep.subr.mxu0 0.0
  %3239 = vmatpush1.msra.mxu0 0.0
  %3240 = vmatprep.subr.mxu0 0.0
  %3241 = vmatpush1.msra.mxu0 0.0
  %3242 = vmatprep.subr.mxu0 0.0
  %3243 = vmatpush1.msra.mxu0 0.0
  %3244 = vmatprep.subr.mxu0 0.0
  %3245 = vmatpush1.msra.mxu0 0.0
  %3246 = vmatprep.subr.mxu0 0.0
  %3247 = vmatpush1.msra.mxu0 0.0
  %3248 = vmatprep.subr.mxu0 0.0
  %3249 = vmatpush1.msra.mxu0 0.0
  %3250 = vmatprep.subr.mxu0 0.0
  %3251 = vmatpush1.msra.mxu0 0.0
  %3252 = vmatprep.subr.mxu0 0.0
  %3253 = vmatpush1.msra.mxu0 0.0
  %3254 = vmatprep.mubr.f32.mxu0 0.0
  %3255 = vmatmul.mubr.f32.gmra.mrb[0].mxu0 %v3185
  %v3256 = vpop.f32.mrb[0].mxu0
  %v3257 = vadd.f32 0.0, %v3256
  %v3258 = vpop.f32.mrb[0].mxu0
  %3259 = vmatprep.mubr.f32.mxu0 0.0
  %3260 = vmatmul.mubr.f32.gmra.mrb[0].mxu0 %v3188
  %v3261 = vpop.f32.mrb[0].mxu0
  %v3262 = vadd.f32 0.0, %v3261
  %v3263 = vpop.f32.mrb[0].mxu0
  %3264 = vdwg.mxu0
  %v3266 = vsel %vm851, %v2909, 0
  %v3269 = vsel %vm851, %v2914, 0
  %3271 = vmatprep.subr.mxu0 0.0
  %3272 = vmatpush1.msra.mxu0 %v2278
  %3273 = vmatprep.subr.mxu0 0.0
  %3274 = vmatpush1.msra.mxu0 0.0
  %3275 = vmatprep.subr.mxu0 0.0
  %3276 = vmatpush1.msra.mxu0 0.0
  %3277 = vmatprep.subr.mxu0 0.0
  %3278 = vmatpush1.msra.mxu0 0.0
  %3279 = vmatprep.subr.mxu0 0.0
  %3280 = vmatpush1.msra.mxu0 0.0
  %3281 = vmatprep.subr.mxu0 0.0
  %3282 = vmatpush1.msra.mxu0 0.0
  %3283 = vmatprep.subr.mxu0 0.0
  %3284 = vmatpush1.msra.mxu0 0.0
  %3285 = vmatprep.subr.mxu0 0.0
  %3286 = vmatpush1.msra.mxu0 0.0
  %3287 = vmatprep.subr.mxu0 0.0
  %3288 = vmatpush1.msra.mxu0 0.0
  %3289 = vmatprep.subr.mxu0 0.0
  %3290 = vmatpush1.msra.mxu0 0.0
  %3291 = vmatprep.subr.mxu0 0.0
  %3292 = vmatpush1.msra.mxu0 0.0
  %3293 = vmatprep.subr.mxu0 0.0
  %3294 = vmatpush1.msra.mxu0 0.0
  %3295 = vmatprep.subr.mxu0 0.0
  %3296 = vmatpush1.msra.mxu0 0.0
  %3297 = vmatprep.subr.mxu0 0.0
  %3298 = vmatpush1.msra.mxu0 0.0
  %3299 = vmatprep.subr.mxu0 0.0
  %3300 = vmatpush1.msra.mxu0 0.0
  %3301 = vmatprep.subr.mxu0 0.0
  %3302 = vmatpush1.msra.mxu0 0.0
  %3303 = vmatprep.subr.mxu0 0.0
  %3304 = vmatpush1.msra.mxu0 0.0
  %3305 = vmatprep.subr.mxu0 0.0
  %3306 = vmatpush1.msra.mxu0 0.0
  %3307 = vmatprep.subr.mxu0 0.0
  %3308 = vmatpush1.msra.mxu0 0.0
  %3309 = vmatprep.subr.mxu0 0.0
  %3310 = vmatpush1.msra.mxu0 0.0
  %3311 = vmatprep.subr.mxu0 0.0
  %3312 = vmatpush1.msra.mxu0 0.0
  %3313 = vmatprep.subr.mxu0 0.0
  %3314 = vmatpush1.msra.mxu0 0.0
  %3315 = vmatprep.subr.mxu0 0.0
  %3316 = vmatpush1.msra.mxu0 0.0
  %3317 = vmatprep.subr.mxu0 0.0
  %3318 = vmatpush1.msra.mxu0 0.0
  %3319 = vmatprep.subr.mxu0 0.0
  %3320 = vmatpush1.msra.mxu0 0.0
  %3321 = vmatprep.subr.mxu0 0.0
  %3322 = vmatpush1.msra.mxu0 0.0
  %3323 = vmatprep.subr.mxu0 0.0
  %3324 = vmatpush1.msra.mxu0 0.0
  %3325 = vmatprep.subr.mxu0 0.0
  %3326 = vmatpush1.msra.mxu0 0.0
  %3327 = vmatprep.subr.mxu0 0.0
  %3328 = vmatpush1.msra.mxu0 0.0
  %3329 = vmatprep.subr.mxu0 0.0
  %3330 = vmatpush1.msra.mxu0 0.0
  %3331 = vmatprep.subr.mxu0 0.0
  %3332 = vmatpush1.msra.mxu0 0.0
  %3333 = vmatprep.subr.mxu0 0.0
  %3334 = vmatpush1.msra.mxu0 0.0
  %3335 = vmatprep.mubr.f32.mxu0 0.0
  %3336 = vmatmul.mubr.f32.gmra.mrb[0].mxu0 %v3266
  %v3337 = vpop.f32.mrb[0].mxu0
  %v3338 = vadd.f32 0.0, %v3337
  %v3339 = vpop.f32.mrb[0].mxu0
  %3340 = vmatprep.mubr.f32.mxu0 0.0
  %3341 = vmatmul.mubr.f32.gmra.mrb[0].mxu0 %v3269
  %v3342 = vpop.f32.mrb[0].mxu0
  %v3343 = vadd.f32 0.0, %v3342
  %v3344 = vpop.f32.mrb[0].mxu0
  %3345 = vdwg.mxu0
  %v3347 = vsel %vm851, %v2996, 0
  %v3350 = vsel %vm851, %v3001, 0
  %3352 = vmatprep.subr.mxu0 0.0
  %3353 = vmatpush1.msra.mxu0 %v2279
  %3354 = vmatprep.subr.mxu0 0.0
  %3355 = vmatpush1.msra.mxu0 0.0
  %3356 = vmatprep.subr.mxu0 0.0
  %3357 = vmatpush1.msra.mxu0 0.0
  %3358 = vmatprep.subr.mxu0 0.0
  %3359 = vmatpush1.msra.mxu0 0.0
  %3360 = vmatprep.subr.mxu0 0.0
  %3361 = vmatpush1.msra.mxu0 0.0
  %3362 = vmatprep.subr.mxu0 0.0
  %3363 = vmatpush1.msra.mxu0 0.0
  %3364 = vmatprep.subr.mxu0 0.0
  %3365 = vmatpush1.msra.mxu0 0.0
  %3366 = vmatprep.subr.mxu0 0.0
  %3367 = vmatpush1.msra.mxu0 0.0
  %3368 = vmatprep.subr.mxu0 0.0
  %3369 = vmatpush1.msra.mxu0 0.0
  %3370 = vmatprep.subr.mxu0 0.0
  %3371 = vmatpush1.msra.mxu0 0.0
  %3372 = vmatprep.subr.mxu0 0.0
  %3373 = vmatpush1.msra.mxu0 0.0
  %3374 = vmatprep.subr.mxu0 0.0
  %3375 = vmatpush1.msra.mxu0 0.0
  %3376 = vmatprep.subr.mxu0 0.0
  %3377 = vmatpush1.msra.mxu0 0.0
  %3378 = vmatprep.subr.mxu0 0.0
  %3379 = vmatpush1.msra.mxu0 0.0
  %3380 = vmatprep.subr.mxu0 0.0
  %3381 = vmatpush1.msra.mxu0 0.0
  %3382 = vmatprep.subr.mxu0 0.0
  %3383 = vmatpush1.msra.mxu0 0.0
  %3384 = vmatprep.subr.mxu0 0.0
  %3385 = vmatpush1.msra.mxu0 0.0
  %3386 = vmatprep.subr.mxu0 0.0
  %3387 = vmatpush1.msra.mxu0 0.0
  %3388 = vmatprep.subr.mxu0 0.0
  %3389 = vmatpush1.msra.mxu0 0.0
  %3390 = vmatprep.subr.mxu0 0.0
  %3391 = vmatpush1.msra.mxu0 0.0
  %3392 = vmatprep.subr.mxu0 0.0
  %3393 = vmatpush1.msra.mxu0 0.0
  %3394 = vmatprep.subr.mxu0 0.0
  %3395 = vmatpush1.msra.mxu0 0.0
  %3396 = vmatprep.subr.mxu0 0.0
  %3397 = vmatpush1.msra.mxu0 0.0
  %3398 = vmatprep.subr.mxu0 0.0
  %3399 = vmatpush1.msra.mxu0 0.0
  %3400 = vmatprep.subr.mxu0 0.0
  %3401 = vmatpush1.msra.mxu0 0.0
  %3402 = vmatprep.subr.mxu0 0.0
  %3403 = vmatpush1.msra.mxu0 0.0
  %3404 = vmatprep.subr.mxu0 0.0
  %3405 = vmatpush1.msra.mxu0 0.0
  %3406 = vmatprep.subr.mxu0 0.0
  %3407 = vmatpush1.msra.mxu0 0.0
  %3408 = vmatprep.subr.mxu0 0.0
  %3409 = vmatpush1.msra.mxu0 0.0
  %3410 = vmatprep.subr.mxu0 0.0
  %3411 = vmatpush1.msra.mxu0 0.0
  %3412 = vmatprep.subr.mxu0 0.0
  %3413 = vmatpush1.msra.mxu0 0.0
  %3414 = vmatprep.subr.mxu0 0.0
  %3415 = vmatpush1.msra.mxu0 0.0
  %3416 = vmatprep.mubr.f32.mxu0 0.0
  %3417 = vmatmul.mubr.f32.gmra.mrb[0].mxu0 %v3347
  %v3418 = vpop.f32.mrb[0].mxu0
  %v3419 = vadd.f32 0.0, %v3418
  %v3420 = vpop.f32.mrb[0].mxu0
  %3421 = vmatprep.mubr.f32.mxu0 0.0
  %3422 = vmatmul.mubr.f32.gmra.mrb[0].mxu0 %v3350
  %v3423 = vpop.f32.mrb[0].mxu0
  %v3424 = vadd.f32 0.0, %v3423
  %v3425 = vpop.f32.mrb[0].mxu0
  %3426 = vdwg.mxu0
  %v3428 = vsel %vm851, %v3083, 0
  %v3431 = vsel %vm851, %v3088, 0
  %3433 = vmatprep.subr.mxu0 0.0
  %3434 = vmatpush1.msra.mxu0 %v2280
  %3435 = vmatprep.subr.mxu0 0.0
  %3436 = vmatpush1.msra.mxu0 0.0
  %3437 = vmatprep.subr.mxu0 0.0
  %3438 = vmatpush1.msra.mxu0 0.0
  %3439 = vmatprep.subr.mxu0 0.0
  %3440 = vmatpush1.msra.mxu0 0.0
  %3441 = vmatprep.subr.mxu0 0.0
  %3442 = vmatpush1.msra.mxu0 0.0
  %3443 = vmatprep.subr.mxu0 0.0
  %3444 = vmatpush1.msra.mxu0 0.0
  %3445 = vmatprep.subr.mxu0 0.0
  %3446 = vmatpush1.msra.mxu0 0.0
  %3447 = vmatprep.subr.mxu0 0.0
  %3448 = vmatpush1.msra.mxu0 0.0
  %3449 = vmatprep.subr.mxu0 0.0
  %3450 = vmatpush1.msra.mxu0 0.0
  %3451 = vmatprep.subr.mxu0 0.0
  %3452 = vmatpush1.msra.mxu0 0.0
  %3453 = vmatprep.subr.mxu0 0.0
  %3454 = vmatpush1.msra.mxu0 0.0
  %3455 = vmatprep.subr.mxu0 0.0
  %3456 = vmatpush1.msra.mxu0 0.0
  %3457 = vmatprep.subr.mxu0 0.0
  %3458 = vmatpush1.msra.mxu0 0.0
  %3459 = vmatprep.subr.mxu0 0.0
  %3460 = vmatpush1.msra.mxu0 0.0
  %3461 = vmatprep.subr.mxu0 0.0
  %3462 = vmatpush1.msra.mxu0 0.0
  %3463 = vmatprep.subr.mxu0 0.0
  %3464 = vmatpush1.msra.mxu0 0.0
  %3465 = vmatprep.subr.mxu0 0.0
  %3466 = vmatpush1.msra.mxu0 0.0
  %3467 = vmatprep.subr.mxu0 0.0
  %3468 = vmatpush1.msra.mxu0 0.0
  %3469 = vmatprep.subr.mxu0 0.0
  %3470 = vmatpush1.msra.mxu0 0.0
  %3471 = vmatprep.subr.mxu0 0.0
  %3472 = vmatpush1.msra.mxu0 0.0
  %3473 = vmatprep.subr.mxu0 0.0
  %3474 = vmatpush1.msra.mxu0 0.0
  %3475 = vmatprep.subr.mxu0 0.0
  %3476 = vmatpush1.msra.mxu0 0.0
  %3477 = vmatprep.subr.mxu0 0.0
  %3478 = vmatpush1.msra.mxu0 0.0
  %3479 = vmatprep.subr.mxu0 0.0
  %3480 = vmatpush1.msra.mxu0 0.0
  %3481 = vmatprep.subr.mxu0 0.0
  %3482 = vmatpush1.msra.mxu0 0.0
  %3483 = vmatprep.subr.mxu0 0.0
  %3484 = vmatpush1.msra.mxu0 0.0
  %3485 = vmatprep.subr.mxu0 0.0
  %3486 = vmatpush1.msra.mxu0 0.0
  %3487 = vmatprep.subr.mxu0 0.0
  %3488 = vmatpush1.msra.mxu0 0.0
  %3489 = vmatprep.subr.mxu0 0.0
  %3490 = vmatpush1.msra.mxu0 0.0
  %3491 = vmatprep.subr.mxu0 0.0
  %3492 = vmatpush1.msra.mxu0 0.0
  %3493 = vmatprep.subr.mxu0 0.0
  %3494 = vmatpush1.msra.mxu0 0.0
  %3495 = vmatprep.subr.mxu0 0.0
  %3496 = vmatpush1.msra.mxu0 0.0
  %3497 = vmatprep.mubr.f32.mxu0 0.0
  %3498 = vmatmul.mubr.f32.gmra.mrb[0].mxu0 %v3428
  %v3499 = vpop.f32.mrb[0].mxu0
  %v3500 = vadd.f32 0.0, %v3499
  %v3501 = vpop.f32.mrb[0].mxu0
  %3502 = vmatprep.mubr.f32.mxu0 0.0
  %3503 = vmatmul.mubr.f32.gmra.mrb[0].mxu0 %v3431
  %v3504 = vpop.f32.mrb[0].mxu0
  %v3505 = vadd.f32 0.0, %v3504
  %v3506 = vpop.f32.mrb[0].mxu0
  %3507 = vdwg.mxu0
  %v3509 = vsel %vm851, %v3170, 0
  %v3512 = vsel %vm851, %v3175, 0
  %3514 = vmatprep.subr.mxu0 0.0
  %3515 = vmatpush1.msra.mxu0 %v2281
  %3516 = vmatprep.subr.mxu0 0.0
  %3517 = vmatpush1.msra.mxu0 0.0
  %3518 = vmatprep.subr.mxu0 0.0
  %3519 = vmatpush1.msra.mxu0 0.0
  %3520 = vmatprep.subr.mxu0 0.0
  %3521 = vmatpush1.msra.mxu0 0.0
  %3522 = vmatprep.subr.mxu0 0.0
  %3523 = vmatpush1.msra.mxu0 0.0
  %3524 = vmatprep.subr.mxu0 0.0
  %3525 = vmatpush1.msra.mxu0 0.0
  %3526 = vmatprep.subr.mxu0 0.0
  %3527 = vmatpush1.msra.mxu0 0.0
  %3528 = vmatprep.subr.mxu0 0.0
  %3529 = vmatpush1.msra.mxu0 0.0
  %3530 = vmatprep.subr.mxu0 0.0
  %3531 = vmatpush1.msra.mxu0 0.0
  %3532 = vmatprep.subr.mxu0 0.0
  %3533 = vmatpush1.msra.mxu0 0.0
  %3534 = vmatprep.subr.mxu0 0.0
  %3535 = vmatpush1.msra.mxu0 0.0
  %3536 = vmatprep.subr.mxu0 0.0
  %3537 = vmatpush1.msra.mxu0 0.0
  %3538 = vmatprep.subr.mxu0 0.0
  %3539 = vmatpush1.msra.mxu0 0.0
  %3540 = vmatprep.subr.mxu0 0.0
  %3541 = vmatpush1.msra.mxu0 0.0
  %3542 = vmatprep.subr.mxu0 0.0
  %3543 = vmatpush1.msra.mxu0 0.0
  %3544 = vmatprep.subr.mxu0 0.0
  %3545 = vmatpush1.msra.mxu0 0.0
  %3546 = vmatprep.subr.mxu0 0.0
  %3547 = vmatpush1.msra.mxu0 0.0
  %3548 = vmatprep.subr.mxu0 0.0
  %3549 = vmatpush1.msra.mxu0 0.0
  %3550 = vmatprep.subr.mxu0 0.0
  %3551 = vmatpush1.msra.mxu0 0.0
  %3552 = vmatprep.subr.mxu0 0.0
  %3553 = vmatpush1.msra.mxu0 0.0
  %3554 = vmatprep.subr.mxu0 0.0
  %3555 = vmatpush1.msra.mxu0 0.0
  %3556 = vmatprep.subr.mxu0 0.0
  %3557 = vmatpush1.msra.mxu0 0.0
  %3558 = vmatprep.subr.mxu0 0.0
  %3559 = vmatpush1.msra.mxu0 0.0
  %3560 = vmatprep.subr.mxu0 0.0
  %3561 = vmatpush1.msra.mxu0 0.0
  %3562 = vmatprep.subr.mxu0 0.0
  %3563 = vmatpush1.msra.mxu0 0.0
  %3564 = vmatprep.subr.mxu0 0.0
  %3565 = vmatpush1.msra.mxu0 0.0
  %3566 = vmatprep.subr.mxu0 0.0
  %3567 = vmatpush1.msra.mxu0 0.0
  %3568 = vmatprep.subr.mxu0 0.0
  %3569 = vmatpush1.msra.mxu0 0.0
  %3570 = vmatprep.subr.mxu0 0.0
  %3571 = vmatpush1.msra.mxu0 0.0
  %3572 = vmatprep.subr.mxu0 0.0
  %3573 = vmatpush1.msra.mxu0 0.0
  %3574 = vmatprep.subr.mxu0 0.0
  %3575 = vmatpush1.msra.mxu0 0.0
  %3576 = vmatprep.subr.mxu0 0.0
  %3577 = vmatpush1.msra.mxu0 0.0
  %3578 = vmatprep.mubr.f32.mxu0 0.0
  %3579 = vmatmul.mubr.f32.gmra.mrb[0].mxu0 %v3509
  %v3580 = vpop.f32.mrb[0].mxu0
  %v3581 = vadd.f32 0.0, %v3580
  %v3582 = vpop.f32.mrb[0].mxu0
  %3583 = vmatprep.mubr.f32.mxu0 0.0
  %3584 = vmatmul.mubr.f32.gmra.mrb[0].mxu0 %v3512
  %v3585 = vpop.f32.mrb[0].mxu0
  %v3586 = vadd.f32 0.0, %v3585
  %v3587 = vpop.f32.mrb[0].mxu0
  %3588 = vdwg.mxu0
  %v3590 = vsel %vm851, %v3257, 0
  %v3593 = vsel %vm851, %v3262, 0
  %3595 = vmatprep.subr.mxu0 0.0
  %3596 = vmatpush1.msra.mxu0 %v2282
  %3597 = vmatprep.subr.mxu0 0.0
  %3598 = vmatpush1.msra.mxu0 0.0
  %3599 = vmatprep.subr.mxu0 0.0
  %3600 = vmatpush1.msra.mxu0 0.0
  %3601 = vmatprep.subr.mxu0 0.0
  %3602 = vmatpush1.msra.mxu0 0.0
  %3603 = vmatprep.subr.mxu0 0.0
  %3604 = vmatpush1.msra.mxu0 0.0
  %3605 = vmatprep.subr.mxu0 0.0
  %3606 = vmatpush1.msra.mxu0 0.0
  %3607 = vmatprep.subr.mxu0 0.0
  %3608 = vmatpush1.msra.mxu0 0.0
  %3609 = vmatprep.subr.mxu0 0.0
  %3610 = vmatpush1.msra.mxu0 0.0
  %3611 = vmatprep.subr.mxu0 0.0
  %3612 = vmatpush1.msra.mxu0 0.0
  %3613 = vmatprep.subr.mxu0 0.0
  %3614 = vmatpush1.msra.mxu0 0.0
  %3615 = vmatprep.subr.mxu0 0.0
  %3616 = vmatpush1.msra.mxu0 0.0
  %3617 = vmatprep.subr.mxu0 0.0
  %3618 = vmatpush1.msra.mxu0 0.0
  %3619 = vmatprep.subr.mxu0 0.0
  %3620 = vmatpush1.msra.mxu0 0.0
  %3621 = vmatprep.subr.mxu0 0.0
  %3622 = vmatpush1.msra.mxu0 0.0
  %3623 = vmatprep.subr.mxu0 0.0
  %3624 = vmatpush1.msra.mxu0 0.0
  %3625 = vmatprep.subr.mxu0 0.0
  %3626 = vmatpush1.msra.mxu0 0.0
  %3627 = vmatprep.subr.mxu0 0.0
  %3628 = vmatpush1.msra.mxu0 0.0
  %3629 = vmatprep.subr.mxu0 0.0
  %3630 = vmatpush1.msra.mxu0 0.0
  %3631 = vmatprep.subr.mxu0 0.0
  %3632 = vmatpush1.msra.mxu0 0.0
  %3633 = vmatprep.subr.mxu0 0.0
  %3634 = vmatpush1.msra.mxu0 0.0
  %3635 = vmatprep.subr.mxu0 0.0
  %3636 = vmatpush1.msra.mxu0 0.0
  %3637 = vmatprep.subr.mxu0 0.0
  %3638 = vmatpush1.msra.mxu0 0.0
  %3639 = vmatprep.subr.mxu0 0.0
  %3640 = vmatpush1.msra.mxu0 0.0
  %3641 = vmatprep.subr.mxu0 0.0
  %3642 = vmatpush1.msra.mxu0 0.0
  %3643 = vmatprep.subr.mxu0 0.0
  %3644 = vmatpush1.msra.mxu0 0.0
  %3645 = vmatprep.subr.mxu0 0.0
  %3646 = vmatpush1.msra.mxu0 0.0
  %3647 = vmatprep.subr.mxu0 0.0
  %3648 = vmatpush1.msra.mxu0 0.0
  %3649 = vmatprep.subr.mxu0 0.0
  %3650 = vmatpush1.msra.mxu0 0.0
  %3651 = vmatprep.subr.mxu0 0.0
  %3652 = vmatpush1.msra.mxu0 0.0
  %3653 = vmatprep.subr.mxu0 0.0
  %3654 = vmatpush1.msra.mxu0 0.0
  %3655 = vmatprep.subr.mxu0 0.0
  %3656 = vmatpush1.msra.mxu0 0.0
  %3657 = vmatprep.subr.mxu0 0.0
  %3658 = vmatpush1.msra.mxu0 0.0
  %3659 = vmatprep.mubr.f32.mxu0 0.0
  %3660 = vmatmul.mubr.f32.gmra.mrb[0].mxu0 %v3590
  %v3661 = vpop.f32.mrb[0].mxu0
  %v3662 = vadd.f32 0.0, %v3661
  %v3663 = vpop.f32.mrb[0].mxu0
  %3664 = vmatprep.mubr.f32.mxu0 0.0
  %3665 = vmatmul.mubr.f32.gmra.mrb[0].mxu0 %v3593
  %v3666 = vpop.f32.mrb[0].mxu0
  %v3667 = vadd.f32 0.0, %v3666
  %v3668 = vpop.f32.mrb[0].mxu0
  %3669 = vdwg.mxu0
  %v3670 = vsel %vm60, %v3338, 0.0
  %v3671 = vsel %vm60, %v3419, 0.0
  %v3672 = vadd.f32 %v3670, %v3671
  %v3673 = vsel %vm60, %v3500, 0.0
  %v3674 = vadd.f32 %v3672, %v3673
  %v3675 = vsel %vm60, %v3581, 0.0
  %v3676 = vadd.f32 %v3674, %v3675
  %v3677 = vsel %vm60, %v3662, 0.0
  %v3678 = vadd.f32 %v3676, %v3677
  %v3679 = vsel %vm60, %v3343, 0.0
  %v3680 = vsel %vm60, %v3424, 0.0
  %v3681 = vadd.f32 %v3679, %v3680
  %v3682 = vsel %vm60, %v3505, 0.0
  %v3683 = vadd.f32 %v3681, %v3682
  %v3684 = vsel %vm60, %v3586, 0.0
  %v3685 = vadd.f32 %v3683, %v3684
  %v3686 = vsel %vm60, %v3667, 0.0
  %v3687 = vadd.f32 %v3685, %v3686
  %v3689 = vlaneseq
  %v3690 = vshrl.u32 %v3689, 7
  %v3691 = vsub.s32 0, %v3690
  %v3692 = vrot.slane %v2284, %v3691
  %v3694 = vadd.f32 %v3678, %v3692
  %v3695 = vadd.f32 %v3687, %v3692
  %3696 = vst.msk [vmem:[%s8] sm:$0xff] %vm60, %v2276
  %3697 = vst.msk [vmem:[%s8 + $0x8] sm:$0xff] %vm60, %v2277
  %s3698 = scalar_lea.vmem %s8, 16
  %3699 = vst.msk [vmem:[%s3698] sm:$0xff] %vm60, %v3694
  %3700 = vst.msk [vmem:[%s3698 + $0x8] sm:$0xff] %vm60, %v3695
  // Predicated region
  $region34: #{cross_attention_forward.1} parent=0 // pred_check
    _
  $region35: #{cross_attention_forward.1} parent=0 // pred_check_branch
    %3702 = sbr.rel (0) target = $region37
  $region36: #{cross_attention_forward.1} parent=0 // pred_region
    _
  $region37: #{cross_attention_forward.1} parent=0 // pred_fallthru
    _
  // Predicated region
  $region38: #{cross_attention_forward.1} parent=0 // pred_check
    _
  $region39: #{cross_attention_forward.1} parent=0 // pred_check_branch
    %3704 = sbr.rel (0) target = $region41
  $region40: #{cross_attention_forward.1} parent=0 // pred_region
    _
  $region41: #{cross_attention_forward.1} parent=0 // pred_fallthru
    _

</llo_original>
